<compile_context>
chip_gen: v5e
topology: v5e:2x2
jax: 0.10.0
libtpu: 0.0.40
codegen_flags: <defaults>
</compile_context>

<pallas_src>
import functools

import jax
import jax.numpy as jnp
from jax import lax
from jax.experimental import pallas as pl
from jax.experimental.pallas import tpu as pltpu

F32 = jnp.float32
BF16 = jnp.bfloat16
HI = lax.Precision.HIGHEST
_TAPS = [(dh, dw) for dh in range(3) for dw in range(3)]   # 3x3 conv taps


# ----------------------------------------------------------------------------
# Fused kernel: BN1 -> conv3x3(s=1) -> PReLU -> conv3x3(stride) -> BN2 -> SE
#               + shortcut (identity subsample OR 1x1 conv + BN) + residual add
# ----------------------------------------------------------------------------
def _block_kernel(*refs, H, W, Ho, Wo, Cin, depth, stride, has_sc_conv):
    if has_sc_conv:
        (x_ref, xs_ref, bn1_s_ref, bn1_b_ref, w1_ref, alpha_ref,
         w2_ref, bn2_s_ref, bn2_b_ref, se_w1_ref, se_w2_ref,
         ws_ref, bns_s_ref, bns_b_ref,
         out_ref, xpad_ref, y1pad_ref) = refs
    else:
        (x_ref, xs_ref, bn1_s_ref, bn1_b_ref, w1_ref, alpha_ref,
         w2_ref, bn2_s_ref, bn2_b_ref, se_w1_ref, se_w2_ref,
         out_ref, xpad_ref, y1pad_ref) = refs
        ws_ref = bns_s_ref = bns_b_ref = None

    # ---- BN1 (folded affine) applied to the interior; halo stays zero -------
    xpad_ref[...] = jnp.zeros_like(xpad_ref)
    xb = (x_ref[0] * bn1_s_ref[...].reshape(1, 1, Cin)
          + bn1_b_ref[...].reshape(1, 1, Cin))
    xpad_ref[pl.ds(1, H), pl.ds(1, W), :] = xb

    # ---- Conv3x3, stride 1, pad 1 (bf16 operands, f32 MXU accumulation) ------
    acc1 = jnp.zeros((H * W, depth), F32)
    for t, (dh, dw) in enumerate(_TAPS):
        patch = xpad_ref[pl.ds(dh, H), pl.ds(dw, W), :].astype(BF16)
        acc1 += jnp.dot(patch.reshape(H * W, Cin), w1_ref[t],
                        preferred_element_type=F32)

    # ---- PReLU (per channel) --------------------------------------------------
    alpha = alpha_ref[...]                                     # (1, depth)
    y1 = jnp.where(acc1 > 0, acc1, acc1 * alpha)

    # ---- stash y1 into a zero-padded VMEM scratch for the strided conv -------
    y1pad_ref[...] = jnp.zeros_like(y1pad_ref)
    y1pad_ref[pl.ds(1, H), pl.ds(1, W), :] = y1.reshape(H, W, depth)

    # ---- Conv3x3, stride s, pad 1: evaluated only at strided positions -------
    acc2 = jnp.zeros((Ho * Wo, depth), F32)
    for t, (dh, dw) in enumerate(_TAPS):
        if stride == 1:
            patch = y1pad_ref[pl.ds(dh, Ho), pl.ds(dw, Wo), :]
        else:
            patch = y1pad_ref[pl.ds(dh, Ho, stride), pl.ds(dw, Wo, stride), :]
        acc2 += jnp.dot(patch.astype(BF16).reshape(Ho * Wo, depth), w2_ref[t],
                        preferred_element_type=F32)

    # ---- BN2 (folded affine) --------------------------------------------------
    y2 = acc2 * bn2_s_ref[...] + bn2_b_ref[...]                # (Ho*Wo, depth)

    # ---- SEModule: avg-pool -> fc1 -> ReLU -> fc2 -> sigmoid -> scale ---------
    pooled = jnp.mean(y2, axis=0, keepdims=True)               # (1, depth)
    z = jnp.maximum(jnp.dot(pooled, se_w1_ref[...], preferred_element_type=F32),
                    0.0)
    pre = jnp.dot(z, se_w2_ref[...], preferred_element_type=F32)
    gate = pl.reciprocal(1.0 + jnp.exp(-pre), approx=True)     # sigmoid
    res = y2 * gate

    # ---- shortcut --------------------------------------------------------------
    xs = xs_ref[0].reshape(Ho * Wo, Cin)      # x already strided in the wrapper
    if has_sc_conv:
        sc = jnp.dot(xs.astype(BF16), ws_ref[...], preferred_element_type=F32)
        sc = sc * bns_s_ref[...] + bns_b_ref[...]
    else:
        sc = xs                               # MaxPool2d(1, s) == pure subsample

    out_ref[0] = (res + sc).reshape(Ho, Wo, depth)


# ----------------------------------------------------------------------------
# Wrapper
# ----------------------------------------------------------------------------
def bottleneck_ir_se_forward(x_nhwc, params, *, stride):
    B, H, W, Cin = x_nhwc.shape
    depth = params["w1"].shape[-1]
    Ho = (H - 1) // stride + 1
    Wo = (W - 1) // stride + 1
    identity_sc = bool(params["shortcut_identity"])
    has_sc_conv = not identity_sc
    if identity_sc:
        assert Cin == depth

    # Shortcut subsample (MaxPool2d(1,s) / stride of the 1x1 conv): a nearly-free
    # XLA strided slice done once in the wrapper, so the kernel needs no gather.
    xs = x_nhwc[:, ::stride, ::stride, :]

    inputs = [
        x_nhwc, xs,
        params["bn1_s"], params["bn1_b"], params["w1"].astype(BF16),
        params["alpha"], params["w2"].astype(BF16),
        params["bn2_s"], params["bn2_b"],
        params["se_w1"], params["se_w2"],
    ]
    in_specs = [
        pl.BlockSpec((1, H, W, Cin), lambda b: (b, 0, 0, 0)),
        pl.BlockSpec((1, Ho, Wo, Cin), lambda b: (b, 0, 0, 0)),
        pl.BlockSpec((1, Cin), lambda b: (0, 0)),
        pl.BlockSpec((1, Cin), lambda b: (0, 0)),
        pl.BlockSpec((9, Cin, depth), lambda b: (0, 0, 0)),
        pl.BlockSpec((1, depth), lambda b: (0, 0)),
        pl.BlockSpec((9, depth, depth), lambda b: (0, 0, 0)),
        pl.BlockSpec((1, depth), lambda b: (0, 0)),
        pl.BlockSpec((1, depth), lambda b: (0, 0)),
        pl.BlockSpec(params["se_w1"].shape, lambda b: (0, 0)),
        pl.BlockSpec(params["se_w2"].shape, lambda b: (0, 0)),
    ]
    if has_sc_conv:
        inputs += [params["ws"].astype(BF16), params["bns_s"], params["bns_b"]]
        in_specs += [
            pl.BlockSpec((Cin, depth), lambda b: (0, 0)),
            pl.BlockSpec((1, depth), lambda b: (0, 0)),
            pl.BlockSpec((1, depth), lambda b: (0, 0)),
        ]

    kernel = functools.partial(
        _block_kernel, H=H, W=W, Ho=Ho, Wo=Wo, Cin=Cin, depth=depth,
        stride=stride, has_sc_conv=has_sc_conv)

    return pl.pallas_call(
        kernel,
        grid=(B,),
        in_specs=in_specs,
        out_specs=pl.BlockSpec((1, Ho, Wo, depth), lambda b: (b, 0, 0, 0)),
        out_shape=jax.ShapeDtypeStruct((B, Ho, Wo, depth), F32),
        scratch_shapes=[
            pltpu.VMEM((H + 2, W + 2, Cin), F32),    # BN1(x), zero halo
            pltpu.VMEM((H + 2, W + 2, depth), F32),  # PReLU(conv1), zero halo
        ],
        compiler_params=pltpu.CompilerParams(
            dimension_semantics=("parallel",),
            vmem_limit_bytes=48 * 1024 * 1024,
        ),
    )(*inputs)


# ----------------------------------------------------------------------------
# Deterministic synthetic parameters (shapes from bottleneck_IR_SE.__init__)
# ----------------------------------------------------------------------------
def _fold_bn(kg, kb, km, kv, c):
    gamma = 1.0 + 0.1 * jax.random.normal(kg, (c,), F32)
    beta = 0.1 * jax.random.normal(kb, (c,), F32)
    mean = 0.1 * jax.random.normal(km, (c,), F32)
    var = 1.0 + 0.1 * jax.random.uniform(kv, (c,), F32)
    scale = gamma / jnp.sqrt(var + 1e-5)
    shift = beta - mean * scale
    return scale.reshape(1, c), shift.reshape(1, c)


def init_params(key, in_channel, depth, reduction=16):
    assert depth >= reduction
    mid = depth // reduction
    ks = jax.random.split(key, 16)

    bn1_s, bn1_b = _fold_bn(ks[0], ks[1], ks[2], ks[3], in_channel)
    w1 = jax.random.normal(ks[4], (9, in_channel, depth), F32) / jnp.sqrt(9.0 * in_channel)
    alpha = 0.25 + 0.01 * jax.random.normal(ks[5], (1, depth), F32)
    w2 = jax.random.normal(ks[6], (9, depth, depth), F32) / jnp.sqrt(9.0 * depth)
    bn2_s, bn2_b = _fold_bn(ks[7], ks[8], ks[9], ks[10], depth)
    se_w1 = jax.random.normal(ks[11], (depth, mid), F32) / jnp.sqrt(1.0 * depth)
    se_w2 = jax.random.normal(ks[12], (mid, depth), F32) / jnp.sqrt(1.0 * mid)

    p = dict(bn1_s=bn1_s, bn1_b=bn1_b, w1=w1, alpha=alpha, w2=w2,
             bn2_s=bn2_s, bn2_b=bn2_b, se_w1=se_w1, se_w2=se_w2,
             shortcut_identity=(in_channel == depth))
    if in_channel != depth:
        p["ws"] = jax.random.normal(ks[13], (in_channel, depth), F32) / jnp.sqrt(1.0 * in_channel)
        p["bns_s"], p["bns_b"] = _fold_bn(ks[14], ks[15], ks[13], ks[12], depth)
    return p


# ----------------------------------------------------------------------------
# Pure-JAX reference (for correctness check)
# ----------------------------------------------------------------------------
def reference_forward(x, p, stride, in_channel, depth):
    s = stride
    dn = ("NHWC", "HWIO", "NHWC")
    xb = x * p["bn1_s"].reshape(1, 1, 1, -1) + p["bn1_b"].reshape(1, 1, 1, -1)
    y1 = lax.conv_general_dilated(xb, p["w1"].reshape(3, 3, in_channel, depth),
                                  (1, 1), ((1, 1), (1, 1)),
                                  dimension_numbers=dn, precision=HI)
    y1 = jnp.where(y1 > 0, y1, y1 * p["alpha"].reshape(1, 1, 1, -1))
    y2 = lax.conv_general_dilated(y1, p["w2"].reshape(3, 3, depth, depth),
                                  (s, s), ((1, 1), (1, 1)),
                                  dimension_numbers=dn, precision=HI)
    y2 = y2 * p["bn2_s"].reshape(1, 1, 1, -1) + p["bn2_b"].reshape(1, 1, 1, -1)
    pooled = jnp.mean(y2, axis=(1, 2), keepdims=True)
    z = jnp.maximum(jnp.einsum("bhwc,cd->bhwd", pooled, p["se_w1"], precision=HI), 0.0)
    gate = jax.nn.sigmoid(jnp.einsum("bhwd,dc->bhwc", z, p["se_w2"], precision=HI))
    res = y2 * gate
    xs = x[:, ::s, ::s, :]
    if p["shortcut_identity"]:
        sc = xs
    else:
        sc = jnp.einsum("bhwc,cd->bhwd", xs, p["ws"], precision=HI)
        sc = sc * p["bns_s"].reshape(1, 1, 1, -1) + p["bns_b"].reshape(1, 1, 1, -1)
    return res + sc


if __name__ == "__main__":
    key = jax.random.PRNGKey(0)
    configs = [
        # (B, H, W, in_channel, depth, stride)
        (2, 16, 16, 32, 64, 2),   # downsampling block: conv shortcut + stride 2
        (2, 16, 16, 64, 64, 1),   # identity block: MaxPool2d(1, 1) shortcut
    ]
    for i, (B, H, W, cin, depth, stride) in enumerate(configs):
        kx, kp, key = jax.random.split(key, 3)
        x = jax.random.normal(kx, (B, H, W, cin), F32)   # NHWC (== NCHW (B,cin,H,W))
        params = init_params(kp, cin, depth)

        out = jax.block_until_ready(
            bottleneck_ir_se_forward(x, params, stride=stride))

        ref = reference_forward(x, params, stride, cin, depth)
        Ho = (H - 1) // stride + 1
        Wo = (W - 1) // stride + 1
        assert out.shape == (B, Ho, Wo, depth)
        err = float(jnp.max(jnp.abs(out - ref)))
        scale = float(jnp.max(jnp.abs(ref))) + 1e-6
        assert err <= 5e-2 * scale + 1e-3, \
            f"cfg{i}: max|diff|={err}, ref scale={scale}"
    print("KERNEL_OK")
</pallas_src>

<mosaic_0001>
module attributes {stable_mosaic.version = 11 : i64} {
  func.func @_block_kernel(%arg0: i32, %arg1: memref<1x16x16x32xf32, #tpu.memory_space<vmem>>, %arg2: memref<1x8x8x32xf32, #tpu.memory_space<vmem>>, %arg3: memref<1x32xf32, #tpu.memory_space<vmem>>, %arg4: memref<1x32xf32, #tpu.memory_space<vmem>>, %arg5: memref<9x32x64xbf16, #tpu.memory_space<vmem>>, %arg6: memref<1x64xf32, #tpu.memory_space<vmem>>, %arg7: memref<9x64x64xbf16, #tpu.memory_space<vmem>>, %arg8: memref<1x64xf32, #tpu.memory_space<vmem>>, %arg9: memref<1x64xf32, #tpu.memory_space<vmem>>, %arg10: memref<64x4xf32, #tpu.memory_space<vmem>>, %arg11: memref<4x64xf32, #tpu.memory_space<vmem>>, %arg12: memref<32x64xbf16, #tpu.memory_space<vmem>>, %arg13: memref<1x64xf32, #tpu.memory_space<vmem>>, %arg14: memref<1x64xf32, #tpu.memory_space<vmem>>, %arg15: memref<1x8x8x64xf32, #tpu.memory_space<vmem>>, %arg16: memref<18x18x32xf32, #tpu.memory_space<vmem>>, %arg17: memref<18x18x64xf32, #tpu.memory_space<vmem>>) attributes {dimension_semantics = [#tpu.dimension_semantics<parallel>], iteration_bounds = array<i64: 2>, scalar_prefetch = 0 : i64, scratch_operands = 2 : i64, tpu.core_type = #tpu.core_type<tc>, window_params = [{transform_indices = @transform_0, window_bounds = array<i64: 1, 16, 16, 32>}, {transform_indices = @transform_1, window_bounds = array<i64: 1, 8, 8, 32>}, {pipeline_mode = #tpu.pipeline_mode<synchronous>, transform_indices = @transform_2, window_bounds = array<i64: 1, 32>}, {pipeline_mode = #tpu.pipeline_mode<synchronous>, transform_indices = @transform_3, window_bounds = array<i64: 1, 32>}, {pipeline_mode = #tpu.pipeline_mode<synchronous>, transform_indices = @transform_4, window_bounds = array<i64: 9, 32, 64>}, {pipeline_mode = #tpu.pipeline_mode<synchronous>, transform_indices = @transform_5, window_bounds = array<i64: 1, 64>}, {pipeline_mode = #tpu.pipeline_mode<synchronous>, transform_indices = @transform_6, window_bounds = array<i64: 9, 64, 64>}, {pipeline_mode = #tpu.pipeline_mode<synchronous>, transform_indices = @transform_7, window_bounds = array<i64: 1, 64>}, {pipeline_mode = #tpu.pipeline_mode<synchronous>, transform_indices = @transform_8, window_bounds = array<i64: 1, 64>}, {pipeline_mode = #tpu.pipeline_mode<synchronous>, transform_indices = @transform_9, window_bounds = array<i64: 64, 4>}, {pipeline_mode = #tpu.pipeline_mode<synchronous>, transform_indices = @transform_10, window_bounds = array<i64: 4, 64>}, {pipeline_mode = #tpu.pipeline_mode<synchronous>, transform_indices = @transform_11, window_bounds = array<i64: 32, 64>}, {pipeline_mode = #tpu.pipeline_mode<synchronous>, transform_indices = @transform_12, window_bounds = array<i64: 1, 64>}, {pipeline_mode = #tpu.pipeline_mode<synchronous>, transform_indices = @transform_13, window_bounds = array<i64: 1, 64>}, {transform_indices = @transform_14, window_bounds = array<i64: 1, 8, 8, 64>}]} {
    %cst = arith.constant 0.000000e+00 : f32
    %0 = vector.broadcast %cst : f32 to vector<18x18x32xf32>
    %c0 = arith.constant 0 : index
    %c0_0 = arith.constant 0 : index
    %c0_1 = arith.constant 0 : index
    %1 = vector.load %arg16[%c0, %c0_0, %c0_1] : memref<18x18x32xf32, #tpu.memory_space<vmem>>, vector<18x18x32xf32>
    tpu.vector_store %arg16[%c0, %c0_0, %c0_1], %0 {strides = array<i32>} : memref<18x18x32xf32, #tpu.memory_space<vmem>>, vector<18x18x32xf32>,
    %c0_2 = arith.constant 0 : index
    %c0_3 = arith.constant 0 : index
    %c0_4 = arith.constant 0 : index
    %c0_5 = arith.constant 0 : index
    %2 = vector.load %arg1[%c0_2, %c0_3, %c0_4, %c0_5] : memref<1x16x16x32xf32, #tpu.memory_space<vmem>>, vector<1x16x16x32xf32>
    %3 = vector.shape_cast %2 : vector<1x16x16x32xf32> to vector<16x16x32xf32>
    %c0_6 = arith.constant 0 : index
    %c0_7 = arith.constant 0 : index
    %4 = vector.load %arg3[%c0_6, %c0_7] : memref<1x32xf32, #tpu.memory_space<vmem>>, vector<1x32xf32>
    %5 = vector.shape_cast %4 : vector<1x32xf32> to vector<1x1x32xf32>
    %6 = vector.broadcast %5 : vector<1x1x32xf32> to vector<16x16x32xf32>
    %7 = arith.mulf %3, %6 : vector<16x16x32xf32>
    %c0_8 = arith.constant 0 : index
    %c0_9 = arith.constant 0 : index
    %8 = vector.load %arg4[%c0_8, %c0_9] : memref<1x32xf32, #tpu.memory_space<vmem>>, vector<1x32xf32>
    %9 = vector.shape_cast %8 : vector<1x32xf32> to vector<1x1x32xf32>
    %10 = vector.broadcast %9 : vector<1x1x32xf32> to vector<16x16x32xf32>
    %11 = arith.addf %7, %10 : vector<16x16x32xf32>
    %c1 = arith.constant 1 : index
    %c1_10 = arith.constant 1 : index
    %c0_11 = arith.constant 0 : index
    %12 = vector.load %arg16[%c1, %c1_10, %c0_11] : memref<18x18x32xf32, #tpu.memory_space<vmem>>, vector<16x16x32xf32>
    tpu.vector_store %arg16[%c1, %c1_10, %c0_11], %11 {strides = array<i32>} : memref<18x18x32xf32, #tpu.memory_space<vmem>>, vector<16x16x32xf32>,
    %cst_12 = arith.constant 0.000000e+00 : f32
    %13 = vector.broadcast %cst_12 : f32 to vector<256x64xf32>
    %c0_13 = arith.constant 0 : index
    %c0_14 = arith.constant 0 : index
    %c0_15 = arith.constant 0 : index
    %14 = vector.load %arg16[%c0_13, %c0_14, %c0_15] : memref<18x18x32xf32, #tpu.memory_space<vmem>>, vector<16x16x32xf32>
    %15 = arith.truncf %14 : vector<16x16x32xf32> to vector<16x16x32xbf16>
    %16 = vector.shape_cast %15 : vector<16x16x32xbf16> to vector<256x32xbf16>
    %c0_16 = arith.constant 0 : index
    %c0_17 = arith.constant 0 : index
    %c0_18 = arith.constant 0 : index
    %17 = vector.load %arg5[%c0_16, %c0_17, %c0_18] : memref<9x32x64xbf16, #tpu.memory_space<vmem>>, vector<1x32x64xbf16>
    %18 = vector.shape_cast %17 : vector<1x32x64xbf16> to vector<32x64xbf16>
    %cst_19 = arith.constant dense<0.000000e+00> : vector<256x64xf32>
    %19 = tpu.matmul %16, %18, %cst_19 {dimension_numbers = #tpu.dot_dimension_numbers<[1], [0], [0], [1], [0, 0, 1, 1], [], []>} : vector<256x32xbf16>, vector<32x64xbf16>, vector<256x64xf32> -> vector<256x64xf32>
    %20 = arith.addf %13, %19 : vector<256x64xf32>
    %c0_20 = arith.constant 0 : index
    %c1_21 = arith.constant 1 : index
    %c0_22 = arith.constant 0 : index
    %21 = vector.load %arg16[%c0_20, %c1_21, %c0_22] : memref<18x18x32xf32, #tpu.memory_space<vmem>>, vector<16x16x32xf32>
    %22 = arith.truncf %21 : vector<16x16x32xf32> to vector<16x16x32xbf16>
    %23 = vector.shape_cast %22 : vector<16x16x32xbf16> to vector<256x32xbf16>
    %c1_23 = arith.constant 1 : index
    %c0_24 = arith.constant 0 : index
    %c0_25 = arith.constant 0 : index
    %24 = vector.load %arg5[%c1_23, %c0_24, %c0_25] : memref<9x32x64xbf16, #tpu.memory_space<vmem>>, vector<1x32x64xbf16>
    %25 = vector.shape_cast %24 : vector<1x32x64xbf16> to vector<32x64xbf16>
    %cst_26 = arith.constant dense<0.000000e+00> : vector<256x64xf32>
    %26 = tpu.matmul %23, %25, %cst_26 {dimension_numbers = #tpu.dot_dimension_numbers<[1], [0], [0], [1], [0, 0, 1, 1], [], []>} : vector<256x32xbf16>, vector<32x64xbf16>, vector<256x64xf32> -> vector<256x64xf32>
    %27 = arith.addf %20, %26 : vector<256x64xf32>
    %c0_27 = arith.constant 0 : index
    %c2 = arith.constant 2 : index
    %c0_28 = arith.constant 0 : index
    %28 = vector.load %arg16[%c0_27, %c2, %c0_28] : memref<18x18x32xf32, #tpu.memory_space<vmem>>, vector<16x16x32xf32>
    %29 = arith.truncf %28 : vector<16x16x32xf32> to vector<16x16x32xbf16>
    %30 = vector.shape_cast %29 : vector<16x16x32xbf16> to vector<256x32xbf16>
    %c2_29 = arith.constant 2 : index
    %c0_30 = arith.constant 0 : index
    %c0_31 = arith.constant 0 : index
    %31 = vector.load %arg5[%c2_29, %c0_30, %c0_31] : memref<9x32x64xbf16, #tpu.memory_space<vmem>>, vector<1x32x64xbf16>
    %32 = vector.shape_cast %31 : vector<1x32x64xbf16> to vector<32x64xbf16>
    %cst_32 = arith.constant dense<0.000000e+00> : vector<256x64xf32>
    %33 = tpu.matmul %30, %32, %cst_32 {dimension_numbers = #tpu.dot_dimension_numbers<[1], [0], [0], [1], [0, 0, 1, 1], [], []>} : vector<256x32xbf16>, vector<32x64xbf16>, vector<256x64xf32> -> vector<256x64xf32>
    %34 = arith.addf %27, %33 : vector<256x64xf32>
    %c1_33 = arith.constant 1 : index
    %c0_34 = arith.constant 0 : index
    %c0_35 = arith.constant 0 : index
    %35 = vector.load %arg16[%c1_33, %c0_34, %c0_35] : memref<18x18x32xf32, #tpu.memory_space<vmem>>, vector<16x16x32xf32>
    %36 = arith.truncf %35 : vector<16x16x32xf32> to vector<16x16x32xbf16>
    %37 = vector.shape_cast %36 : vector<16x16x32xbf16> to vector<256x32xbf16>
    %c3 = arith.constant 3 : index
    %c0_36 = arith.constant 0 : index
    %c0_37 = arith.constant 0 : index
    %38 = vector.load %arg5[%c3, %c0_36, %c0_37] : memref<9x32x64xbf16, #tpu.memory_space<vmem>>, vector<1x32x64xbf16>
    %39 = vector.shape_cast %38 : vector<1x32x64xbf16> to vector<32x64xbf16>
    %cst_38 = arith.constant dense<0.000000e+00> : vector<256x64xf32>
    %40 = tpu.matmul %37, %39, %cst_38 {dimension_numbers = #tpu.dot_dimension_numbers<[1], [0], [0], [1], [0, 0, 1, 1], [], []>} : vector<256x32xbf16>, vector<32x64xbf16>, vector<256x64xf32> -> vector<256x64xf32>
    %41 = arith.addf %34, %40 : vector<256x64xf32>
    %c1_39 = arith.constant 1 : index
    %c1_40 = arith.constant 1 : index
    %c0_41 = arith.constant 0 : index
    %42 = vector.load %arg16[%c1_39, %c1_40, %c0_41] : memref<18x18x32xf32, #tpu.memory_space<vmem>>, vector<16x16x32xf32>
    %43 = arith.truncf %42 : vector<16x16x32xf32> to vector<16x16x32xbf16>
    %44 = vector.shape_cast %43 : vector<16x16x32xbf16> to vector<256x32xbf16>
    %c4 = arith.constant 4 : index
    %c0_42 = arith.constant 0 : index
    %c0_43 = arith.constant 0 : index
    %45 = vector.load %arg5[%c4, %c0_42, %c0_43] : memref<9x32x64xbf16, #tpu.memory_space<vmem>>, vector<1x32x64xbf16>
    %46 = vector.shape_cast %45 : vector<1x32x64xbf16> to vector<32x64xbf16>
    %cst_44 = arith.constant dense<0.000000e+00> : vector<256x64xf32>
    %47 = tpu.matmul %44, %46, %cst_44 {dimension_numbers = #tpu.dot_dimension_numbers<[1], [0], [0], [1], [0, 0, 1, 1], [], []>} : vector<256x32xbf16>, vector<32x64xbf16>, vector<256x64xf32> -> vector<256x64xf32>
    %48 = arith.addf %41, %47 : vector<256x64xf32>
    %c1_45 = arith.constant 1 : index
    %c2_46 = arith.constant 2 : index
    %c0_47 = arith.constant 0 : index
    %49 = vector.load %arg16[%c1_45, %c2_46, %c0_47] : memref<18x18x32xf32, #tpu.memory_space<vmem>>, vector<16x16x32xf32>
    %50 = arith.truncf %49 : vector<16x16x32xf32> to vector<16x16x32xbf16>
    %51 = vector.shape_cast %50 : vector<16x16x32xbf16> to vector<256x32xbf16>
    %c5 = arith.constant 5 : index
    %c0_48 = arith.constant 0 : index
    %c0_49 = arith.constant 0 : index
    %52 = vector.load %arg5[%c5, %c0_48, %c0_49] : memref<9x32x64xbf16, #tpu.memory_space<vmem>>, vector<1x32x64xbf16>
    %53 = vector.shape_cast %52 : vector<1x32x64xbf16> to vector<32x64xbf16>
    %cst_50 = arith.constant dense<0.000000e+00> : vector<256x64xf32>
    %54 = tpu.matmul %51, %53, %cst_50 {dimension_numbers = #tpu.dot_dimension_numbers<[1], [0], [0], [1], [0, 0, 1, 1], [], []>} : vector<256x32xbf16>, vector<32x64xbf16>, vector<256x64xf32> -> vector<256x64xf32>
    %55 = arith.addf %48, %54 : vector<256x64xf32>
    %c2_51 = arith.constant 2 : index
    %c0_52 = arith.constant 0 : index
    %c0_53 = arith.constant 0 : index
    %56 = vector.load %arg16[%c2_51, %c0_52, %c0_53] : memref<18x18x32xf32, #tpu.memory_space<vmem>>, vector<16x16x32xf32>
    %57 = arith.truncf %56 : vector<16x16x32xf32> to vector<16x16x32xbf16>
    %58 = vector.shape_cast %57 : vector<16x16x32xbf16> to vector<256x32xbf16>
    %c6 = arith.constant 6 : index
    %c0_54 = arith.constant 0 : index
    %c0_55 = arith.constant 0 : index
    %59 = vector.load %arg5[%c6, %c0_54, %c0_55] : memref<9x32x64xbf16, #tpu.memory_space<vmem>>, vector<1x32x64xbf16>
    %60 = vector.shape_cast %59 : vector<1x32x64xbf16> to vector<32x64xbf16>
    %cst_56 = arith.constant dense<0.000000e+00> : vector<256x64xf32>
    %61 = tpu.matmul %58, %60, %cst_56 {dimension_numbers = #tpu.dot_dimension_numbers<[1], [0], [0], [1], [0, 0, 1, 1], [], []>} : vector<256x32xbf16>, vector<32x64xbf16>, vector<256x64xf32> -> vector<256x64xf32>
    %62 = arith.addf %55, %61 : vector<256x64xf32>
    %c2_57 = arith.constant 2 : index
    %c1_58 = arith.constant 1 : index
    %c0_59 = arith.constant 0 : index
    %63 = vector.load %arg16[%c2_57, %c1_58, %c0_59] : memref<18x18x32xf32, #tpu.memory_space<vmem>>, vector<16x16x32xf32>
    %64 = arith.truncf %63 : vector<16x16x32xf32> to vector<16x16x32xbf16>
    %65 = vector.shape_cast %64 : vector<16x16x32xbf16> to vector<256x32xbf16>
    %c7 = arith.constant 7 : index
    %c0_60 = arith.constant 0 : index
    %c0_61 = arith.constant 0 : index
    %66 = vector.load %arg5[%c7, %c0_60, %c0_61] : memref<9x32x64xbf16, #tpu.memory_space<vmem>>, vector<1x32x64xbf16>
    %67 = vector.shape_cast %66 : vector<1x32x64xbf16> to vector<32x64xbf16>
    %cst_62 = arith.constant dense<0.000000e+00> : vector<256x64xf32>
    %68 = tpu.matmul %65, %67, %cst_62 {dimension_numbers = #tpu.dot_dimension_numbers<[1], [0], [0], [1], [0, 0, 1, 1], [], []>} : vector<256x32xbf16>, vector<32x64xbf16>, vector<256x64xf32> -> vector<256x64xf32>
    %69 = arith.addf %62, %68 : vector<256x64xf32>
    %c2_63 = arith.constant 2 : index
    %c2_64 = arith.constant 2 : index
    %c0_65 = arith.constant 0 : index
    %70 = vector.load %arg16[%c2_63, %c2_64, %c0_65] : memref<18x18x32xf32, #tpu.memory_space<vmem>>, vector<16x16x32xf32>
    %71 = arith.truncf %70 : vector<16x16x32xf32> to vector<16x16x32xbf16>
    %72 = vector.shape_cast %71 : vector<16x16x32xbf16> to vector<256x32xbf16>
    %c8 = arith.constant 8 : index
    %c0_66 = arith.constant 0 : index
    %c0_67 = arith.constant 0 : index
    %73 = vector.load %arg5[%c8, %c0_66, %c0_67] : memref<9x32x64xbf16, #tpu.memory_space<vmem>>, vector<1x32x64xbf16>
    %74 = vector.shape_cast %73 : vector<1x32x64xbf16> to vector<32x64xbf16>
    %cst_68 = arith.constant dense<0.000000e+00> : vector<256x64xf32>
    %75 = tpu.matmul %72, %74, %cst_68 {dimension_numbers = #tpu.dot_dimension_numbers<[1], [0], [0], [1], [0, 0, 1, 1], [], []>} : vector<256x32xbf16>, vector<32x64xbf16>, vector<256x64xf32> -> vector<256x64xf32>
    %76 = arith.addf %69, %75 : vector<256x64xf32>
    %c0_69 = arith.constant 0 : index
    %c0_70 = arith.constant 0 : index
    %77 = vector.load %arg6[%c0_69, %c0_70] : memref<1x64xf32, #tpu.memory_space<vmem>>, vector<1x64xf32>
    %cst_71 = arith.constant 0.000000e+00 : f32
    %78 = vector.broadcast %cst_71 : f32 to vector<256x64xf32>
    %79 = arith.cmpf ogt, %76, %78 : vector<256x64xf32>
    %80 = vector.broadcast %77 : vector<1x64xf32> to vector<256x64xf32>
    %81 = arith.mulf %76, %80 : vector<256x64xf32>
    %82 = arith.select %79, %76, %81 : vector<256x64xi1>, vector<256x64xf32>
    %cst_72 = arith.constant 0.000000e+00 : f32
    %83 = vector.broadcast %cst_72 : f32 to vector<18x18x64xf32>
    %c0_73 = arith.constant 0 : index
    %c0_74 = arith.constant 0 : index
    %c0_75 = arith.constant 0 : index
    %84 = vector.load %arg17[%c0_73, %c0_74, %c0_75] : memref<18x18x64xf32, #tpu.memory_space<vmem>>, vector<18x18x64xf32>
    tpu.vector_store %arg17[%c0_73, %c0_74, %c0_75], %83 {strides = array<i32>} : memref<18x18x64xf32, #tpu.memory_space<vmem>>, vector<18x18x64xf32>,
    %85 = vector.shape_cast %82 : vector<256x64xf32> to vector<16x16x64xf32>
    %c1_76 = arith.constant 1 : index
    %c1_77 = arith.constant 1 : index
    %c0_78 = arith.constant 0 : index
    %86 = vector.load %arg17[%c1_76, %c1_77, %c0_78] : memref<18x18x64xf32, #tpu.memory_space<vmem>>, vector<16x16x64xf32>
    tpu.vector_store %arg17[%c1_76, %c1_77, %c0_78], %85 {strides = array<i32>} : memref<18x18x64xf32, #tpu.memory_space<vmem>>, vector<16x16x64xf32>,
    %cst_79 = arith.constant 0.000000e+00 : f32
    %87 = vector.broadcast %cst_79 : f32 to vector<64x64xf32>
    %c0_80 = arith.constant 0 : index
    %c0_81 = arith.constant 0 : index
    %c0_82 = arith.constant 0 : index
    %88 = tpu.strided_load %arg17[%c0_80, %c0_81, %c0_82] {strides = array<i32: 2, 2, 1>} : memref<18x18x64xf32, #tpu.memory_space<vmem>>, vector<8x8x64xf32>
    %89 = arith.truncf %88 : vector<8x8x64xf32> to vector<8x8x64xbf16>
    %90 = vector.shape_cast %89 : vector<8x8x64xbf16> to vector<64x64xbf16>
    %c0_83 = arith.constant 0 : index
    %c0_84 = arith.constant 0 : index
    %c0_85 = arith.constant 0 : index
    %91 = vector.load %arg7[%c0_83, %c0_84, %c0_85] : memref<9x64x64xbf16, #tpu.memory_space<vmem>>, vector<1x64x64xbf16>
    %92 = vector.shape_cast %91 : vector<1x64x64xbf16> to vector<64x64xbf16>
    %cst_86 = arith.constant dense<0.000000e+00> : vector<64x64xf32>
    %93 = tpu.matmul %90, %92, %cst_86 {dimension_numbers = #tpu.dot_dimension_numbers<[1], [0], [0], [1], [0, 0, 1, 1], [], []>} : vector<64x64xbf16>, vector<64x64xbf16>, vector<64x64xf32> -> vector<64x64xf32>
    %94 = arith.addf %87, %93 : vector<64x64xf32>
    %c0_87 = arith.constant 0 : index
    %c1_88 = arith.constant 1 : index
    %c0_89 = arith.constant 0 : index
    %95 = tpu.strided_load %arg17[%c0_87, %c1_88, %c0_89] {strides = array<i32: 2, 2, 1>} : memref<18x18x64xf32, #tpu.memory_space<vmem>>, vector<8x8x64xf32>
    %96 = arith.truncf %95 : vector<8x8x64xf32> to vector<8x8x64xbf16>
    %97 = vector.shape_cast %96 : vector<8x8x64xbf16> to vector<64x64xbf16>
    %c1_90 = arith.constant 1 : index
    %c0_91 = arith.constant 0 : index
    %c0_92 = arith.constant 0 : index
    %98 = vector.load %arg7[%c1_90, %c0_91, %c0_92] : memref<9x64x64xbf16, #tpu.memory_space<vmem>>, vector<1x64x64xbf16>
    %99 = vector.shape_cast %98 : vector<1x64x64xbf16> to vector<64x64xbf16>
    %cst_93 = arith.constant dense<0.000000e+00> : vector<64x64xf32>
    %100 = tpu.matmul %97, %99, %cst_93 {dimension_numbers = #tpu.dot_dimension_numbers<[1], [0], [0], [1], [0, 0, 1, 1], [], []>} : vector<64x64xbf16>, vector<64x64xbf16>, vector<64x64xf32> -> vector<64x64xf32>
    %101 = arith.addf %94, %100 : vector<64x64xf32>
    %c0_94 = arith.constant 0 : index
    %c2_95 = arith.constant 2 : index
    %c0_96 = arith.constant 0 : index
    %102 = tpu.strided_load %arg17[%c0_94, %c2_95, %c0_96] {strides = array<i32: 2, 2, 1>} : memref<18x18x64xf32, #tpu.memory_space<vmem>>, vector<8x8x64xf32>
    %103 = arith.truncf %102 : vector<8x8x64xf32> to vector<8x8x64xbf16>
    %104 = vector.shape_cast %103 : vector<8x8x64xbf16> to vector<64x64xbf16>
    %c2_97 = arith.constant 2 : index
    %c0_98 = arith.constant 0 : index
    %c0_99 = arith.constant 0 : index
    %105 = vector.load %arg7[%c2_97, %c0_98, %c0_99] : memref<9x64x64xbf16, #tpu.memory_space<vmem>>, vector<1x64x64xbf16>
    %106 = vector.shape_cast %105 : vector<1x64x64xbf16> to vector<64x64xbf16>
    %cst_100 = arith.constant dense<0.000000e+00> : vector<64x64xf32>
    %107 = tpu.matmul %104, %106, %cst_100 {dimension_numbers = #tpu.dot_dimension_numbers<[1], [0], [0], [1], [0, 0, 1, 1], [], []>} : vector<64x64xbf16>, vector<64x64xbf16>, vector<64x64xf32> -> vector<64x64xf32>
    %108 = arith.addf %101, %107 : vector<64x64xf32>
    %c1_101 = arith.constant 1 : index
    %c0_102 = arith.constant 0 : index
    %c0_103 = arith.constant 0 : index
    %109 = tpu.strided_load %arg17[%c1_101, %c0_102, %c0_103] {strides = array<i32: 2, 2, 1>} : memref<18x18x64xf32, #tpu.memory_space<vmem>>, vector<8x8x64xf32>
    %110 = arith.truncf %109 : vector<8x8x64xf32> to vector<8x8x64xbf16>
    %111 = vector.shape_cast %110 : vector<8x8x64xbf16> to vector<64x64xbf16>
    %c3_104 = arith.constant 3 : index
    %c0_105 = arith.constant 0 : index
    %c0_106 = arith.constant 0 : index
    %112 = vector.load %arg7[%c3_104, %c0_105, %c0_106] : memref<9x64x64xbf16, #tpu.memory_space<vmem>>, vector<1x64x64xbf16>
    %113 = vector.shape_cast %112 : vector<1x64x64xbf16> to vector<64x64xbf16>
    %cst_107 = arith.constant dense<0.000000e+00> : vector<64x64xf32>
    %114 = tpu.matmul %111, %113, %cst_107 {dimension_numbers = #tpu.dot_dimension_numbers<[1], [0], [0], [1], [0, 0, 1, 1], [], []>} : vector<64x64xbf16>, vector<64x64xbf16>, vector<64x64xf32> -> vector<64x64xf32>
    %115 = arith.addf %108, %114 : vector<64x64xf32>
    %c1_108 = arith.constant 1 : index
    %c1_109 = arith.constant 1 : index
    %c0_110 = arith.constant 0 : index
    %116 = tpu.strided_load %arg17[%c1_108, %c1_109, %c0_110] {strides = array<i32: 2, 2, 1>} : memref<18x18x64xf32, #tpu.memory_space<vmem>>, vector<8x8x64xf32>
    %117 = arith.truncf %116 : vector<8x8x64xf32> to vector<8x8x64xbf16>
    %118 = vector.shape_cast %117 : vector<8x8x64xbf16> to vector<64x64xbf16>
    %c4_111 = arith.constant 4 : index
    %c0_112 = arith.constant 0 : index
    %c0_113 = arith.constant 0 : index
    %119 = vector.load %arg7[%c4_111, %c0_112, %c0_113] : memref<9x64x64xbf16, #tpu.memory_space<vmem>>, vector<1x64x64xbf16>
    %120 = vector.shape_cast %119 : vector<1x64x64xbf16> to vector<64x64xbf16>
    %cst_114 = arith.constant dense<0.000000e+00> : vector<64x64xf32>
    %121 = tpu.matmul %118, %120, %cst_114 {dimension_numbers = #tpu.dot_dimension_numbers<[1], [0], [0], [1], [0, 0, 1, 1], [], []>} : vector<64x64xbf16>, vector<64x64xbf16>, vector<64x64xf32> -> vector<64x64xf32>
    %122 = arith.addf %115, %121 : vector<64x64xf32>
    %c1_115 = arith.constant 1 : index
    %c2_116 = arith.constant 2 : index
    %c0_117 = arith.constant 0 : index
    %123 = tpu.strided_load %arg17[%c1_115, %c2_116, %c0_117] {strides = array<i32: 2, 2, 1>} : memref<18x18x64xf32, #tpu.memory_space<vmem>>, vector<8x8x64xf32>
    %124 = arith.truncf %123 : vector<8x8x64xf32> to vector<8x8x64xbf16>
    %125 = vector.shape_cast %124 : vector<8x8x64xbf16> to vector<64x64xbf16>
    %c5_118 = arith.constant 5 : index
    %c0_119 = arith.constant 0 : index
    %c0_120 = arith.constant 0 : index
    %126 = vector.load %arg7[%c5_118, %c0_119, %c0_120] : memref<9x64x64xbf16, #tpu.memory_space<vmem>>, vector<1x64x64xbf16>
    %127 = vector.shape_cast %126 : vector<1x64x64xbf16> to vector<64x64xbf16>
    %cst_121 = arith.constant dense<0.000000e+00> : vector<64x64xf32>
    %128 = tpu.matmul %125, %127, %cst_121 {dimension_numbers = #tpu.dot_dimension_numbers<[1], [0], [0], [1], [0, 0, 1, 1], [], []>} : vector<64x64xbf16>, vector<64x64xbf16>, vector<64x64xf32> -> vector<64x64xf32>
    %129 = arith.addf %122, %128 : vector<64x64xf32>
    %c2_122 = arith.constant 2 : index
    %c0_123 = arith.constant 0 : index
    %c0_124 = arith.constant 0 : index
    %130 = tpu.strided_load %arg17[%c2_122, %c0_123, %c0_124] {strides = array<i32: 2, 2, 1>} : memref<18x18x64xf32, #tpu.memory_space<vmem>>, vector<8x8x64xf32>
    %131 = arith.truncf %130 : vector<8x8x64xf32> to vector<8x8x64xbf16>
    %132 = vector.shape_cast %131 : vector<8x8x64xbf16> to vector<64x64xbf16>
    %c6_125 = arith.constant 6 : index
    %c0_126 = arith.constant 0 : index
    %c0_127 = arith.constant 0 : index
    %133 = vector.load %arg7[%c6_125, %c0_126, %c0_127] : memref<9x64x64xbf16, #tpu.memory_space<vmem>>, vector<1x64x64xbf16>
    %134 = vector.shape_cast %133 : vector<1x64x64xbf16> to vector<64x64xbf16>
    %cst_128 = arith.constant dense<0.000000e+00> : vector<64x64xf32>
    %135 = tpu.matmul %132, %134, %cst_128 {dimension_numbers = #tpu.dot_dimension_numbers<[1], [0], [0], [1], [0, 0, 1, 1], [], []>} : vector<64x64xbf16>, vector<64x64xbf16>, vector<64x64xf32> -> vector<64x64xf32>
    %136 = arith.addf %129, %135 : vector<64x64xf32>
    %c2_129 = arith.constant 2 : index
    %c1_130 = arith.constant 1 : index
    %c0_131 = arith.constant 0 : index
    %137 = tpu.strided_load %arg17[%c2_129, %c1_130, %c0_131] {strides = array<i32: 2, 2, 1>} : memref<18x18x64xf32, #tpu.memory_space<vmem>>, vector<8x8x64xf32>
    %138 = arith.truncf %137 : vector<8x8x64xf32> to vector<8x8x64xbf16>
    %139 = vector.shape_cast %138 : vector<8x8x64xbf16> to vector<64x64xbf16>
    %c7_132 = arith.constant 7 : index
    %c0_133 = arith.constant 0 : index
    %c0_134 = arith.constant 0 : index
    %140 = vector.load %arg7[%c7_132, %c0_133, %c0_134] : memref<9x64x64xbf16, #tpu.memory_space<vmem>>, vector<1x64x64xbf16>
    %141 = vector.shape_cast %140 : vector<1x64x64xbf16> to vector<64x64xbf16>
    %cst_135 = arith.constant dense<0.000000e+00> : vector<64x64xf32>
    %142 = tpu.matmul %139, %141, %cst_135 {dimension_numbers = #tpu.dot_dimension_numbers<[1], [0], [0], [1], [0, 0, 1, 1], [], []>} : vector<64x64xbf16>, vector<64x64xbf16>, vector<64x64xf32> -> vector<64x64xf32>
    %143 = arith.addf %136, %142 : vector<64x64xf32>
    %c2_136 = arith.constant 2 : index
    %c2_137 = arith.constant 2 : index
    %c0_138 = arith.constant 0 : index
    %144 = tpu.strided_load %arg17[%c2_136, %c2_137, %c0_138] {strides = array<i32: 2, 2, 1>} : memref<18x18x64xf32, #tpu.memory_space<vmem>>, vector<8x8x64xf32>
    %145 = arith.truncf %144 : vector<8x8x64xf32> to vector<8x8x64xbf16>
    %146 = vector.shape_cast %145 : vector<8x8x64xbf16> to vector<64x64xbf16>
    %c8_139 = arith.constant 8 : index
    %c0_140 = arith.constant 0 : index
    %c0_141 = arith.constant 0 : index
    %147 = vector.load %arg7[%c8_139, %c0_140, %c0_141] : memref<9x64x64xbf16, #tpu.memory_space<vmem>>, vector<1x64x64xbf16>
    %148 = vector.shape_cast %147 : vector<1x64x64xbf16> to vector<64x64xbf16>
    %cst_142 = arith.constant dense<0.000000e+00> : vector<64x64xf32>
    %149 = tpu.matmul %146, %148, %cst_142 {dimension_numbers = #tpu.dot_dimension_numbers<[1], [0], [0], [1], [0, 0, 1, 1], [], []>} : vector<64x64xbf16>, vector<64x64xbf16>, vector<64x64xf32> -> vector<64x64xf32>
    %150 = arith.addf %143, %149 : vector<64x64xf32>
    %c0_143 = arith.constant 0 : index
    %c0_144 = arith.constant 0 : index
    %151 = vector.load %arg8[%c0_143, %c0_144] : memref<1x64xf32, #tpu.memory_space<vmem>>, vector<1x64xf32>
    %152 = vector.broadcast %151 : vector<1x64xf32> to vector<64x64xf32>
    %153 = arith.mulf %150, %152 : vector<64x64xf32>
    %c0_145 = arith.constant 0 : index
    %c0_146 = arith.constant 0 : index
    %154 = vector.load %arg9[%c0_145, %c0_146] : memref<1x64xf32, #tpu.memory_space<vmem>>, vector<1x64xf32>
    %155 = vector.broadcast %154 : vector<1x64xf32> to vector<64x64xf32>
    %156 = arith.addf %153, %155 : vector<64x64xf32>
    %cst_147 = arith.constant dense<0.000000e+00> : vector<64xf32>
    %157 = vector.multi_reduction <add>, %156, %cst_147 [0] : vector<64x64xf32> to vector<64xf32>
    %158 = vector.shape_cast %157 : vector<64xf32> to vector<1x64xf32>
    %cst_148 = arith.constant 6.400000e+01 : f32
    %159 = vector.broadcast %cst_148 : f32 to vector<1x64xf32>
    %160 = arith.divf %158, %159 : vector<1x64xf32>
    %c0_149 = arith.constant 0 : index
    %c0_150 = arith.constant 0 : index
    %161 = vector.load %arg10[%c0_149, %c0_150] : memref<64x4xf32, #tpu.memory_space<vmem>>, vector<64x4xf32>
    %cst_151 = arith.constant dense<0.000000e+00> : vector<1x4xf32>
    %162 = tpu.matmul %160, %161, %cst_151 {dimension_numbers = #tpu.dot_dimension_numbers<[1], [0], [0], [1], [0, 0, 1, 1], [], []>} : vector<1x64xf32>, vector<64x4xf32>, vector<1x4xf32> -> vector<1x4xf32>
    %cst_152 = arith.constant 0.000000e+00 : f32
    %163 = vector.broadcast %cst_152 : f32 to vector<1x4xf32>
    %164 = arith.maximumf %162, %163 : vector<1x4xf32>
    %c0_153 = arith.constant 0 : index
    %c0_154 = arith.constant 0 : index
    %165 = vector.load %arg11[%c0_153, %c0_154] : memref<4x64xf32, #tpu.memory_space<vmem>>, vector<4x64xf32>
    %cst_155 = arith.constant dense<0.000000e+00> : vector<1x64xf32>
    %166 = tpu.matmul %164, %165, %cst_155 {dimension_numbers = #tpu.dot_dimension_numbers<[1], [0], [0], [1], [0, 0, 1, 1], [], []>} : vector<1x4xf32>, vector<4x64xf32>, vector<1x64xf32> -> vector<1x64xf32>
    %cst_156 = arith.constant 0.000000e+00 : f32
    %167 = vector.broadcast %cst_156 : f32 to vector<1x64xf32>
    %168 = arith.subf %167, %166 : vector<1x64xf32>
    %169 = math.exp %168 : vector<1x64xf32>
    %cst_157 = arith.constant 1.000000e+00 : f32
    %170 = vector.broadcast %cst_157 : f32 to vector<1x64xf32>
    %171 = arith.addf %170, %169 : vector<1x64xf32>
    %172 = tpu.reciprocal %171 {approx = true} : vector<1x64xf32> -> vector<1x64xf32>
    %173 = vector.broadcast %172 : vector<1x64xf32> to vector<64x64xf32>
    %174 = arith.mulf %156, %173 : vector<64x64xf32>
    %c0_158 = arith.constant 0 : index
    %c0_159 = arith.constant 0 : index
    %c0_160 = arith.constant 0 : index
    %c0_161 = arith.constant 0 : index
    %175 = vector.load %arg2[%c0_158, %c0_159, %c0_160, %c0_161] : memref<1x8x8x32xf32, #tpu.memory_space<vmem>>, vector<1x8x8x32xf32>
    %176 = vector.shape_cast %175 : vector<1x8x8x32xf32> to vector<8x8x32xf32>
    %177 = vector.shape_cast %176 : vector<8x8x32xf32> to vector<64x32xf32>
    %178 = arith.truncf %177 : vector<64x32xf32> to vector<64x32xbf16>
    %c0_162 = arith.constant 0 : index
    %c0_163 = arith.constant 0 : index
    %179 = vector.load %arg12[%c0_162, %c0_163] : memref<32x64xbf16, #tpu.memory_space<vmem>>, vector<32x64xbf16>
    %cst_164 = arith.constant dense<0.000000e+00> : vector<64x64xf32>
    %180 = tpu.matmul %178, %179, %cst_164 {dimension_numbers = #tpu.dot_dimension_numbers<[1], [0], [0], [1], [0, 0, 1, 1], [], []>} : vector<64x32xbf16>, vector<32x64xbf16>, vector<64x64xf32> -> vector<64x64xf32>
    %c0_165 = arith.constant 0 : index
    %c0_166 = arith.constant 0 : index
    %181 = vector.load %arg13[%c0_165, %c0_166] : memref<1x64xf32, #tpu.memory_space<vmem>>, vector<1x64xf32>
    %182 = vector.broadcast %181 : vector<1x64xf32> to vector<64x64xf32>
    %183 = arith.mulf %180, %182 : vector<64x64xf32>
    %c0_167 = arith.constant 0 : index
    %c0_168 = arith.constant 0 : index
    %184 = vector.load %arg14[%c0_167, %c0_168] : memref<1x64xf32, #tpu.memory_space<vmem>>, vector<1x64xf32>
    %185 = vector.broadcast %184 : vector<1x64xf32> to vector<64x64xf32>
    %186 = arith.addf %183, %185 : vector<64x64xf32>
    %187 = arith.addf %174, %186 : vector<64x64xf32>
    %188 = vector.shape_cast %187 : vector<64x64xf32> to vector<8x8x64xf32>
    %c0_169 = arith.constant 0 : index
    %c0_170 = arith.constant 0 : index
    %c0_171 = arith.constant 0 : index
    %c0_172 = arith.constant 0 : index
    %189 = vector.load %arg15[%c0_169, %c0_170, %c0_171, %c0_172] : memref<1x8x8x64xf32, #tpu.memory_space<vmem>>, vector<1x8x8x64xf32>
    %190 = vector.shape_cast %189 : vector<1x8x8x64xf32> to vector<8x8x64xf32>
    %191 = vector.shape_cast %188 : vector<8x8x64xf32> to vector<1x8x8x64xf32>
    tpu.vector_store %arg15[%c0_169, %c0_170, %c0_171, %c0_172], %191 {strides = array<i32>} : memref<1x8x8x64xf32, #tpu.memory_space<vmem>>, vector<1x8x8x64xf32>,
    return
  }
  func.func @transform_0(%arg0: i32) -> (i32, i32, i32, i32) {
    %c0_i32 = arith.constant 0 : i32
    %c0_i32_0 = arith.constant 0 : i32
    %c0_i32_1 = arith.constant 0 : i32
    %c0_i32_2 = arith.constant 0 : i32
    return %arg0, %c0_i32, %c0_i32_0, %c0_i32_1 : i32, i32, i32, i32
  }
  func.func @transform_1(%arg0: i32) -> (i32, i32, i32, i32) {
    %c0_i32 = arith.constant 0 : i32
    %c0_i32_0 = arith.constant 0 : i32
    %c0_i32_1 = arith.constant 0 : i32
    %c0_i32_2 = arith.constant 0 : i32
    return %arg0, %c0_i32, %c0_i32_0, %c0_i32_1 : i32, i32, i32, i32
  }
  func.func @transform_2(%arg0: i32) -> (i32, i32) {
    %c0_i32 = arith.constant 0 : i32
    %c0_i32_0 = arith.constant 0 : i32
    %c0_i32_1 = arith.constant 0 : i32
    return %c0_i32, %c0_i32_0 : i32, i32
  }
  func.func @transform_3(%arg0: i32) -> (i32, i32) {
    %c0_i32 = arith.constant 0 : i32
    %c0_i32_0 = arith.constant 0 : i32
    %c0_i32_1 = arith.constant 0 : i32
    return %c0_i32, %c0_i32_0 : i32, i32
  }
  func.func @transform_4(%arg0: i32) -> (i32, i32, i32) {
    %c0_i32 = arith.constant 0 : i32
    %c0_i32_0 = arith.constant 0 : i32
    %c0_i32_1 = arith.constant 0 : i32
    %c0_i32_2 = arith.constant 0 : i32
    return %c0_i32, %c0_i32_0, %c0_i32_1 : i32, i32, i32
  }
  func.func @transform_5(%arg0: i32) -> (i32, i32) {
    %c0_i32 = arith.constant 0 : i32
    %c0_i32_0 = arith.constant 0 : i32
    %c0_i32_1 = arith.constant 0 : i32
    return %c0_i32, %c0_i32_0 : i32, i32
  }
  func.func @transform_6(%arg0: i32) -> (i32, i32, i32) {
    %c0_i32 = arith.constant 0 : i32
    %c0_i32_0 = arith.constant 0 : i32
    %c0_i32_1 = arith.constant 0 : i32
    %c0_i32_2 = arith.constant 0 : i32
    return %c0_i32, %c0_i32_0, %c0_i32_1 : i32, i32, i32
  }
  func.func @transform_7(%arg0: i32) -> (i32, i32) {
    %c0_i32 = arith.constant 0 : i32
    %c0_i32_0 = arith.constant 0 : i32
    %c0_i32_1 = arith.constant 0 : i32
    return %c0_i32, %c0_i32_0 : i32, i32
  }
  func.func @transform_8(%arg0: i32) -> (i32, i32) {
    %c0_i32 = arith.constant 0 : i32
    %c0_i32_0 = arith.constant 0 : i32
    %c0_i32_1 = arith.constant 0 : i32
    return %c0_i32, %c0_i32_0 : i32, i32
  }
  func.func @transform_9(%arg0: i32) -> (i32, i32) {
    %c0_i32 = arith.constant 0 : i32
    %c0_i32_0 = arith.constant 0 : i32
    %c0_i32_1 = arith.constant 0 : i32
    return %c0_i32, %c0_i32_0 : i32, i32
  }
  func.func @transform_10(%arg0: i32) -> (i32, i32) {
    %c0_i32 = arith.constant 0 : i32
    %c0_i32_0 = arith.constant 0 : i32
    %c0_i32_1 = arith.constant 0 : i32
    return %c0_i32, %c0_i32_0 : i32, i32
  }
  func.func @transform_11(%arg0: i32) -> (i32, i32) {
    %c0_i32 = arith.constant 0 : i32
    %c0_i32_0 = arith.constant 0 : i32
    %c0_i32_1 = arith.constant 0 : i32
    return %c0_i32, %c0_i32_0 : i32, i32
  }
  func.func @transform_12(%arg0: i32) -> (i32, i32) {
    %c0_i32 = arith.constant 0 : i32
    %c0_i32_0 = arith.constant 0 : i32
    %c0_i32_1 = arith.constant 0 : i32
    return %c0_i32, %c0_i32_0 : i32, i32
  }
  func.func @transform_13(%arg0: i32) -> (i32, i32) {
    %c0_i32 = arith.constant 0 : i32
    %c0_i32_0 = arith.constant 0 : i32
    %c0_i32_1 = arith.constant 0 : i32
    return %c0_i32, %c0_i32_0 : i32, i32
  }
  func.func @transform_14(%arg0: i32) -> (i32, i32, i32, i32) {
    %c0_i32 = arith.constant 0 : i32
    %c0_i32_0 = arith.constant 0 : i32
    %c0_i32_1 = arith.constant 0 : i32
    %c0_i32_2 = arith.constant 0 : i32
    return %arg0, %c0_i32, %c0_i32_0, %c0_i32_1 : i32, i32, i32, i32
  }
}

</mosaic_0001>

<llo_original>
// kernel: tpu_custom_call.1
$region0: #{tpu_custom_call.1}
  #allocation0 [shape = 'u32[]', space=smem, size = 0x4, offset = 0x4, fixed_abs, tag = 'smem constant byte address 0x4 - core index']
  #allocation1 [shape = 'u32[72,128]{1,0:T(1,128)}', space=vmem, size = 0x9000, scoped, tag = 'internal scratch']
  #allocation2 [shape = 'f32[18,18,32]{2,1,0:T(8,128)}', space=vmem, size = 0x36000, scoped, tag = 'scratch operand']
  #allocation3 [shape = 'f32[18,18,64]{2,1,0:T(8,128)}', space=vmem, size = 0x36000, scoped, tag = 'scratch operand']
  %s0 = inlined_call_operand.hbm [shape: f32[2,16,16,32], index: 0, kind: input, shape index: {}]
  %s1 = inlined_call_operand.hbm [shape: f32[2,8,8,32], index: 1, kind: input, shape index: {}]
  %s2 = inlined_call_operand.vmem [shape: f32[1,32], index: 2, kind: input, shape index: {}]
  %s3 = inlined_call_operand.vmem [shape: f32[1,32], index: 3, kind: input, shape index: {}]
  %s4 = inlined_call_operand.hbm [shape: bf16[9,32,64], index: 4, kind: input, shape index: {}]
  %s5 = inlined_call_operand.vmem [shape: f32[1,64], index: 5, kind: input, shape index: {}]
  %s6 = inlined_call_operand.hbm [shape: bf16[9,64,64], index: 6, kind: input, shape index: {}]
  %s7 = inlined_call_operand.vmem [shape: f32[1,64], index: 7, kind: input, shape index: {}]
  %s8 = inlined_call_operand.vmem [shape: f32[1,64], index: 8, kind: input, shape index: {}]
  %s9 = inlined_call_operand.vmem [shape: f32[64,4], index: 9, kind: input, shape index: {}]
  %s10 = inlined_call_operand.vmem [shape: f32[4,64], index: 10, kind: input, shape index: {}]
  %s11 = inlined_call_operand.vmem [shape: bf16[32,64], index: 11, kind: input, shape index: {}]
  %s12 = inlined_call_operand.vmem [shape: f32[1,64], index: 12, kind: input, shape index: {}]
  %s13 = inlined_call_operand.vmem [shape: f32[1,64], index: 13, kind: input, shape index: {}]
  %s14 = inlined_call_operand.hbm [shape: f32[2,8,8,64], index: 14, kind: output, shape index: {}]
  %s15 = sld [smem:[#allocation0]]
  $region105: #{tpu_custom_call.1} parent=0
    _
  %s17 = ssub.s32 1, %s15
  %s18 = scalar_select 0, %s17, %s15
  $region1: #{tpu_custom_call.1} parent=0
    #allocation4 [shape = 'u8[262144]{0}', space=vmem, size = 0x40000, scoped, tag = 'input window, operand 0']
    #allocation5 [shape = 's32[2]{0}', space=sflag, size = 0x8, scoped, tag = 'scoped memory for tpu_custom_call.1']
    #allocation6 [shape = 's32[2]{0}', space=sflag, size = 0x8, scoped, tag = 'scoped memory for tpu_custom_call.1']
    #allocation7 [shape = 'u8[65536]{0}', space=vmem, size = 0x10000, scoped, tag = 'input window, operand 1']
    #allocation8 [shape = 's32[2]{0}', space=sflag, size = 0x8, scoped, tag = 'scoped memory for tpu_custom_call.1']
    #allocation9 [shape = 'u8[73728]{0}', space=vmem, size = 0x12000, scoped, tag = 'input window, operand 4, single buffered']
    #allocation10 [shape = 'u8[147456]{0}', space=vmem, size = 0x24000, scoped, tag = 'input window, operand 6, single buffered']
    #allocation11 [shape = 's32[1]{0}', space=sflag, size = 0x4, scoped, tag = 'scoped memory for tpu_custom_call.1']
    #allocation12 [shape = 'u8[65536]{0}', space=vmem, size = 0x10000, scoped, tag = 'output window, operand 0']
    %19 = vsyncpa [#allocation5], 0
    %s20 = scalar_lea.sflag [#allocation5], 1
    %21 = vsyncpa %s20, 0
    %22 = vsyncpa [#allocation8], 0
    %s23 = scalar_lea.sflag [#allocation8], 1
    %24 = vsyncpa %s23, 0
    %25 = vsyncpa [#allocation11], 0
    %26 = vsyncpa [#allocation6], 0
    %s27 = scalar_lea.sflag [#allocation6], 1
    %28 = vsyncpa %s27, 0
    loop: start=0, step=1, limit=4
    $region2: #{tpu_custom_call.1} parent=1 // loop_pre_header
      _
    $region3: #{tpu_custom_call.1} parent=1 // loop_header
      %s30 = sphi 0, %s34
      %p31 = scmp.ge.s32.totalorder %s30, 4
      %s40 = sphi 0, %s42
      %s43 = sphi 0, %s40
      %s44 = sphi 0, %s43
      %s60 = sphi 0, %s44
      %s66 = sphi 0, %s68
      %s69 = sphi 0, %s66
      %s70 = sphi 0, %s69
      %s86 = sphi 0, %s70
      %s90 = sphi 0, %s90
      %s92 = sphi 0, %s90
      %s93 = sphi 0, %s92
      %s107 = sphi 0, %s93
      %s111 = sphi 0, %s111
      %s113 = sphi 0, %s111
      %s114 = sphi 0, %s113
      %s128 = sphi 0, %s114
      %s132 = sphi 0, %s132
      %s134 = sphi 0, %s132
      %s135 = sphi 0, %s134
      %s149 = sphi 0, %s135
      %s153 = sphi 0, %s153
      %s155 = sphi 0, %s153
      %s156 = sphi 0, %s155
      %s170 = sphi 0, %s156
      %s174 = sphi 0, %s174
      %s176 = sphi 0, %s174
      %s177 = sphi 0, %s176
      %s191 = sphi 0, %s177
      %s195 = sphi 0, %s195
      %s197 = sphi 0, %s195
      %s198 = sphi 0, %s197
      %s212 = sphi 0, %s198
      %s216 = sphi 0, %s216
      %s218 = sphi 0, %s216
      %s219 = sphi 0, %s218
      %s233 = sphi 0, %s219
      %s237 = sphi 0, %s237
      %s239 = sphi 0, %s237
      %s240 = sphi 0, %s239
      %s254 = sphi 0, %s240
      %s258 = sphi 0, %s258
      %s260 = sphi 0, %s258
      %s261 = sphi 0, %s260
      %s275 = sphi 0, %s261
      %s279 = sphi 0, %s279
      %s281 = sphi 0, %s279
      %s282 = sphi 0, %s281
      %s296 = sphi 0, %s282
      %s300 = sphi 0, %s300
      %s302 = sphi 0, %s300
      %s303 = sphi 0, %s302
      %s317 = sphi 0, %s303
      %s321 = sphi 0, %s321
      %s323 = sphi 0, %s321
      %s324 = sphi 0, %s323
      %s338 = sphi 0, %s324
      %s344 = sphi 0, %s346
      %s347 = sphi 0, %s344
      %s348 = sphi 0, %s347
      %s364 = sphi 0, %s348
    $region4: #{tpu_custom_call.1} parent=1 // loop_header_branch
      %33 = sbr.rel (%p31) target = $region8
    $region5: #{tpu_custom_call.1} parent=1 // loop_body
      %s35 = ssub.s32 %s30, 1
      %s36 = ssub.s32 %s30, 2
      %s37 = sadd.s32 %s30, 1
      %s38 = ssub.s32 %s30, %s37
      %p39 = scmp.eq.s32.totalorder %s38, 0
      %s41 = sadd.s32 %s40, 1
      %s42 = scalar_select %p39, %s40, %s41
      %p45 = pneg %p39
      %p46 = scmp.eq.s32.totalorder %s30, 1
      %p47 = por %p45, %p46
      %p48 = scmp.ne.s32.totalorder %s40, %s43
      %p49 = scmp.eq.s32.totalorder %s30, 0
      %p50 = por %p48, %p49
      %p51 = scmp.ne.s32.totalorder %s40, %s43
      %p52 = scmp.eq.s32.totalorder %s35, 1
      %p53 = por %p51, %p52
      %p54 = scmp.ne.s32.totalorder %s43, %s44
      %p55 = scmp.eq.s32.totalorder %s35, 0
      %p56 = por %p54, %p55
      %p57 = scmp.ne.s32.totalorder %s43, %s44
      %p58 = scmp.eq.s32.totalorder %s36, 1
      %p59 = por %p57, %p58
      %p61 = scmp.ne.s32.totalorder %s44, %s60
      %p62 = scmp.eq.s32.totalorder %s36, 0
      %p63 = por %p61, %p62
      %s64 = ssub.s32 %s30, %s37
      %p65 = scmp.eq.s32.totalorder %s64, 0
      %s67 = sadd.s32 %s66, 1
      %s68 = scalar_select %p65, %s66, %s67
      %p71 = pneg %p65
      %p72 = scmp.eq.s32.totalorder %s30, 1
      %p73 = por %p71, %p72
      %p74 = scmp.ne.s32.totalorder %s66, %s69
      %p75 = scmp.eq.s32.totalorder %s30, 0
      %p76 = por %p74, %p75
      %p77 = scmp.ne.s32.totalorder %s66, %s69
      %p78 = scmp.eq.s32.totalorder %s35, 1
      %p79 = por %p77, %p78
      %p80 = scmp.ne.s32.totalorder %s69, %s70
      %p81 = scmp.eq.s32.totalorder %s35, 0
      %p82 = por %p80, %p81
      %p83 = scmp.ne.s32.totalorder %s69, %s70
      %p84 = scmp.eq.s32.totalorder %s36, 1
      %p85 = por %p83, %p84
      %p87 = scmp.ne.s32.totalorder %s70, %s86
      %p88 = scmp.eq.s32.totalorder %s36, 0
      %p89 = por %p87, %p88
      %s91 = sadd.s32 %s90, 1
      %p94 = scmp.eq.s32.totalorder %s30, 1
      %p95 = scmp.ne.s32.totalorder %s90, %s92
      %p96 = scmp.eq.s32.totalorder %s30, 0
      %p97 = por %p95, %p96
      %p98 = scmp.ne.s32.totalorder %s90, %s92
      %p99 = scmp.eq.s32.totalorder %s35, 1
      %p100 = por %p98, %p99
      %p101 = scmp.ne.s32.totalorder %s92, %s93
      %p102 = scmp.eq.s32.totalorder %s35, 0
      %p103 = por %p101, %p102
      %p104 = scmp.ne.s32.totalorder %s92, %s93
      %p105 = scmp.eq.s32.totalorder %s36, 1
      %p106 = por %p104, %p105
      %p108 = scmp.ne.s32.totalorder %s93, %s107
      %p109 = scmp.eq.s32.totalorder %s36, 0
      %p110 = por %p108, %p109
      %s112 = sadd.s32 %s111, 1
      %p115 = scmp.eq.s32.totalorder %s30, 1
      %p116 = scmp.ne.s32.totalorder %s111, %s113
      %p117 = scmp.eq.s32.totalorder %s30, 0
      %p118 = por %p116, %p117
      %p119 = scmp.ne.s32.totalorder %s111, %s113
      %p120 = scmp.eq.s32.totalorder %s35, 1
      %p121 = por %p119, %p120
      %p122 = scmp.ne.s32.totalorder %s113, %s114
      %p123 = scmp.eq.s32.totalorder %s35, 0
      %p124 = por %p122, %p123
      %p125 = scmp.ne.s32.totalorder %s113, %s114
      %p126 = scmp.eq.s32.totalorder %s36, 1
      %p127 = por %p125, %p126
      %p129 = scmp.ne.s32.totalorder %s114, %s128
      %p130 = scmp.eq.s32.totalorder %s36, 0
      %p131 = por %p129, %p130
      %s133 = sadd.s32 %s132, 1
      %p136 = scmp.eq.s32.totalorder %s30, 1
      %p137 = scmp.ne.s32.totalorder %s132, %s134
      %p138 = scmp.eq.s32.totalorder %s30, 0
      %p139 = por %p137, %p138
      %p140 = scmp.ne.s32.totalorder %s132, %s134
      %p141 = scmp.eq.s32.totalorder %s35, 1
      %p142 = por %p140, %p141
      %p143 = scmp.ne.s32.totalorder %s134, %s135
      %p144 = scmp.eq.s32.totalorder %s35, 0
      %p145 = por %p143, %p144
      %p146 = scmp.ne.s32.totalorder %s134, %s135
      %p147 = scmp.eq.s32.totalorder %s36, 1
      %p148 = por %p146, %p147
      %p150 = scmp.ne.s32.totalorder %s135, %s149
      %p151 = scmp.eq.s32.totalorder %s36, 0
      %p152 = por %p150, %p151
      %s154 = sadd.s32 %s153, 1
      %p157 = scmp.eq.s32.totalorder %s30, 1
      %p158 = scmp.ne.s32.totalorder %s153, %s155
      %p159 = scmp.eq.s32.totalorder %s30, 0
      %p160 = por %p158, %p159
      %p161 = scmp.ne.s32.totalorder %s153, %s155
      %p162 = scmp.eq.s32.totalorder %s35, 1
      %p163 = por %p161, %p162
      %p164 = scmp.ne.s32.totalorder %s155, %s156
      %p165 = scmp.eq.s32.totalorder %s35, 0
      %p166 = por %p164, %p165
      %p167 = scmp.ne.s32.totalorder %s155, %s156
      %p168 = scmp.eq.s32.totalorder %s36, 1
      %p169 = por %p167, %p168
      %p171 = scmp.ne.s32.totalorder %s156, %s170
      %p172 = scmp.eq.s32.totalorder %s36, 0
      %p173 = por %p171, %p172
      %s175 = sadd.s32 %s174, 1
      %p178 = scmp.eq.s32.totalorder %s30, 1
      %p179 = scmp.ne.s32.totalorder %s174, %s176
      %p180 = scmp.eq.s32.totalorder %s30, 0
      %p181 = por %p179, %p180
      %p182 = scmp.ne.s32.totalorder %s174, %s176
      %p183 = scmp.eq.s32.totalorder %s35, 1
      %p184 = por %p182, %p183
      %p185 = scmp.ne.s32.totalorder %s176, %s177
      %p186 = scmp.eq.s32.totalorder %s35, 0
      %p187 = por %p185, %p186
      %p188 = scmp.ne.s32.totalorder %s176, %s177
      %p189 = scmp.eq.s32.totalorder %s36, 1
      %p190 = por %p188, %p189
      %p192 = scmp.ne.s32.totalorder %s177, %s191
      %p193 = scmp.eq.s32.totalorder %s36, 0
      %p194 = por %p192, %p193
      %s196 = sadd.s32 %s195, 1
      %p199 = scmp.eq.s32.totalorder %s30, 1
      %p200 = scmp.ne.s32.totalorder %s195, %s197
      %p201 = scmp.eq.s32.totalorder %s30, 0
      %p202 = por %p200, %p201
      %p203 = scmp.ne.s32.totalorder %s195, %s197
      %p204 = scmp.eq.s32.totalorder %s35, 1
      %p205 = por %p203, %p204
      %p206 = scmp.ne.s32.totalorder %s197, %s198
      %p207 = scmp.eq.s32.totalorder %s35, 0
      %p208 = por %p206, %p207
      %p209 = scmp.ne.s32.totalorder %s197, %s198
      %p210 = scmp.eq.s32.totalorder %s36, 1
      %p211 = por %p209, %p210
      %p213 = scmp.ne.s32.totalorder %s198, %s212
      %p214 = scmp.eq.s32.totalorder %s36, 0
      %p215 = por %p213, %p214
      %s217 = sadd.s32 %s216, 1
      %p220 = scmp.eq.s32.totalorder %s30, 1
      %p221 = scmp.ne.s32.totalorder %s216, %s218
      %p222 = scmp.eq.s32.totalorder %s30, 0
      %p223 = por %p221, %p222
      %p224 = scmp.ne.s32.totalorder %s216, %s218
      %p225 = scmp.eq.s32.totalorder %s35, 1
      %p226 = por %p224, %p225
      %p227 = scmp.ne.s32.totalorder %s218, %s219
      %p228 = scmp.eq.s32.totalorder %s35, 0
      %p229 = por %p227, %p228
      %p230 = scmp.ne.s32.totalorder %s218, %s219
      %p231 = scmp.eq.s32.totalorder %s36, 1
      %p232 = por %p230, %p231
      %p234 = scmp.ne.s32.totalorder %s219, %s233
      %p235 = scmp.eq.s32.totalorder %s36, 0
      %p236 = por %p234, %p235
      %s238 = sadd.s32 %s237, 1
      %p241 = scmp.eq.s32.totalorder %s30, 1
      %p242 = scmp.ne.s32.totalorder %s237, %s239
      %p243 = scmp.eq.s32.totalorder %s30, 0
      %p244 = por %p242, %p243
      %p245 = scmp.ne.s32.totalorder %s237, %s239
      %p246 = scmp.eq.s32.totalorder %s35, 1
      %p247 = por %p245, %p246
      %p248 = scmp.ne.s32.totalorder %s239, %s240
      %p249 = scmp.eq.s32.totalorder %s35, 0
      %p250 = por %p248, %p249
      %p251 = scmp.ne.s32.totalorder %s239, %s240
      %p252 = scmp.eq.s32.totalorder %s36, 1
      %p253 = por %p251, %p252
      %p255 = scmp.ne.s32.totalorder %s240, %s254
      %p256 = scmp.eq.s32.totalorder %s36, 0
      %p257 = por %p255, %p256
      %s259 = sadd.s32 %s258, 1
      %p262 = scmp.eq.s32.totalorder %s30, 1
      %p263 = scmp.ne.s32.totalorder %s258, %s260
      %p264 = scmp.eq.s32.totalorder %s30, 0
      %p265 = por %p263, %p264
      %p266 = scmp.ne.s32.totalorder %s258, %s260
      %p267 = scmp.eq.s32.totalorder %s35, 1
      %p268 = por %p266, %p267
      %p269 = scmp.ne.s32.totalorder %s260, %s261
      %p270 = scmp.eq.s32.totalorder %s35, 0
      %p271 = por %p269, %p270
      %p272 = scmp.ne.s32.totalorder %s260, %s261
      %p273 = scmp.eq.s32.totalorder %s36, 1
      %p274 = por %p272, %p273
      %p276 = scmp.ne.s32.totalorder %s261, %s275
      %p277 = scmp.eq.s32.totalorder %s36, 0
      %p278 = por %p276, %p277
      %s280 = sadd.s32 %s279, 1
      %p283 = scmp.eq.s32.totalorder %s30, 1
      %p284 = scmp.ne.s32.totalorder %s279, %s281
      %p285 = scmp.eq.s32.totalorder %s30, 0
      %p286 = por %p284, %p285
      %p287 = scmp.ne.s32.totalorder %s279, %s281
      %p288 = scmp.eq.s32.totalorder %s35, 1
      %p289 = por %p287, %p288
      %p290 = scmp.ne.s32.totalorder %s281, %s282
      %p291 = scmp.eq.s32.totalorder %s35, 0
      %p292 = por %p290, %p291
      %p293 = scmp.ne.s32.totalorder %s281, %s282
      %p294 = scmp.eq.s32.totalorder %s36, 1
      %p295 = por %p293, %p294
      %p297 = scmp.ne.s32.totalorder %s282, %s296
      %p298 = scmp.eq.s32.totalorder %s36, 0
      %p299 = por %p297, %p298
      %s301 = sadd.s32 %s300, 1
      %p304 = scmp.eq.s32.totalorder %s30, 1
      %p305 = scmp.ne.s32.totalorder %s300, %s302
      %p306 = scmp.eq.s32.totalorder %s30, 0
      %p307 = por %p305, %p306
      %p308 = scmp.ne.s32.totalorder %s300, %s302
      %p309 = scmp.eq.s32.totalorder %s35, 1
      %p310 = por %p308, %p309
      %p311 = scmp.ne.s32.totalorder %s302, %s303
      %p312 = scmp.eq.s32.totalorder %s35, 0
      %p313 = por %p311, %p312
      %p314 = scmp.ne.s32.totalorder %s302, %s303
      %p315 = scmp.eq.s32.totalorder %s36, 1
      %p316 = por %p314, %p315
      %p318 = scmp.ne.s32.totalorder %s303, %s317
      %p319 = scmp.eq.s32.totalorder %s36, 0
      %p320 = por %p318, %p319
      %s322 = sadd.s32 %s321, 1
      %p325 = scmp.eq.s32.totalorder %s30, 1
      %p326 = scmp.ne.s32.totalorder %s321, %s323
      %p327 = scmp.eq.s32.totalorder %s30, 0
      %p328 = por %p326, %p327
      %p329 = scmp.ne.s32.totalorder %s321, %s323
      %p330 = scmp.eq.s32.totalorder %s35, 1
      %p331 = por %p329, %p330
      %p332 = scmp.ne.s32.totalorder %s323, %s324
      %p333 = scmp.eq.s32.totalorder %s35, 0
      %p334 = por %p332, %p333
      %p335 = scmp.ne.s32.totalorder %s323, %s324
      %p336 = scmp.eq.s32.totalorder %s36, 1
      %p337 = por %p335, %p336
      %p339 = scmp.ne.s32.totalorder %s324, %s338
      %p340 = scmp.eq.s32.totalorder %s36, 0
      %p341 = por %p339, %p340
      %s342 = ssub.s32 %s30, %s37
      %p343 = scmp.eq.s32.totalorder %s342, 0
      %s345 = sadd.s32 %s344, 1
      %s346 = scalar_select %p343, %s344, %s345
      %p349 = pneg %p343
      %p350 = scmp.eq.s32.totalorder %s30, 1
      %p351 = por %p349, %p350
      %p352 = scmp.ne.s32.totalorder %s344, %s347
      %p353 = scmp.eq.s32.totalorder %s30, 0
      %p354 = por %p352, %p353
      %p355 = scmp.ne.s32.totalorder %s344, %s347
      %p356 = scmp.eq.s32.totalorder %s35, 1
      %p357 = por %p355, %p356
      %p358 = scmp.ne.s32.totalorder %s347, %s348
      %p359 = scmp.eq.s32.totalorder %s35, 0
      %p360 = por %p358, %p359
      %p361 = scmp.ne.s32.totalorder %s347, %s348
      %p362 = scmp.eq.s32.totalorder %s36, 1
      %p363 = por %p361, %p362
      %p365 = scmp.ne.s32.totalorder %s348, %s364
      %p366 = scmp.eq.s32.totalorder %s36, 0
      %p367 = por %p365, %p366
      %p368 = scmp.le.s32.totalorder 1, %s30
      %p369 = scmp.lt.s32.totalorder %s30, 3
      %p370 = pnand %p368, %p369
      %p371 = pneg %p370
      // Predicated region
      $region9: #{tpu_custom_call.1} parent=5 // pred_check
        _
      $region10: #{tpu_custom_call.1} parent=5 // pred_check_branch
        %373 = sbr.rel (%p370) target = $region12
      $region11: #{tpu_custom_call.1} parent=5 // pred_region
        %s374 = ssub.s32 %s30, 1
        // Predicated region
        $region13: #{tpu_custom_call.1} parent=11 // pred_check
          %p375 = pneg %p103
        $region14: #{tpu_custom_call.1} parent=11 // pred_check_branch
          %377 = sbr.rel (%p375) target = $region16
        $region15: #{tpu_custom_call.1} parent=11 // pred_region
          _
        $region16: #{tpu_custom_call.1} parent=11 // pred_fallthru
          _
        // Predicated region
        $region17: #{tpu_custom_call.1} parent=11 // pred_check
          %p378 = pneg %p124
        $region18: #{tpu_custom_call.1} parent=11 // pred_check_branch
          %380 = sbr.rel (%p378) target = $region20
        $region19: #{tpu_custom_call.1} parent=11 // pred_region
          _
        $region20: #{tpu_custom_call.1} parent=11 // pred_fallthru
          _
        // Predicated region
        $region21: #{tpu_custom_call.1} parent=11 // pred_check
          %p381 = pneg %p145
        $region22: #{tpu_custom_call.1} parent=11 // pred_check_branch
          %383 = sbr.rel (%p381) target = $region24
        $region23: #{tpu_custom_call.1} parent=11 // pred_region
          %385 = vsyncadd [#allocation8], 0
          %s386 = sshll.u32 %s4, 4
          %s387 = int_to_ptr.hbm [resolvable:$true] %s386
          %s388 = sshll.u32 [#allocation9], 4
          %s389 = int_to_ptr.vmem [resolvable:$true] %s388
          %394 = dma.hbm_to_vmem [thread:$0]  %s387, 2304, %s389, [#allocation8], 64, 64, 4
        $region24: #{tpu_custom_call.1} parent=11 // pred_fallthru
          _
        // Predicated region
        $region25: #{tpu_custom_call.1} parent=11 // pred_check
          %p395 = pneg %p166
        $region26: #{tpu_custom_call.1} parent=11 // pred_check_branch
          %397 = sbr.rel (%p395) target = $region28
        $region27: #{tpu_custom_call.1} parent=11 // pred_region
          _
        $region28: #{tpu_custom_call.1} parent=11 // pred_fallthru
          _
        // Predicated region
        $region29: #{tpu_custom_call.1} parent=11 // pred_check
          %p398 = pneg %p187
        $region30: #{tpu_custom_call.1} parent=11 // pred_check_branch
          %400 = sbr.rel (%p398) target = $region32
        $region31: #{tpu_custom_call.1} parent=11 // pred_region
          %402 = vsyncadd [#allocation11], 0
          %s403 = sshll.u32 %s6, 4
          %s404 = int_to_ptr.hbm [resolvable:$true] %s403
          %s405 = sshll.u32 [#allocation10], 4
          %s406 = int_to_ptr.vmem [resolvable:$true] %s405
          %411 = dma.hbm_to_vmem [thread:$0]  %s404, 4608, %s406, [#allocation11], 64, 64, 4
        $region32: #{tpu_custom_call.1} parent=11 // pred_fallthru
          _
        // Predicated region
        $region33: #{tpu_custom_call.1} parent=11 // pred_check
          %p412 = pneg %p208
        $region34: #{tpu_custom_call.1} parent=11 // pred_check_branch
          %414 = sbr.rel (%p412) target = $region36
        $region35: #{tpu_custom_call.1} parent=11 // pred_region
          _
        $region36: #{tpu_custom_call.1} parent=11 // pred_fallthru
          _
        // Predicated region
        $region37: #{tpu_custom_call.1} parent=11 // pred_check
          %p415 = pneg %p229
        $region38: #{tpu_custom_call.1} parent=11 // pred_check_branch
          %417 = sbr.rel (%p415) target = $region40
        $region39: #{tpu_custom_call.1} parent=11 // pred_region
          _
        $region40: #{tpu_custom_call.1} parent=11 // pred_fallthru
          _
        // Predicated region
        $region41: #{tpu_custom_call.1} parent=11 // pred_check
          %p418 = pneg %p250
        $region42: #{tpu_custom_call.1} parent=11 // pred_check_branch
          %420 = sbr.rel (%p418) target = $region44
        $region43: #{tpu_custom_call.1} parent=11 // pred_region
          _
        $region44: #{tpu_custom_call.1} parent=11 // pred_fallthru
          _
        // Predicated region
        $region45: #{tpu_custom_call.1} parent=11 // pred_check
          %p421 = pneg %p271
        $region46: #{tpu_custom_call.1} parent=11 // pred_check_branch
          %423 = sbr.rel (%p421) target = $region48
        $region47: #{tpu_custom_call.1} parent=11 // pred_region
          _
        $region48: #{tpu_custom_call.1} parent=11 // pred_fallthru
          _
        // Predicated region
        $region49: #{tpu_custom_call.1} parent=11 // pred_check
          %p424 = pneg %p292
        $region50: #{tpu_custom_call.1} parent=11 // pred_check_branch
          %426 = sbr.rel (%p424) target = $region52
        $region51: #{tpu_custom_call.1} parent=11 // pred_region
          _
        $region52: #{tpu_custom_call.1} parent=11 // pred_fallthru
          _
        // Predicated region
        $region53: #{tpu_custom_call.1} parent=11 // pred_check
          %p427 = pneg %p313
        $region54: #{tpu_custom_call.1} parent=11 // pred_check_branch
          %429 = sbr.rel (%p427) target = $region56
        $region55: #{tpu_custom_call.1} parent=11 // pred_region
          _
        $region56: #{tpu_custom_call.1} parent=11 // pred_fallthru
          _
        // Predicated region
        $region57: #{tpu_custom_call.1} parent=11 // pred_check
          %p430 = pneg %p334
        $region58: #{tpu_custom_call.1} parent=11 // pred_check_branch
          %432 = sbr.rel (%p430) target = $region60
        $region59: #{tpu_custom_call.1} parent=11 // pred_region
          _
        $region60: #{tpu_custom_call.1} parent=11 // pred_fallthru
          _
      $region12: #{tpu_custom_call.1} parent=5 // pred_fallthru
        _
      %p433 = scmp.lt.s32.totalorder %s30, 2
      // Predicated region
      $region61: #{tpu_custom_call.1} parent=5 // pred_check
        %p434 = pneg %p433
      $region62: #{tpu_custom_call.1} parent=5 // pred_check_branch
        %436 = sbr.rel (%p434) target = $region64
      $region63: #{tpu_custom_call.1} parent=5 // pred_region
        // Predicated region
        $region65: #{tpu_custom_call.1} parent=63 // pred_check
          %p437 = pneg %p50
        $region66: #{tpu_custom_call.1} parent=63 // pred_check_branch
          %439 = sbr.rel (%p437) target = $region68
        $region67: #{tpu_custom_call.1} parent=63 // pred_region
          %s440 = sand.u32 %s40, 1
          %s441 = scalar_lea.sflag [#allocation5], %s440
          %s442 = sand.u32 %s40, 1
          %s443 = smul.addr %s442, 256
          %s444 = scalar_lea.vmem [#allocation4], %s443
          %446 = vsyncadd %s441, 0
          %s447 = smul.addr %s30, 32
          %s448 = smul.addr %s447, 8
          %s449 = scalar_lea.hbm %s0, %s448
          %s450 = sshll.u32 %s449, 4
          %s451 = int_to_ptr.hbm [resolvable:$true] %s450
          %s452 = sshll.u32 %s444, 4
          %s453 = int_to_ptr.vmem [resolvable:$true] %s452
          %458 = dma.hbm_to_vmem [thread:$0]  %s451, 4096, %s453, %s441, 128, 128, 8
        $region68: #{tpu_custom_call.1} parent=63 // pred_fallthru
          _
        // Predicated region
        $region69: #{tpu_custom_call.1} parent=63 // pred_check
          %p459 = pneg %p76
        $region70: #{tpu_custom_call.1} parent=63 // pred_check_branch
          %461 = sbr.rel (%p459) target = $region72
        $region71: #{tpu_custom_call.1} parent=63 // pred_region
          %s462 = sand.u32 %s30, 1
          %s463 = scalar_lea.sflag [#allocation8], %s462
          %s464 = sand.u32 %s66, 1
          %s465 = smul.addr %s464, 64
          %s466 = scalar_lea.vmem [#allocation7], %s465
          %468 = vsyncadd %s463, 0
          %s469 = smul.addr %s30, 8
          %s470 = smul.addr %s469, 8
          %s471 = scalar_lea.hbm %s1, %s470
          %s472 = sshll.u32 %s471, 4
          %s473 = int_to_ptr.hbm [resolvable:$true] %s472
          %s474 = sshll.u32 %s466, 4
          %s475 = int_to_ptr.vmem [resolvable:$true] %s474
          %480 = dma.hbm_to_vmem [thread:$0]  %s473, 1024, %s475, %s463, 128, 128, 8
        $region72: #{tpu_custom_call.1} parent=63 // pred_fallthru
          _
      $region64: #{tpu_custom_call.1} parent=5 // pred_fallthru
        _
      %p481 = scmp.le.s32.totalorder 1, %s30
      %p482 = scmp.lt.s32.totalorder %s30, 3
      %p483 = pnand %p481, %p482
      %p484 = pneg %p483
      // Predicated region
      $region73: #{tpu_custom_call.1} parent=5 // pred_check
        _
      $region74: #{tpu_custom_call.1} parent=5 // pred_check_branch
        %486 = sbr.rel (%p483) target = $region76
      $region75: #{tpu_custom_call.1} parent=5 // pred_region
        %s487 = ssub.s32 %s30, 1
        %s488 = sand.u32 %s43, 1
        %s489 = scalar_lea.sflag [#allocation5], %s488
        %s490 = sand.u32 %s43, 1
        %s491 = smul.addr %s490, 256
        %s492 = scalar_lea.vmem [#allocation4], %s491
        // Predicated region
        $region77: #{tpu_custom_call.1} parent=75 // pred_check
          %p493 = pneg %p56
        $region78: #{tpu_custom_call.1} parent=75 // pred_check_branch
          %495 = sbr.rel (%p493) target = $region80
        $region79: #{tpu_custom_call.1} parent=75 // pred_region
          %497 = dma.done %s489, 4096
        $region80: #{tpu_custom_call.1} parent=75 // pred_fallthru
          _
        %s498 = sand.u32 %s35, 1
        %s499 = scalar_lea.sflag [#allocation8], %s498
        %s500 = sand.u32 %s69, 1
        %s501 = smul.addr %s500, 64
        %s502 = scalar_lea.vmem [#allocation7], %s501
        // Predicated region
        $region81: #{tpu_custom_call.1} parent=75 // pred_check
          %p503 = pneg %p82
        $region82: #{tpu_custom_call.1} parent=75 // pred_check_branch
          %505 = sbr.rel (%p503) target = $region84
        $region83: #{tpu_custom_call.1} parent=75 // pred_region
          %507 = dma.done %s499, 1024
        $region84: #{tpu_custom_call.1} parent=75 // pred_fallthru
          _
        // Predicated region
        $region85: #{tpu_custom_call.1} parent=75 // pred_check
          %p508 = pneg %p145
        $region86: #{tpu_custom_call.1} parent=75 // pred_check_branch
          %510 = sbr.rel (%p508) target = $region88
        $region87: #{tpu_custom_call.1} parent=75 // pred_region
          %512 = dma.done [#allocation8], 2304
        $region88: #{tpu_custom_call.1} parent=75 // pred_fallthru
          _
        // Predicated region
        $region89: #{tpu_custom_call.1} parent=75 // pred_check
          %p513 = pneg %p187
        $region90: #{tpu_custom_call.1} parent=75 // pred_check_branch
          %515 = sbr.rel (%p513) target = $region92
        $region91: #{tpu_custom_call.1} parent=75 // pred_region
          %517 = dma.done [#allocation11], 4608
        $region92: #{tpu_custom_call.1} parent=75 // pred_fallthru
          _
        %s518 = sand.u32 %s43, 1
        %s519 = scalar_lea.sflag [#allocation5], %s518
        %s520 = sand.u32 %s43, 1
        %s521 = smul.addr %s520, 256
        %s522 = scalar_lea.vmem [#allocation4], %s521
        %p523 = pneg %p56
        %p524 = pneg %p53
        %s525 = sand.u32 %s35, 1
        %s526 = scalar_lea.sflag [#allocation8], %s525
        %s527 = sand.u32 %s69, 1
        %s528 = smul.addr %s527, 64
        %s529 = scalar_lea.vmem [#allocation7], %s528
        %p530 = pneg %p82
        %p531 = pneg %p79
        %p532 = pneg %p103
        %p533 = pneg %p100
        %p534 = pneg %p124
        %p535 = pneg %p121
        %p536 = pneg %p145
        %p537 = pneg %p142
        %p538 = pneg %p166
        %p539 = pneg %p163
        %p540 = pneg %p187
        %p541 = pneg %p184
        %p542 = pneg %p208
        %p543 = pneg %p205
        %p544 = pneg %p229
        %p545 = pneg %p226
        %p546 = pneg %p250
        %p547 = pneg %p247
        %p548 = pneg %p271
        %p549 = pneg %p268
        %p550 = pneg %p292
        %p551 = pneg %p289
        %p552 = pneg %p313
        %p553 = pneg %p310
        %p554 = pneg %p334
        %p555 = pneg %p331
        %p556 = pneg %p360
        %p557 = pneg %p357
        %s558 = sand.u32 %s347, 1
        %s559 = scalar_lea.sflag [#allocation6], %s558
        %s560 = sand.u32 %s347, 1
        %s561 = smul.addr %s560, 64
        %s562 = scalar_lea.vmem [#allocation12], %s561
        %vm564 = vcmask 261120
        %565 = vst.msk [vmem:[#allocation2] sm:$0xff] %vm564, 0.0
        %566 = vst.msk [vmem:[#allocation2 + $0x8] sm:$0xff] %vm564, 0.0
        %vm567 = vcmask 254976
        %568 = vst.msk [vmem:[#allocation2 + $0x10] sm:$0x3] %vm567, 0.0
        %569 = vst.msk [vmem:[#allocation2 + $0x18] sm:$0xff] %vm564, 0.0
        %570 = vst.msk [vmem:[#allocation2 + $0x20] sm:$0xff] %vm564, 0.0
        %571 = vst.msk [vmem:[#allocation2 + $0x28] sm:$0x3] %vm567, 0.0
        %572 = vst.msk [vmem:[#allocation2 + $0x30] sm:$0xff] %vm564, 0.0
        %573 = vst.msk [vmem:[#allocation2 + $0x38] sm:$0xff] %vm564, 0.0
        %574 = vst.msk [vmem:[#allocation2 + $0x40] sm:$0x3] %vm567, 0.0
        %575 = vst.msk [vmem:[#allocation2 + $0x48] sm:$0xff] %vm564, 0.0
        %576 = vst.msk [vmem:[#allocation2 + $0x50] sm:$0xff] %vm564, 0.0
        %577 = vst.msk [vmem:[#allocation2 + $0x58] sm:$0x3] %vm567, 0.0
        %578 = vst.msk [vmem:[#allocation2 + $0x60] sm:$0xff] %vm564, 0.0
        %579 = vst.msk [vmem:[#allocation2 + $0x68] sm:$0xff] %vm564, 0.0
        %580 = vst.msk [vmem:[#allocation2 + $0x70] sm:$0x3] %vm567, 0.0
        %581 = vst.msk [vmem:[#allocation2 + $0x78] sm:$0xff] %vm564, 0.0
        %582 = vst.msk [vmem:[#allocation2 + $0x80] sm:$0xff] %vm564, 0.0
        %583 = vst.msk [vmem:[#allocation2 + $0x88] sm:$0x3] %vm567, 0.0
        %584 = vst.msk [vmem:[#allocation2 + $0x90] sm:$0xff] %vm564, 0.0
        %585 = vst.msk [vmem:[#allocation2 + $0x98] sm:$0xff] %vm564, 0.0
        %586 = vst.msk [vmem:[#allocation2 + $0xa0] sm:$0x3] %vm567, 0.0
        %587 = vst.msk [vmem:[#allocation2 + $0xa8] sm:$0xff] %vm564, 0.0
        %588 = vst.msk [vmem:[#allocation2 + $0xb0] sm:$0xff] %vm564, 0.0
        %589 = vst.msk [vmem:[#allocation2 + $0xb8] sm:$0x3] %vm567, 0.0
        %590 = vst.msk [vmem:[#allocation2 + $0xc0] sm:$0xff] %vm564, 0.0
        %591 = vst.msk [vmem:[#allocation2 + $0xc8] sm:$0xff] %vm564, 0.0
        %592 = vst.msk [vmem:[#allocation2 + $0xd0] sm:$0x3] %vm567, 0.0
        %593 = vst.msk [vmem:[#allocation2 + $0xd8] sm:$0xff] %vm564, 0.0
        %594 = vst.msk [vmem:[#allocation2 + $0xe0] sm:$0xff] %vm564, 0.0
        %595 = vst.msk [vmem:[#allocation2 + $0xe8] sm:$0x3] %vm567, 0.0
        %596 = vst.msk [vmem:[#allocation2 + $0xf0] sm:$0xff] %vm564, 0.0
        %597 = vst.msk [vmem:[#allocation2 + $0xf8] sm:$0xff] %vm564, 0.0
        %598 = vst.msk [vmem:[#allocation2 + $0x100] sm:$0x3] %vm567, 0.0
        %599 = vst.msk [vmem:[#allocation2 + $0x108] sm:$0xff] %vm564, 0.0
        %600 = vst.msk [vmem:[#allocation2 + $0x110] sm:$0xff] %vm564, 0.0
        %601 = vst.msk [vmem:[#allocation2 + $0x118] sm:$0x3] %vm567, 0.0
        %602 = vst.msk [vmem:[#allocation2 + $0x120] sm:$0xff] %vm564, 0.0
        %603 = vst.msk [vmem:[#allocation2 + $0x128] sm:$0xff] %vm564, 0.0
        %604 = vst.msk [vmem:[#allocation2 + $0x130] sm:$0x3] %vm567, 0.0
        %605 = vst.msk [vmem:[#allocation2 + $0x138] sm:$0xff] %vm564, 0.0
        %606 = vst.msk [vmem:[#allocation2 + $0x140] sm:$0xff] %vm564, 0.0
        %607 = vst.msk [vmem:[#allocation2 + $0x148] sm:$0x3] %vm567, 0.0
        %608 = vst.msk [vmem:[#allocation2 + $0x150] sm:$0xff] %vm564, 0.0
        %609 = vst.msk [vmem:[#allocation2 + $0x158] sm:$0xff] %vm564, 0.0
        %610 = vst.msk [vmem:[#allocation2 + $0x160] sm:$0x3] %vm567, 0.0
        %611 = vst.msk [vmem:[#allocation2 + $0x168] sm:$0xff] %vm564, 0.0
        %612 = vst.msk [vmem:[#allocation2 + $0x170] sm:$0xff] %vm564, 0.0
        %613 = vst.msk [vmem:[#allocation2 + $0x178] sm:$0x3] %vm567, 0.0
        %614 = vst.msk [vmem:[#allocation2 + $0x180] sm:$0xff] %vm564, 0.0
        %615 = vst.msk [vmem:[#allocation2 + $0x188] sm:$0xff] %vm564, 0.0
        %616 = vst.msk [vmem:[#allocation2 + $0x190] sm:$0x3] %vm567, 0.0
        %617 = vst.msk [vmem:[#allocation2 + $0x198] sm:$0xff] %vm564, 0.0
        %618 = vst.msk [vmem:[#allocation2 + $0x1a0] sm:$0xff] %vm564, 0.0
        %619 = vst.msk [vmem:[#allocation2 + $0x1a8] sm:$0x3] %vm567, 0.0
        %v620 = vld [vmem:[%s492] sm:$0xff]
        %v621 = vld [vmem:[%s492 + $0x8] sm:$0xff]
        %v622 = vld [vmem:[%s492 + $0x10] sm:$0xff]
        %v623 = vld [vmem:[%s492 + $0x18] sm:$0xff]
        %v624 = vld [vmem:[%s492 + $0x20] sm:$0xff]
        %v625 = vld [vmem:[%s492 + $0x28] sm:$0xff]
        %v626 = vld [vmem:[%s492 + $0x30] sm:$0xff]
        %v627 = vld [vmem:[%s492 + $0x38] sm:$0xff]
        %v628 = vld [vmem:[%s492 + $0x40] sm:$0xff]
        %v629 = vld [vmem:[%s492 + $0x48] sm:$0xff]
        %v630 = vld [vmem:[%s492 + $0x50] sm:$0xff]
        %v631 = vld [vmem:[%s492 + $0x58] sm:$0xff]
        %v632 = vld [vmem:[%s492 + $0x60] sm:$0xff]
        %v633 = vld [vmem:[%s492 + $0x68] sm:$0xff]
        %v634 = vld [vmem:[%s492 + $0x70] sm:$0xff]
        %v635 = vld [vmem:[%s492 + $0x78] sm:$0xff]
        %v636 = vld [vmem:[%s492 + $0x80] sm:$0xff]
        %v637 = vld [vmem:[%s492 + $0x88] sm:$0xff]
        %v638 = vld [vmem:[%s492 + $0x90] sm:$0xff]
        %v639 = vld [vmem:[%s492 + $0x98] sm:$0xff]
        %v640 = vld [vmem:[%s492 + $0xa0] sm:$0xff]
        %v641 = vld [vmem:[%s492 + $0xa8] sm:$0xff]
        %v642 = vld [vmem:[%s492 + $0xb0] sm:$0xff]
        %v643 = vld [vmem:[%s492 + $0xb8] sm:$0xff]
        %v644 = vld [vmem:[%s492 + $0xc0] sm:$0xff]
        %v645 = vld [vmem:[%s492 + $0xc8] sm:$0xff]
        %v646 = vld [vmem:[%s492 + $0xd0] sm:$0xff]
        %v647 = vld [vmem:[%s492 + $0xd8] sm:$0xff]
        %v648 = vld [vmem:[%s492 + $0xe0] sm:$0xff]
        %v649 = vld [vmem:[%s492 + $0xe8] sm:$0xff]
        %v650 = vld [vmem:[%s492 + $0xf0] sm:$0xff]
        %v651 = vld [vmem:[%s492 + $0xf8] sm:$0xff]
        %v652 = vld [vmem:[%s2] sm:$0x1]
        %v654 = vperm.slane %v652, 0
        %v656 = vmul.f32 %v620, %v654
        %v657 = vmul.f32 %v621, %v654
        %v658 = vmul.f32 %v622, %v654
        %v659 = vmul.f32 %v623, %v654
        %v660 = vmul.f32 %v624, %v654
        %v661 = vmul.f32 %v625, %v654
        %v662 = vmul.f32 %v626, %v654
        %v663 = vmul.f32 %v627, %v654
        %v664 = vmul.f32 %v628, %v654
        %v665 = vmul.f32 %v629, %v654
        %v666 = vmul.f32 %v630, %v654
        %v667 = vmul.f32 %v631, %v654
        %v668 = vmul.f32 %v632, %v654
        %v669 = vmul.f32 %v633, %v654
        %v670 = vmul.f32 %v634, %v654
        %v671 = vmul.f32 %v635, %v654
        %v672 = vmul.f32 %v636, %v654
        %v673 = vmul.f32 %v637, %v654
        %v674 = vmul.f32 %v638, %v654
        %v675 = vmul.f32 %v639, %v654
        %v676 = vmul.f32 %v640, %v654
        %v677 = vmul.f32 %v641, %v654
        %v678 = vmul.f32 %v642, %v654
        %v679 = vmul.f32 %v643, %v654
        %v680 = vmul.f32 %v644, %v654
        %v681 = vmul.f32 %v645, %v654
        %v682 = vmul.f32 %v646, %v654
        %v683 = vmul.f32 %v647, %v654
        %v684 = vmul.f32 %v648, %v654
        %v685 = vmul.f32 %v649, %v654
        %v686 = vmul.f32 %v650, %v654
        %v687 = vmul.f32 %v651, %v654
        %v688 = vld [vmem:[%s3] sm:$0x1]
        %v690 = vperm.slane %v688, 0
        %v692 = vadd.f32 %v656, %v690
        %v693 = vadd.f32 %v657, %v690
        %v694 = vadd.f32 %v658, %v690
        %v695 = vadd.f32 %v659, %v690
        %v696 = vadd.f32 %v660, %v690
        %v697 = vadd.f32 %v661, %v690
        %v698 = vadd.f32 %v662, %v690
        %v699 = vadd.f32 %v663, %v690
        %v700 = vadd.f32 %v664, %v690
        %v701 = vadd.f32 %v665, %v690
        %v702 = vadd.f32 %v666, %v690
        %v703 = vadd.f32 %v667, %v690
        %v704 = vadd.f32 %v668, %v690
        %v705 = vadd.f32 %v669, %v690
        %v706 = vadd.f32 %v670, %v690
        %v707 = vadd.f32 %v671, %v690
        %v708 = vadd.f32 %v672, %v690
        %v709 = vadd.f32 %v673, %v690
        %v710 = vadd.f32 %v674, %v690
        %v711 = vadd.f32 %v675, %v690
        %v712 = vadd.f32 %v676, %v690
        %v713 = vadd.f32 %v677, %v690
        %v714 = vadd.f32 %v678, %v690
        %v715 = vadd.f32 %v679, %v690
        %v716 = vadd.f32 %v680, %v690
        %v717 = vadd.f32 %v681, %v690
        %v718 = vadd.f32 %v682, %v690
        %v719 = vadd.f32 %v683, %v690
        %v720 = vadd.f32 %v684, %v690
        %v721 = vadd.f32 %v685, %v690
        %v722 = vadd.f32 %v686, %v690
        %v723 = vadd.f32 %v687, %v690
        %s724 = scalar_lea.vmem [#allocation2], 24
        %725 = vst.msk [vmem:[%s724 + $0x1] sm:$0xff] %vm564, %v692
        %726 = vst.msk [vmem:[%s724 + $0x9] sm:$0xff] %vm564, %v693
        %727 = vst.msk [vmem:[%s724 + $0x19] sm:$0xff] %vm564, %v694
        %728 = vst.msk [vmem:[%s724 + $0x21] sm:$0xff] %vm564, %v695
        %729 = vst.msk [vmem:[%s724 + $0x31] sm:$0xff] %vm564, %v696
        %730 = vst.msk [vmem:[%s724 + $0x39] sm:$0xff] %vm564, %v697
        %731 = vst.msk [vmem:[%s724 + $0x49] sm:$0xff] %vm564, %v698
        %732 = vst.msk [vmem:[%s724 + $0x51] sm:$0xff] %vm564, %v699
        %733 = vst.msk [vmem:[%s724 + $0x61] sm:$0xff] %vm564, %v700
        %734 = vst.msk [vmem:[%s724 + $0x69] sm:$0xff] %vm564, %v701
        %735 = vst.msk [vmem:[%s724 + $0x79] sm:$0xff] %vm564, %v702
        %736 = vst.msk [vmem:[%s724 + $0x81] sm:$0xff] %vm564, %v703
        %737 = vst.msk [vmem:[%s724 + $0x91] sm:$0xff] %vm564, %v704
        %738 = vst.msk [vmem:[%s724 + $0x99] sm:$0xff] %vm564, %v705
        %739 = vst.msk [vmem:[%s724 + $0xa9] sm:$0xff] %vm564, %v706
        %740 = vst.msk [vmem:[%s724 + $0xb1] sm:$0xff] %vm564, %v707
        %741 = vst.msk [vmem:[%s724 + $0xc1] sm:$0xff] %vm564, %v708
        %742 = vst.msk [vmem:[%s724 + $0xc9] sm:$0xff] %vm564, %v709
        %743 = vst.msk [vmem:[%s724 + $0xd9] sm:$0xff] %vm564, %v710
        %744 = vst.msk [vmem:[%s724 + $0xe1] sm:$0xff] %vm564, %v711
        %745 = vst.msk [vmem:[%s724 + $0xf1] sm:$0xff] %vm564, %v712
        %746 = vst.msk [vmem:[%s724 + $0xf9] sm:$0xff] %vm564, %v713
        %747 = vst.msk [vmem:[%s724 + $0x109] sm:$0xff] %vm564, %v714
        %748 = vst.msk [vmem:[%s724 + $0x111] sm:$0xff] %vm564, %v715
        %749 = vst.msk [vmem:[%s724 + $0x121] sm:$0xff] %vm564, %v716
        %750 = vst.msk [vmem:[%s724 + $0x129] sm:$0xff] %vm564, %v717
        %751 = vst.msk [vmem:[%s724 + $0x139] sm:$0xff] %vm564, %v718
        %752 = vst.msk [vmem:[%s724 + $0x141] sm:$0xff] %vm564, %v719
        %753 = vst.msk [vmem:[%s724 + $0x151] sm:$0xff] %vm564, %v720
        %754 = vst.msk [vmem:[%s724 + $0x159] sm:$0xff] %vm564, %v721
        %755 = vst.msk [vmem:[%s724 + $0x169] sm:$0xff] %vm564, %v722
        %756 = vst.msk [vmem:[%s724 + $0x171] sm:$0xff] %vm564, %v723
        %v757 = vld [vmem:[#allocation2] sm:$0xff]
        %v758 = vld [vmem:[#allocation2 + $0x8] sm:$0xff]
        %v759 = vld [vmem:[#allocation2 + $0x18] sm:$0xff]
        %v760 = vld [vmem:[#allocation2 + $0x20] sm:$0xff]
        %v761 = vld [vmem:[#allocation2 + $0x30] sm:$0xff]
        %v762 = vld [vmem:[#allocation2 + $0x38] sm:$0xff]
        %v763 = vld [vmem:[#allocation2 + $0x48] sm:$0xff]
        %v764 = vld [vmem:[#allocation2 + $0x50] sm:$0xff]
        %v765 = vld [vmem:[#allocation2 + $0x60] sm:$0xff]
        %v766 = vld [vmem:[#allocation2 + $0x68] sm:$0xff]
        %v767 = vld [vmem:[#allocation2 + $0x78] sm:$0xff]
        %v768 = vld [vmem:[#allocation2 + $0x80] sm:$0xff]
        %v769 = vld [vmem:[#allocation2 + $0x90] sm:$0xff]
        %v770 = vld [vmem:[#allocation2 + $0x98] sm:$0xff]
        %v771 = vld [vmem:[#allocation2 + $0xa8] sm:$0xff]
        %v772 = vld [vmem:[#allocation2 + $0xb0] sm:$0xff]
        %v773 = vld [vmem:[#allocation2 + $0xc0] sm:$0xff]
        %v774 = vld [vmem:[#allocation2 + $0xc8] sm:$0xff]
        %v775 = vld [vmem:[#allocation2 + $0xd8] sm:$0xff]
        %v776 = vld [vmem:[#allocation2 + $0xe0] sm:$0xff]
        %v777 = vld [vmem:[#allocation2 + $0xf0] sm:$0xff]
        %v778 = vld [vmem:[#allocation2 + $0xf8] sm:$0xff]
        %v779 = vld [vmem:[#allocation2 + $0x108] sm:$0xff]
        %v780 = vld [vmem:[#allocation2 + $0x110] sm:$0xff]
        %v781 = vld [vmem:[#allocation2 + $0x120] sm:$0xff]
        %v782 = vld [vmem:[#allocation2 + $0x128] sm:$0xff]
        %v783 = vld [vmem:[#allocation2 + $0x138] sm:$0xff]
        %v784 = vld [vmem:[#allocation2 + $0x140] sm:$0xff]
        %v785 = vld [vmem:[#allocation2 + $0x150] sm:$0xff]
        %v786 = vld [vmem:[#allocation2 + $0x158] sm:$0xff]
        %v787 = vld [vmem:[#allocation2 + $0x168] sm:$0xff]
        %v788 = vld [vmem:[#allocation2 + $0x170] sm:$0xff]
        %v789 = vpack.c.bf16 %v757, %v757
        %v790 = vpack.c.bf16 %v758, %v758
        %v791 = vpack.c.bf16 %v759, %v759
        %v792 = vpack.c.bf16 %v760, %v760
        %v793 = vpack.c.bf16 %v761, %v761
        %v794 = vpack.c.bf16 %v762, %v762
        %v795 = vpack.c.bf16 %v763, %v763
        %v796 = vpack.c.bf16 %v764, %v764
        %v797 = vpack.c.bf16 %v765, %v765
        %v798 = vpack.c.bf16 %v766, %v766
        %v799 = vpack.c.bf16 %v767, %v767
        %v800 = vpack.c.bf16 %v768, %v768
        %v801 = vpack.c.bf16 %v769, %v769
        %v802 = vpack.c.bf16 %v770, %v770
        %v803 = vpack.c.bf16 %v771, %v771
        %v804 = vpack.c.bf16 %v772, %v772
        %v805 = vpack.c.bf16 %v773, %v773
        %v806 = vpack.c.bf16 %v774, %v774
        %v807 = vpack.c.bf16 %v775, %v775
        %v808 = vpack.c.bf16 %v776, %v776
        %v809 = vpack.c.bf16 %v777, %v777
        %v810 = vpack.c.bf16 %v778, %v778
        %v811 = vpack.c.bf16 %v779, %v779
        %v812 = vpack.c.bf16 %v780, %v780
        %v813 = vpack.c.bf16 %v781, %v781
        %v814 = vpack.c.bf16 %v782, %v782
        %v815 = vpack.c.bf16 %v783, %v783
        %v816 = vpack.c.bf16 %v784, %v784
        %v817 = vpack.c.bf16 %v785, %v785
        %v818 = vpack.c.bf16 %v786, %v786
        %v819 = vpack.c.bf16 %v787, %v787
        %v820 = vpack.c.bf16 %v788, %v788
        %v821 = vld [vmem:[#allocation9] sm:$0xf]
        %v822 = vld [vmem:[#allocation9 + $0x4] sm:$0xf]
        %v823 = vld [vmem:[#allocation9 + $0x8] sm:$0xf]
        %v824 = vld [vmem:[#allocation9 + $0xc] sm:$0xf]
        %v825 = vld [vmem:[#allocation2 + $0x1] sm:$0xff]
        %v826 = vld [vmem:[#allocation2 + $0x9] sm:$0xff]
        %v827 = vld [vmem:[#allocation2 + $0x19] sm:$0xff]
        %v828 = vld [vmem:[#allocation2 + $0x21] sm:$0xff]
        %v829 = vld [vmem:[#allocation2 + $0x31] sm:$0xff]
        %v830 = vld [vmem:[#allocation2 + $0x39] sm:$0xff]
        %v831 = vld [vmem:[#allocation2 + $0x49] sm:$0xff]
        %v832 = vld [vmem:[#allocation2 + $0x51] sm:$0xff]
        %v833 = vld [vmem:[#allocation2 + $0x61] sm:$0xff]
        %v834 = vld [vmem:[#allocation2 + $0x69] sm:$0xff]
        %v835 = vld [vmem:[#allocation2 + $0x79] sm:$0xff]
        %v836 = vld [vmem:[#allocation2 + $0x81] sm:$0xff]
        %v837 = vld [vmem:[#allocation2 + $0x91] sm:$0xff]
        %v838 = vld [vmem:[#allocation2 + $0x99] sm:$0xff]
        %v839 = vld [vmem:[#allocation2 + $0xa9] sm:$0xff]
        %v840 = vld [vmem:[#allocation2 + $0xb1] sm:$0xff]
        %v841 = vld [vmem:[#allocation2 + $0xc1] sm:$0xff]
        %v842 = vld [vmem:[#allocation2 + $0xc9] sm:$0xff]
        %v843 = vld [vmem:[#allocation2 + $0xd9] sm:$0xff]
        %v844 = vld [vmem:[#allocation2 + $0xe1] sm:$0xff]
        %v845 = vld [vmem:[#allocation2 + $0xf1] sm:$0xff]
        %v846 = vld [vmem:[#allocation2 + $0xf9] sm:$0xff]
        %v847 = vld [vmem:[#allocation2 + $0x109] sm:$0xff]
        %v848 = vld [vmem:[#allocation2 + $0x111] sm:$0xff]
        %v849 = vld [vmem:[#allocation2 + $0x121] sm:$0xff]
        %v850 = vld [vmem:[#allocation2 + $0x129] sm:$0xff]
        %v851 = vld [vmem:[#allocation2 + $0x139] sm:$0xff]
        %v852 = vld [vmem:[#allocation2 + $0x141] sm:$0xff]
        %v853 = vld [vmem:[#allocation2 + $0x151] sm:$0xff]
        %v854 = vld [vmem:[#allocation2 + $0x159] sm:$0xff]
        %v855 = vld [vmem:[#allocation2 + $0x169] sm:$0xff]
        %v856 = vld [vmem:[#allocation2 + $0x171] sm:$0xff]
        %v857 = vpack.c.bf16 %v825, %v825
        %v858 = vpack.c.bf16 %v826, %v826
        %v859 = vpack.c.bf16 %v827, %v827
        %v860 = vpack.c.bf16 %v828, %v828
        %v861 = vpack.c.bf16 %v829, %v829
        %v862 = vpack.c.bf16 %v830, %v830
        %v863 = vpack.c.bf16 %v831, %v831
        %v864 = vpack.c.bf16 %v832, %v832
        %v865 = vpack.c.bf16 %v833, %v833
        %v866 = vpack.c.bf16 %v834, %v834
        %v867 = vpack.c.bf16 %v835, %v835
        %v868 = vpack.c.bf16 %v836, %v836
        %v869 = vpack.c.bf16 %v837, %v837
        %v870 = vpack.c.bf16 %v838, %v838
        %v871 = vpack.c.bf16 %v839, %v839
        %v872 = vpack.c.bf16 %v840, %v840
        %v873 = vpack.c.bf16 %v841, %v841
        %v874 = vpack.c.bf16 %v842, %v842
        %v875 = vpack.c.bf16 %v843, %v843
        %v876 = vpack.c.bf16 %v844, %v844
        %v877 = vpack.c.bf16 %v845, %v845
        %v878 = vpack.c.bf16 %v846, %v846
        %v879 = vpack.c.bf16 %v847, %v847
        %v880 = vpack.c.bf16 %v848, %v848
        %v881 = vpack.c.bf16 %v849, %v849
        %v882 = vpack.c.bf16 %v850, %v850
        %v883 = vpack.c.bf16 %v851, %v851
        %v884 = vpack.c.bf16 %v852, %v852
        %v885 = vpack.c.bf16 %v853, %v853
        %v886 = vpack.c.bf16 %v854, %v854
        %v887 = vpack.c.bf16 %v855, %v855
        %v888 = vpack.c.bf16 %v856, %v856
        %s889 = scalar_lea.vmem [#allocation9], 16
        %v890 = vld [vmem:[%s889] sm:$0xf]
        %v891 = vld [vmem:[%s889 + $0x4] sm:$0xf]
        %v892 = vld [vmem:[%s889 + $0x8] sm:$0xf]
        %v893 = vld [vmem:[%s889 + $0xc] sm:$0xf]
        %v926 = vunpack.c.l.b16 %v857
        %v927 = vunpack.c.l.b16 %v858
        %v928 = vunpack.c.l.b16 %v859
        %v929 = vunpack.c.l.b16 %v860
        %v930 = vunpack.c.l.b16 %v861
        %v931 = vunpack.c.l.b16 %v862
        %v932 = vunpack.c.l.b16 %v863
        %v933 = vunpack.c.l.b16 %v864
        %v934 = vunpack.c.l.b16 %v865
        %v935 = vunpack.c.l.b16 %v866
        %v936 = vunpack.c.l.b16 %v867
        %v937 = vunpack.c.l.b16 %v868
        %v938 = vunpack.c.l.b16 %v869
        %v939 = vunpack.c.l.b16 %v870
        %v940 = vunpack.c.l.b16 %v871
        %v941 = vunpack.c.l.b16 %v872
        %v942 = vunpack.c.l.b16 %v873
        %v943 = vunpack.c.l.b16 %v874
        %v944 = vunpack.c.l.b16 %v875
        %v945 = vunpack.c.l.b16 %v876
        %v946 = vunpack.c.l.b16 %v877
        %v947 = vunpack.c.l.b16 %v878
        %v948 = vunpack.c.l.b16 %v879
        %v949 = vunpack.c.l.b16 %v880
        %v950 = vunpack.c.l.b16 %v881
        %v951 = vunpack.c.l.b16 %v882
        %v952 = vunpack.c.l.b16 %v883
        %v953 = vunpack.c.l.b16 %v884
        %v954 = vunpack.c.l.b16 %v885
        %v955 = vunpack.c.l.b16 %v886
        %v956 = vunpack.c.l.b16 %v887
        %v957 = vunpack.c.l.b16 %v888
        %v958 = vpack.c.b16 %v927, %v926
        %v959 = vpack.c.b16 %v929, %v928
        %v960 = vpack.c.b16 %v931, %v930
        %v961 = vpack.c.b16 %v933, %v932
        %v962 = vpack.c.b16 %v935, %v934
        %v963 = vpack.c.b16 %v937, %v936
        %v964 = vpack.c.b16 %v939, %v938
        %v965 = vpack.c.b16 %v941, %v940
        %v966 = vpack.c.b16 %v943, %v942
        %v967 = vpack.c.b16 %v945, %v944
        %v968 = vpack.c.b16 %v947, %v946
        %v969 = vpack.c.b16 %v949, %v948
        %v970 = vpack.c.b16 %v951, %v950
        %v971 = vpack.c.b16 %v953, %v952
        %v972 = vpack.c.b16 %v955, %v954
        %v973 = vpack.c.b16 %v957, %v956
        %v978 = vunpack.c.l.b16 %v890
        %v979 = vunpack.c.l.b16 %v891
        %v980 = vunpack.c.l.b16 %v892
        %v981 = vunpack.c.l.b16 %v893
        %v982 = vpack.c.b16 %v979, %v978
        %v983 = vpack.c.b16 %v981, %v980
        %v987 = vsel %vm564, %v958, 0
        %v990 = vsel %vm564, %v959, 0
        %v993 = vsel %vm564, %v960, 0
        %v996 = vsel %vm564, %v961, 0
        %v999 = vsel %vm564, %v962, 0
        %v1002 = vsel %vm564, %v963, 0
        %v1005 = vsel %vm564, %v964, 0
        %v1008 = vsel %vm564, %v965, 0
        %v1011 = vsel %vm564, %v966, 0
        %v1014 = vsel %vm564, %v967, 0
        %v1017 = vsel %vm564, %v968, 0
        %v1020 = vsel %vm564, %v969, 0
        %v1023 = vsel %vm564, %v970, 0
        %v1026 = vsel %vm564, %v971, 0
        %v1029 = vsel %vm564, %v972, 0
        %v1032 = vsel %vm564, %v973, 0
        %1034 = vmatpush.bf16.msra.mxu0 0
        %1035 = vmatpush.bf16.msra.mxu0 0
        %1036 = vmatpush.bf16.msra.mxu0 0
        %1037 = vmatpush.bf16.msra.mxu0 0
        %1038 = vmatpush.bf16.msra.mxu0 0
        %1039 = vmatpush.bf16.msra.mxu0 0
        %1040 = vmatpush.bf16.msra.mxu0 %v983
        %1041 = vmatpush.bf16.msra.mxu0 %v982
        %1042 = vmatmul.bf16.gmra.mxu0 %v987
        %v1043 = vpop.f32.mrf.mxu0
        %v1044 = vadd.f32 0.0, %v1043
        %v1045 = vpop.f32.mrf.mxu0
        %v1046 = vadd.f32 0.0, %v1045
        %1047 = vmatmul.bf16.gmra.mxu0 %v990
        %v1048 = vpop.f32.mrf.mxu0
        %v1049 = vadd.f32 0.0, %v1048
        %v1050 = vpop.f32.mrf.mxu0
        %v1051 = vadd.f32 0.0, %v1050
        %1052 = vmatmul.bf16.gmra.mxu0 %v993
        %v1053 = vpop.f32.mrf.mxu0
        %v1054 = vadd.f32 0.0, %v1053
        %v1055 = vpop.f32.mrf.mxu0
        %v1056 = vadd.f32 0.0, %v1055
        %1057 = vmatmul.bf16.gmra.mxu0 %v996
        %v1058 = vpop.f32.mrf.mxu0
        %v1059 = vadd.f32 0.0, %v1058
        %v1060 = vpop.f32.mrf.mxu0
        %v1061 = vadd.f32 0.0, %v1060
        %1062 = vmatmul.bf16.gmra.mxu0 %v999
        %v1063 = vpop.f32.mrf.mxu0
        %v1064 = vadd.f32 0.0, %v1063
        %v1065 = vpop.f32.mrf.mxu0
        %v1066 = vadd.f32 0.0, %v1065
        %1067 = vmatmul.bf16.gmra.mxu0 %v1002
        %v1068 = vpop.f32.mrf.mxu0
        %v1069 = vadd.f32 0.0, %v1068
        %v1070 = vpop.f32.mrf.mxu0
        %v1071 = vadd.f32 0.0, %v1070
        %1072 = vmatmul.bf16.gmra.mxu0 %v1005
        %v1073 = vpop.f32.mrf.mxu0
        %v1074 = vadd.f32 0.0, %v1073
        %v1075 = vpop.f32.mrf.mxu0
        %v1076 = vadd.f32 0.0, %v1075
        %1077 = vmatmul.bf16.gmra.mxu0 %v1008
        %v1078 = vpop.f32.mrf.mxu0
        %v1079 = vadd.f32 0.0, %v1078
        %v1080 = vpop.f32.mrf.mxu0
        %v1081 = vadd.f32 0.0, %v1080
        %1082 = vmatmul.bf16.gmra.mxu0 %v1011
        %v1083 = vpop.f32.mrf.mxu0
        %v1084 = vadd.f32 0.0, %v1083
        %v1085 = vpop.f32.mrf.mxu0
        %v1086 = vadd.f32 0.0, %v1085
        %1087 = vmatmul.bf16.gmra.mxu0 %v1014
        %v1088 = vpop.f32.mrf.mxu0
        %v1089 = vadd.f32 0.0, %v1088
        %v1090 = vpop.f32.mrf.mxu0
        %v1091 = vadd.f32 0.0, %v1090
        %1092 = vmatmul.bf16.gmra.mxu0 %v1017
        %v1093 = vpop.f32.mrf.mxu0
        %v1094 = vadd.f32 0.0, %v1093
        %v1095 = vpop.f32.mrf.mxu0
        %v1096 = vadd.f32 0.0, %v1095
        %1097 = vmatmul.bf16.gmra.mxu0 %v1020
        %v1098 = vpop.f32.mrf.mxu0
        %v1099 = vadd.f32 0.0, %v1098
        %v1100 = vpop.f32.mrf.mxu0
        %v1101 = vadd.f32 0.0, %v1100
        %1102 = vmatmul.bf16.gmra.mxu0 %v1023
        %v1103 = vpop.f32.mrf.mxu0
        %v1104 = vadd.f32 0.0, %v1103
        %v1105 = vpop.f32.mrf.mxu0
        %v1106 = vadd.f32 0.0, %v1105
        %1107 = vmatmul.bf16.gmra.mxu0 %v1026
        %v1108 = vpop.f32.mrf.mxu0
        %v1109 = vadd.f32 0.0, %v1108
        %v1110 = vpop.f32.mrf.mxu0
        %v1111 = vadd.f32 0.0, %v1110
        %1112 = vmatmul.bf16.gmra.mxu0 %v1029
        %v1113 = vpop.f32.mrf.mxu0
        %v1114 = vadd.f32 0.0, %v1113
        %v1115 = vpop.f32.mrf.mxu0
        %v1116 = vadd.f32 0.0, %v1115
        %1117 = vmatmul.bf16.gmra.mxu0 %v1032
        %v1118 = vpop.f32.mrf.mxu0
        %v1119 = vadd.f32 0.0, %v1118
        %v1120 = vpop.f32.mrf.mxu0
        %v1121 = vadd.f32 0.0, %v1120
        %1122 = vdwg.mxu0
        %v1155 = vunpack.c.l.b16 %v789
        %v1156 = vunpack.c.l.b16 %v790
        %v1157 = vunpack.c.l.b16 %v791
        %v1158 = vunpack.c.l.b16 %v792
        %v1159 = vunpack.c.l.b16 %v793
        %v1160 = vunpack.c.l.b16 %v794
        %v1161 = vunpack.c.l.b16 %v795
        %v1162 = vunpack.c.l.b16 %v796
        %v1163 = vunpack.c.l.b16 %v797
        %v1164 = vunpack.c.l.b16 %v798
        %v1165 = vunpack.c.l.b16 %v799
        %v1166 = vunpack.c.l.b16 %v800
        %v1167 = vunpack.c.l.b16 %v801
        %v1168 = vunpack.c.l.b16 %v802
        %v1169 = vunpack.c.l.b16 %v803
        %v1170 = vunpack.c.l.b16 %v804
        %v1171 = vunpack.c.l.b16 %v805
        %v1172 = vunpack.c.l.b16 %v806
        %v1173 = vunpack.c.l.b16 %v807
        %v1174 = vunpack.c.l.b16 %v808
        %v1175 = vunpack.c.l.b16 %v809
        %v1176 = vunpack.c.l.b16 %v810
        %v1177 = vunpack.c.l.b16 %v811
        %v1178 = vunpack.c.l.b16 %v812
        %v1179 = vunpack.c.l.b16 %v813
        %v1180 = vunpack.c.l.b16 %v814
        %v1181 = vunpack.c.l.b16 %v815
        %v1182 = vunpack.c.l.b16 %v816
        %v1183 = vunpack.c.l.b16 %v817
        %v1184 = vunpack.c.l.b16 %v818
        %v1185 = vunpack.c.l.b16 %v819
        %v1186 = vunpack.c.l.b16 %v820
        %v1187 = vpack.c.b16 %v1156, %v1155
        %v1188 = vpack.c.b16 %v1158, %v1157
        %v1189 = vpack.c.b16 %v1160, %v1159
        %v1190 = vpack.c.b16 %v1162, %v1161
        %v1191 = vpack.c.b16 %v1164, %v1163
        %v1192 = vpack.c.b16 %v1166, %v1165
        %v1193 = vpack.c.b16 %v1168, %v1167
        %v1194 = vpack.c.b16 %v1170, %v1169
        %v1195 = vpack.c.b16 %v1172, %v1171
        %v1196 = vpack.c.b16 %v1174, %v1173
        %v1197 = vpack.c.b16 %v1176, %v1175
        %v1198 = vpack.c.b16 %v1178, %v1177
        %v1199 = vpack.c.b16 %v1180, %v1179
        %v1200 = vpack.c.b16 %v1182, %v1181
        %v1201 = vpack.c.b16 %v1184, %v1183
        %v1202 = vpack.c.b16 %v1186, %v1185
        %v1207 = vunpack.c.l.b16 %v821
        %v1208 = vunpack.c.l.b16 %v822
        %v1209 = vunpack.c.l.b16 %v823
        %v1210 = vunpack.c.l.b16 %v824
        %v1211 = vpack.c.b16 %v1208, %v1207
        %v1212 = vpack.c.b16 %v1210, %v1209
        %v1216 = vsel %vm564, %v1187, 0
        %v1219 = vsel %vm564, %v1188, 0
        %v1222 = vsel %vm564, %v1189, 0
        %v1225 = vsel %vm564, %v1190, 0
        %v1228 = vsel %vm564, %v1191, 0
        %v1231 = vsel %vm564, %v1192, 0
        %v1234 = vsel %vm564, %v1193, 0
        %v1237 = vsel %vm564, %v1194, 0
        %v1240 = vsel %vm564, %v1195, 0
        %v1243 = vsel %vm564, %v1196, 0
        %v1246 = vsel %vm564, %v1197, 0
        %v1249 = vsel %vm564, %v1198, 0
        %v1252 = vsel %vm564, %v1199, 0
        %v1255 = vsel %vm564, %v1200, 0
        %v1258 = vsel %vm564, %v1201, 0
        %v1261 = vsel %vm564, %v1202, 0
        %1263 = vmatpush.bf16.msra.mxu0 0
        %1264 = vmatpush.bf16.msra.mxu0 0
        %1265 = vmatpush.bf16.msra.mxu0 0
        %1266 = vmatpush.bf16.msra.mxu0 0
        %1267 = vmatpush.bf16.msra.mxu0 0
        %1268 = vmatpush.bf16.msra.mxu0 0
        %1269 = vmatpush.bf16.msra.mxu0 %v1212
        %1270 = vmatpush.bf16.msra.mxu0 %v1211
        %1271 = vmatmul.bf16.gmra.mxu0 %v1216
        %v1272 = vpop.f32.mrf.mxu0
        %v1273 = vadd.f32 %v1044, %v1272
        %v1274 = vpop.f32.mrf.mxu0
        %v1275 = vadd.f32 %v1046, %v1274
        %1276 = vmatmul.bf16.gmra.mxu0 %v1219
        %v1277 = vpop.f32.mrf.mxu0
        %v1278 = vadd.f32 %v1049, %v1277
        %v1279 = vpop.f32.mrf.mxu0
        %v1280 = vadd.f32 %v1051, %v1279
        %1281 = vmatmul.bf16.gmra.mxu0 %v1222
        %v1282 = vpop.f32.mrf.mxu0
        %v1283 = vadd.f32 %v1054, %v1282
        %v1284 = vpop.f32.mrf.mxu0
        %v1285 = vadd.f32 %v1056, %v1284
        %1286 = vmatmul.bf16.gmra.mxu0 %v1225
        %v1287 = vpop.f32.mrf.mxu0
        %v1288 = vadd.f32 %v1059, %v1287
        %v1289 = vpop.f32.mrf.mxu0
        %v1290 = vadd.f32 %v1061, %v1289
        %1291 = vmatmul.bf16.gmra.mxu0 %v1228
        %v1292 = vpop.f32.mrf.mxu0
        %v1293 = vadd.f32 %v1064, %v1292
        %v1294 = vpop.f32.mrf.mxu0
        %v1295 = vadd.f32 %v1066, %v1294
        %1296 = vmatmul.bf16.gmra.mxu0 %v1231
        %v1297 = vpop.f32.mrf.mxu0
        %v1298 = vadd.f32 %v1069, %v1297
        %v1299 = vpop.f32.mrf.mxu0
        %v1300 = vadd.f32 %v1071, %v1299
        %1301 = vmatmul.bf16.gmra.mxu0 %v1234
        %v1302 = vpop.f32.mrf.mxu0
        %v1303 = vadd.f32 %v1074, %v1302
        %v1304 = vpop.f32.mrf.mxu0
        %v1305 = vadd.f32 %v1076, %v1304
        %1306 = vmatmul.bf16.gmra.mxu0 %v1237
        %v1307 = vpop.f32.mrf.mxu0
        %v1308 = vadd.f32 %v1079, %v1307
        %v1309 = vpop.f32.mrf.mxu0
        %v1310 = vadd.f32 %v1081, %v1309
        %1311 = vmatmul.bf16.gmra.mxu0 %v1240
        %v1312 = vpop.f32.mrf.mxu0
        %v1313 = vadd.f32 %v1084, %v1312
        %v1314 = vpop.f32.mrf.mxu0
        %v1315 = vadd.f32 %v1086, %v1314
        %1316 = vmatmul.bf16.gmra.mxu0 %v1243
        %v1317 = vpop.f32.mrf.mxu0
        %v1318 = vadd.f32 %v1089, %v1317
        %v1319 = vpop.f32.mrf.mxu0
        %v1320 = vadd.f32 %v1091, %v1319
        %1321 = vmatmul.bf16.gmra.mxu0 %v1246
        %v1322 = vpop.f32.mrf.mxu0
        %v1323 = vadd.f32 %v1094, %v1322
        %v1324 = vpop.f32.mrf.mxu0
        %v1325 = vadd.f32 %v1096, %v1324
        %1326 = vmatmul.bf16.gmra.mxu0 %v1249
        %v1327 = vpop.f32.mrf.mxu0
        %v1328 = vadd.f32 %v1099, %v1327
        %v1329 = vpop.f32.mrf.mxu0
        %v1330 = vadd.f32 %v1101, %v1329
        %1331 = vmatmul.bf16.gmra.mxu0 %v1252
        %v1332 = vpop.f32.mrf.mxu0
        %v1333 = vadd.f32 %v1104, %v1332
        %v1334 = vpop.f32.mrf.mxu0
        %v1335 = vadd.f32 %v1106, %v1334
        %1336 = vmatmul.bf16.gmra.mxu0 %v1255
        %v1337 = vpop.f32.mrf.mxu0
        %v1338 = vadd.f32 %v1109, %v1337
        %v1339 = vpop.f32.mrf.mxu0
        %v1340 = vadd.f32 %v1111, %v1339
        %1341 = vmatmul.bf16.gmra.mxu0 %v1258
        %v1342 = vpop.f32.mrf.mxu0
        %v1343 = vadd.f32 %v1114, %v1342
        %v1344 = vpop.f32.mrf.mxu0
        %v1345 = vadd.f32 %v1116, %v1344
        %1346 = vmatmul.bf16.gmra.mxu0 %v1261
        %v1347 = vpop.f32.mrf.mxu0
        %v1348 = vadd.f32 %v1119, %v1347
        %v1349 = vpop.f32.mrf.mxu0
        %v1350 = vadd.f32 %v1121, %v1349
        %1351 = vdwg.mxu0
        %v1352 = vld [vmem:[#allocation2 + $0x2] sm:$0xff]
        %v1353 = vld [vmem:[#allocation2 + $0xa] sm:$0xff]
        %v1354 = vld [vmem:[#allocation2 + $0x1a] sm:$0xff]
        %v1355 = vld [vmem:[#allocation2 + $0x22] sm:$0xff]
        %v1356 = vld [vmem:[#allocation2 + $0x32] sm:$0xff]
        %v1357 = vld [vmem:[#allocation2 + $0x3a] sm:$0xff]
        %v1358 = vld [vmem:[#allocation2 + $0x4a] sm:$0xff]
        %v1359 = vld [vmem:[#allocation2 + $0x52] sm:$0xff]
        %v1360 = vld [vmem:[#allocation2 + $0x62] sm:$0xff]
        %v1361 = vld [vmem:[#allocation2 + $0x6a] sm:$0xff]
        %v1362 = vld [vmem:[#allocation2 + $0x7a] sm:$0xff]
        %v1363 = vld [vmem:[#allocation2 + $0x82] sm:$0xff]
        %v1364 = vld [vmem:[#allocation2 + $0x92] sm:$0xff]
        %v1365 = vld [vmem:[#allocation2 + $0x9a] sm:$0xff]
        %v1366 = vld [vmem:[#allocation2 + $0xaa] sm:$0xff]
        %v1367 = vld [vmem:[#allocation2 + $0xb2] sm:$0xff]
        %v1368 = vld [vmem:[#allocation2 + $0xc2] sm:$0xff]
        %v1369 = vld [vmem:[#allocation2 + $0xca] sm:$0xff]
        %v1370 = vld [vmem:[#allocation2 + $0xda] sm:$0xff]
        %v1371 = vld [vmem:[#allocation2 + $0xe2] sm:$0xff]
        %v1372 = vld [vmem:[#allocation2 + $0xf2] sm:$0xff]
        %v1373 = vld [vmem:[#allocation2 + $0xfa] sm:$0xff]
        %v1374 = vld [vmem:[#allocation2 + $0x10a] sm:$0xff]
        %v1375 = vld [vmem:[#allocation2 + $0x112] sm:$0xff]
        %v1376 = vld [vmem:[#allocation2 + $0x122] sm:$0xff]
        %v1377 = vld [vmem:[#allocation2 + $0x12a] sm:$0xff]
        %v1378 = vld [vmem:[#allocation2 + $0x13a] sm:$0xff]
        %v1379 = vld [vmem:[#allocation2 + $0x142] sm:$0xff]
        %v1380 = vld [vmem:[#allocation2 + $0x152] sm:$0xff]
        %v1381 = vld [vmem:[#allocation2 + $0x15a] sm:$0xff]
        %v1382 = vld [vmem:[#allocation2 + $0x16a] sm:$0xff]
        %v1383 = vld [vmem:[#allocation2 + $0x172] sm:$0xff]
        %v1384 = vpack.c.bf16 %v1352, %v1352
        %v1385 = vpack.c.bf16 %v1353, %v1353
        %v1386 = vpack.c.bf16 %v1354, %v1354
        %v1387 = vpack.c.bf16 %v1355, %v1355
        %v1388 = vpack.c.bf16 %v1356, %v1356
        %v1389 = vpack.c.bf16 %v1357, %v1357
        %v1390 = vpack.c.bf16 %v1358, %v1358
        %v1391 = vpack.c.bf16 %v1359, %v1359
        %v1392 = vpack.c.bf16 %v1360, %v1360
        %v1393 = vpack.c.bf16 %v1361, %v1361
        %v1394 = vpack.c.bf16 %v1362, %v1362
        %v1395 = vpack.c.bf16 %v1363, %v1363
        %v1396 = vpack.c.bf16 %v1364, %v1364
        %v1397 = vpack.c.bf16 %v1365, %v1365
        %v1398 = vpack.c.bf16 %v1366, %v1366
        %v1399 = vpack.c.bf16 %v1367, %v1367
        %v1400 = vpack.c.bf16 %v1368, %v1368
        %v1401 = vpack.c.bf16 %v1369, %v1369
        %v1402 = vpack.c.bf16 %v1370, %v1370
        %v1403 = vpack.c.bf16 %v1371, %v1371
        %v1404 = vpack.c.bf16 %v1372, %v1372
        %v1405 = vpack.c.bf16 %v1373, %v1373
        %v1406 = vpack.c.bf16 %v1374, %v1374
        %v1407 = vpack.c.bf16 %v1375, %v1375
        %v1408 = vpack.c.bf16 %v1376, %v1376
        %v1409 = vpack.c.bf16 %v1377, %v1377
        %v1410 = vpack.c.bf16 %v1378, %v1378
        %v1411 = vpack.c.bf16 %v1379, %v1379
        %v1412 = vpack.c.bf16 %v1380, %v1380
        %v1413 = vpack.c.bf16 %v1381, %v1381
        %v1414 = vpack.c.bf16 %v1382, %v1382
        %v1415 = vpack.c.bf16 %v1383, %v1383
        %s1416 = scalar_lea.vmem [#allocation9], 32
        %v1417 = vld [vmem:[%s1416] sm:$0xf]
        %v1418 = vld [vmem:[%s1416 + $0x4] sm:$0xf]
        %v1419 = vld [vmem:[%s1416 + $0x8] sm:$0xf]
        %v1420 = vld [vmem:[%s1416 + $0xc] sm:$0xf]
        %v1453 = vunpack.c.l.b16 %v1384
        %v1454 = vunpack.c.l.b16 %v1385
        %v1455 = vunpack.c.l.b16 %v1386
        %v1456 = vunpack.c.l.b16 %v1387
        %v1457 = vunpack.c.l.b16 %v1388
        %v1458 = vunpack.c.l.b16 %v1389
        %v1459 = vunpack.c.l.b16 %v1390
        %v1460 = vunpack.c.l.b16 %v1391
        %v1461 = vunpack.c.l.b16 %v1392
        %v1462 = vunpack.c.l.b16 %v1393
        %v1463 = vunpack.c.l.b16 %v1394
        %v1464 = vunpack.c.l.b16 %v1395
        %v1465 = vunpack.c.l.b16 %v1396
        %v1466 = vunpack.c.l.b16 %v1397
        %v1467 = vunpack.c.l.b16 %v1398
        %v1468 = vunpack.c.l.b16 %v1399
        %v1469 = vunpack.c.l.b16 %v1400
        %v1470 = vunpack.c.l.b16 %v1401
        %v1471 = vunpack.c.l.b16 %v1402
        %v1472 = vunpack.c.l.b16 %v1403
        %v1473 = vunpack.c.l.b16 %v1404
        %v1474 = vunpack.c.l.b16 %v1405
        %v1475 = vunpack.c.l.b16 %v1406
        %v1476 = vunpack.c.l.b16 %v1407
        %v1477 = vunpack.c.l.b16 %v1408
        %v1478 = vunpack.c.l.b16 %v1409
        %v1479 = vunpack.c.l.b16 %v1410
        %v1480 = vunpack.c.l.b16 %v1411
        %v1481 = vunpack.c.l.b16 %v1412
        %v1482 = vunpack.c.l.b16 %v1413
        %v1483 = vunpack.c.l.b16 %v1414
        %v1484 = vunpack.c.l.b16 %v1415
        %v1485 = vpack.c.b16 %v1454, %v1453
        %v1486 = vpack.c.b16 %v1456, %v1455
        %v1487 = vpack.c.b16 %v1458, %v1457
        %v1488 = vpack.c.b16 %v1460, %v1459
        %v1489 = vpack.c.b16 %v1462, %v1461
        %v1490 = vpack.c.b16 %v1464, %v1463
        %v1491 = vpack.c.b16 %v1466, %v1465
        %v1492 = vpack.c.b16 %v1468, %v1467
        %v1493 = vpack.c.b16 %v1470, %v1469
        %v1494 = vpack.c.b16 %v1472, %v1471
        %v1495 = vpack.c.b16 %v1474, %v1473
        %v1496 = vpack.c.b16 %v1476, %v1475
        %v1497 = vpack.c.b16 %v1478, %v1477
        %v1498 = vpack.c.b16 %v1480, %v1479
        %v1499 = vpack.c.b16 %v1482, %v1481
        %v1500 = vpack.c.b16 %v1484, %v1483
        %v1505 = vunpack.c.l.b16 %v1417
        %v1506 = vunpack.c.l.b16 %v1418
        %v1507 = vunpack.c.l.b16 %v1419
        %v1508 = vunpack.c.l.b16 %v1420
        %v1509 = vpack.c.b16 %v1506, %v1505
        %v1510 = vpack.c.b16 %v1508, %v1507
        %v1514 = vsel %vm564, %v1485, 0
        %v1517 = vsel %vm564, %v1486, 0
        %v1520 = vsel %vm564, %v1487, 0
        %v1523 = vsel %vm564, %v1488, 0
        %v1526 = vsel %vm564, %v1489, 0
        %v1529 = vsel %vm564, %v1490, 0
        %v1532 = vsel %vm564, %v1491, 0
        %v1535 = vsel %vm564, %v1492, 0
        %v1538 = vsel %vm564, %v1493, 0
        %v1541 = vsel %vm564, %v1494, 0
        %v1544 = vsel %vm564, %v1495, 0
        %v1547 = vsel %vm564, %v1496, 0
        %v1550 = vsel %vm564, %v1497, 0
        %v1553 = vsel %vm564, %v1498, 0
        %v1556 = vsel %vm564, %v1499, 0
        %v1559 = vsel %vm564, %v1500, 0
        %1561 = vmatpush.bf16.msra.mxu0 0
        %1562 = vmatpush.bf16.msra.mxu0 0
        %1563 = vmatpush.bf16.msra.mxu0 0
        %1564 = vmatpush.bf16.msra.mxu0 0
        %1565 = vmatpush.bf16.msra.mxu0 0
        %1566 = vmatpush.bf16.msra.mxu0 0
        %1567 = vmatpush.bf16.msra.mxu0 %v1510
        %1568 = vmatpush.bf16.msra.mxu0 %v1509
        %1569 = vmatmul.bf16.gmra.mxu0 %v1514
        %v1570 = vpop.f32.mrf.mxu0
        %v1571 = vadd.f32 0.0, %v1570
        %v1572 = vpop.f32.mrf.mxu0
        %v1573 = vadd.f32 0.0, %v1572
        %1574 = vmatmul.bf16.gmra.mxu0 %v1517
        %v1575 = vpop.f32.mrf.mxu0
        %v1576 = vadd.f32 0.0, %v1575
        %v1577 = vpop.f32.mrf.mxu0
        %v1578 = vadd.f32 0.0, %v1577
        %1579 = vmatmul.bf16.gmra.mxu0 %v1520
        %v1580 = vpop.f32.mrf.mxu0
        %v1581 = vadd.f32 0.0, %v1580
        %v1582 = vpop.f32.mrf.mxu0
        %v1583 = vadd.f32 0.0, %v1582
        %1584 = vmatmul.bf16.gmra.mxu0 %v1523
        %v1585 = vpop.f32.mrf.mxu0
        %v1586 = vadd.f32 0.0, %v1585
        %v1587 = vpop.f32.mrf.mxu0
        %v1588 = vadd.f32 0.0, %v1587
        %1589 = vmatmul.bf16.gmra.mxu0 %v1526
        %v1590 = vpop.f32.mrf.mxu0
        %v1591 = vadd.f32 0.0, %v1590
        %v1592 = vpop.f32.mrf.mxu0
        %v1593 = vadd.f32 0.0, %v1592
        %1594 = vmatmul.bf16.gmra.mxu0 %v1529
        %v1595 = vpop.f32.mrf.mxu0
        %v1596 = vadd.f32 0.0, %v1595
        %v1597 = vpop.f32.mrf.mxu0
        %v1598 = vadd.f32 0.0, %v1597
        %1599 = vmatmul.bf16.gmra.mxu0 %v1532
        %v1600 = vpop.f32.mrf.mxu0
        %v1601 = vadd.f32 0.0, %v1600
        %v1602 = vpop.f32.mrf.mxu0
        %v1603 = vadd.f32 0.0, %v1602
        %1604 = vmatmul.bf16.gmra.mxu0 %v1535
        %v1605 = vpop.f32.mrf.mxu0
        %v1606 = vadd.f32 0.0, %v1605
        %v1607 = vpop.f32.mrf.mxu0
        %v1608 = vadd.f32 0.0, %v1607
        %1609 = vmatmul.bf16.gmra.mxu0 %v1538
        %v1610 = vpop.f32.mrf.mxu0
        %v1611 = vadd.f32 0.0, %v1610
        %v1612 = vpop.f32.mrf.mxu0
        %v1613 = vadd.f32 0.0, %v1612
        %1614 = vmatmul.bf16.gmra.mxu0 %v1541
        %v1615 = vpop.f32.mrf.mxu0
        %v1616 = vadd.f32 0.0, %v1615
        %v1617 = vpop.f32.mrf.mxu0
        %v1618 = vadd.f32 0.0, %v1617
        %1619 = vmatmul.bf16.gmra.mxu0 %v1544
        %v1620 = vpop.f32.mrf.mxu0
        %v1621 = vadd.f32 0.0, %v1620
        %v1622 = vpop.f32.mrf.mxu0
        %v1623 = vadd.f32 0.0, %v1622
        %1624 = vmatmul.bf16.gmra.mxu0 %v1547
        %v1625 = vpop.f32.mrf.mxu0
        %v1626 = vadd.f32 0.0, %v1625
        %v1627 = vpop.f32.mrf.mxu0
        %v1628 = vadd.f32 0.0, %v1627
        %1629 = vmatmul.bf16.gmra.mxu0 %v1550
        %v1630 = vpop.f32.mrf.mxu0
        %v1631 = vadd.f32 0.0, %v1630
        %v1632 = vpop.f32.mrf.mxu0
        %v1633 = vadd.f32 0.0, %v1632
        %1634 = vmatmul.bf16.gmra.mxu0 %v1553
        %v1635 = vpop.f32.mrf.mxu0
        %v1636 = vadd.f32 0.0, %v1635
        %v1637 = vpop.f32.mrf.mxu0
        %v1638 = vadd.f32 0.0, %v1637
        %1639 = vmatmul.bf16.gmra.mxu0 %v1556
        %v1640 = vpop.f32.mrf.mxu0
        %v1641 = vadd.f32 0.0, %v1640
        %v1642 = vpop.f32.mrf.mxu0
        %v1643 = vadd.f32 0.0, %v1642
        %1644 = vmatmul.bf16.gmra.mxu0 %v1559
        %v1645 = vpop.f32.mrf.mxu0
        %v1646 = vadd.f32 0.0, %v1645
        %v1647 = vpop.f32.mrf.mxu0
        %v1648 = vadd.f32 0.0, %v1647
        %1649 = vdwg.mxu0
        %v1650 = vadd.f32 %v1273, %v1571
        %v1651 = vadd.f32 %v1275, %v1573
        %v1652 = vadd.f32 %v1278, %v1576
        %v1653 = vadd.f32 %v1280, %v1578
        %v1654 = vadd.f32 %v1283, %v1581
        %v1655 = vadd.f32 %v1285, %v1583
        %v1656 = vadd.f32 %v1288, %v1586
        %v1657 = vadd.f32 %v1290, %v1588
        %v1658 = vadd.f32 %v1293, %v1591
        %v1659 = vadd.f32 %v1295, %v1593
        %v1660 = vadd.f32 %v1298, %v1596
        %v1661 = vadd.f32 %v1300, %v1598
        %v1662 = vadd.f32 %v1303, %v1601
        %v1663 = vadd.f32 %v1305, %v1603
        %v1664 = vadd.f32 %v1308, %v1606
        %v1665 = vadd.f32 %v1310, %v1608
        %v1666 = vadd.f32 %v1313, %v1611
        %v1667 = vadd.f32 %v1315, %v1613
        %v1668 = vadd.f32 %v1318, %v1616
        %v1669 = vadd.f32 %v1320, %v1618
        %v1670 = vadd.f32 %v1323, %v1621
        %v1671 = vadd.f32 %v1325, %v1623
        %v1672 = vadd.f32 %v1328, %v1626
        %v1673 = vadd.f32 %v1330, %v1628
        %v1674 = vadd.f32 %v1333, %v1631
        %v1675 = vadd.f32 %v1335, %v1633
        %v1676 = vadd.f32 %v1338, %v1636
        %v1677 = vadd.f32 %v1340, %v1638
        %v1678 = vadd.f32 %v1343, %v1641
        %v1679 = vadd.f32 %v1345, %v1643
        %v1680 = vadd.f32 %v1348, %v1646
        %v1681 = vadd.f32 %v1350, %v1648
        %v1682 = vld [vmem:[%s724] sm:$0xff]
        %v1683 = vld [vmem:[%s724 + $0x8] sm:$0xff]
        %v1684 = vld [vmem:[%s724 + $0x18] sm:$0xff]
        %v1685 = vld [vmem:[%s724 + $0x20] sm:$0xff]
        %v1686 = vld [vmem:[%s724 + $0x30] sm:$0xff]
        %v1687 = vld [vmem:[%s724 + $0x38] sm:$0xff]
        %v1688 = vld [vmem:[%s724 + $0x48] sm:$0xff]
        %v1689 = vld [vmem:[%s724 + $0x50] sm:$0xff]
        %v1690 = vld [vmem:[%s724 + $0x60] sm:$0xff]
        %v1691 = vld [vmem:[%s724 + $0x68] sm:$0xff]
        %v1692 = vld [vmem:[%s724 + $0x78] sm:$0xff]
        %v1693 = vld [vmem:[%s724 + $0x80] sm:$0xff]
        %v1694 = vld [vmem:[%s724 + $0x90] sm:$0xff]
        %v1695 = vld [vmem:[%s724 + $0x98] sm:$0xff]
        %v1696 = vld [vmem:[%s724 + $0xa8] sm:$0xff]
        %v1697 = vld [vmem:[%s724 + $0xb0] sm:$0xff]
        %v1698 = vld [vmem:[%s724 + $0xc0] sm:$0xff]
        %v1699 = vld [vmem:[%s724 + $0xc8] sm:$0xff]
        %v1700 = vld [vmem:[%s724 + $0xd8] sm:$0xff]
        %v1701 = vld [vmem:[%s724 + $0xe0] sm:$0xff]
        %v1702 = vld [vmem:[%s724 + $0xf0] sm:$0xff]
        %v1703 = vld [vmem:[%s724 + $0xf8] sm:$0xff]
        %v1704 = vld [vmem:[%s724 + $0x108] sm:$0xff]
        %v1705 = vld [vmem:[%s724 + $0x110] sm:$0xff]
        %v1706 = vld [vmem:[%s724 + $0x120] sm:$0xff]
        %v1707 = vld [vmem:[%s724 + $0x128] sm:$0xff]
        %v1708 = vld [vmem:[%s724 + $0x138] sm:$0xff]
        %v1709 = vld [vmem:[%s724 + $0x140] sm:$0xff]
        %v1710 = vld [vmem:[%s724 + $0x150] sm:$0xff]
        %v1711 = vld [vmem:[%s724 + $0x158] sm:$0xff]
        %v1712 = vld [vmem:[%s724 + $0x168] sm:$0xff]
        %v1713 = vld [vmem:[%s724 + $0x170] sm:$0xff]
        %v1714 = vpack.c.bf16 %v1682, %v1682
        %v1715 = vpack.c.bf16 %v1683, %v1683
        %v1716 = vpack.c.bf16 %v1684, %v1684
        %v1717 = vpack.c.bf16 %v1685, %v1685
        %v1718 = vpack.c.bf16 %v1686, %v1686
        %v1719 = vpack.c.bf16 %v1687, %v1687
        %v1720 = vpack.c.bf16 %v1688, %v1688
        %v1721 = vpack.c.bf16 %v1689, %v1689
        %v1722 = vpack.c.bf16 %v1690, %v1690
        %v1723 = vpack.c.bf16 %v1691, %v1691
        %v1724 = vpack.c.bf16 %v1692, %v1692
        %v1725 = vpack.c.bf16 %v1693, %v1693
        %v1726 = vpack.c.bf16 %v1694, %v1694
        %v1727 = vpack.c.bf16 %v1695, %v1695
        %v1728 = vpack.c.bf16 %v1696, %v1696
        %v1729 = vpack.c.bf16 %v1697, %v1697
        %v1730 = vpack.c.bf16 %v1698, %v1698
        %v1731 = vpack.c.bf16 %v1699, %v1699
        %v1732 = vpack.c.bf16 %v1700, %v1700
        %v1733 = vpack.c.bf16 %v1701, %v1701
        %v1734 = vpack.c.bf16 %v1702, %v1702
        %v1735 = vpack.c.bf16 %v1703, %v1703
        %v1736 = vpack.c.bf16 %v1704, %v1704
        %v1737 = vpack.c.bf16 %v1705, %v1705
        %v1738 = vpack.c.bf16 %v1706, %v1706
        %v1739 = vpack.c.bf16 %v1707, %v1707
        %v1740 = vpack.c.bf16 %v1708, %v1708
        %v1741 = vpack.c.bf16 %v1709, %v1709
        %v1742 = vpack.c.bf16 %v1710, %v1710
        %v1743 = vpack.c.bf16 %v1711, %v1711
        %v1744 = vpack.c.bf16 %v1712, %v1712
        %v1745 = vpack.c.bf16 %v1713, %v1713
        %s1746 = scalar_lea.vmem [#allocation9], 48
        %v1747 = vld [vmem:[%s1746] sm:$0xf]
        %v1748 = vld [vmem:[%s1746 + $0x4] sm:$0xf]
        %v1749 = vld [vmem:[%s1746 + $0x8] sm:$0xf]
        %v1750 = vld [vmem:[%s1746 + $0xc] sm:$0xf]
        %v1783 = vunpack.c.l.b16 %v1714
        %v1784 = vunpack.c.l.b16 %v1715
        %v1785 = vunpack.c.l.b16 %v1716
        %v1786 = vunpack.c.l.b16 %v1717
        %v1787 = vunpack.c.l.b16 %v1718
        %v1788 = vunpack.c.l.b16 %v1719
        %v1789 = vunpack.c.l.b16 %v1720
        %v1790 = vunpack.c.l.b16 %v1721
        %v1791 = vunpack.c.l.b16 %v1722
        %v1792 = vunpack.c.l.b16 %v1723
        %v1793 = vunpack.c.l.b16 %v1724
        %v1794 = vunpack.c.l.b16 %v1725
        %v1795 = vunpack.c.l.b16 %v1726
        %v1796 = vunpack.c.l.b16 %v1727
        %v1797 = vunpack.c.l.b16 %v1728
        %v1798 = vunpack.c.l.b16 %v1729
        %v1799 = vunpack.c.l.b16 %v1730
        %v1800 = vunpack.c.l.b16 %v1731
        %v1801 = vunpack.c.l.b16 %v1732
        %v1802 = vunpack.c.l.b16 %v1733
        %v1803 = vunpack.c.l.b16 %v1734
        %v1804 = vunpack.c.l.b16 %v1735
        %v1805 = vunpack.c.l.b16 %v1736
        %v1806 = vunpack.c.l.b16 %v1737
        %v1807 = vunpack.c.l.b16 %v1738
        %v1808 = vunpack.c.l.b16 %v1739
        %v1809 = vunpack.c.l.b16 %v1740
        %v1810 = vunpack.c.l.b16 %v1741
        %v1811 = vunpack.c.l.b16 %v1742
        %v1812 = vunpack.c.l.b16 %v1743
        %v1813 = vunpack.c.l.b16 %v1744
        %v1814 = vunpack.c.l.b16 %v1745
        %v1815 = vpack.c.b16 %v1784, %v1783
        %v1816 = vpack.c.b16 %v1786, %v1785
        %v1817 = vpack.c.b16 %v1788, %v1787
        %v1818 = vpack.c.b16 %v1790, %v1789
        %v1819 = vpack.c.b16 %v1792, %v1791
        %v1820 = vpack.c.b16 %v1794, %v1793
        %v1821 = vpack.c.b16 %v1796, %v1795
        %v1822 = vpack.c.b16 %v1798, %v1797
        %v1823 = vpack.c.b16 %v1800, %v1799
        %v1824 = vpack.c.b16 %v1802, %v1801
        %v1825 = vpack.c.b16 %v1804, %v1803
        %v1826 = vpack.c.b16 %v1806, %v1805
        %v1827 = vpack.c.b16 %v1808, %v1807
        %v1828 = vpack.c.b16 %v1810, %v1809
        %v1829 = vpack.c.b16 %v1812, %v1811
        %v1830 = vpack.c.b16 %v1814, %v1813
        %v1835 = vunpack.c.l.b16 %v1747
        %v1836 = vunpack.c.l.b16 %v1748
        %v1837 = vunpack.c.l.b16 %v1749
        %v1838 = vunpack.c.l.b16 %v1750
        %v1839 = vpack.c.b16 %v1836, %v1835
        %v1840 = vpack.c.b16 %v1838, %v1837
        %v1844 = vsel %vm564, %v1815, 0
        %v1847 = vsel %vm564, %v1816, 0
        %v1850 = vsel %vm564, %v1817, 0
        %v1853 = vsel %vm564, %v1818, 0
        %v1856 = vsel %vm564, %v1819, 0
        %v1859 = vsel %vm564, %v1820, 0
        %v1862 = vsel %vm564, %v1821, 0
        %v1865 = vsel %vm564, %v1822, 0
        %v1868 = vsel %vm564, %v1823, 0
        %v1871 = vsel %vm564, %v1824, 0
        %v1874 = vsel %vm564, %v1825, 0
        %v1877 = vsel %vm564, %v1826, 0
        %v1880 = vsel %vm564, %v1827, 0
        %v1883 = vsel %vm564, %v1828, 0
        %v1886 = vsel %vm564, %v1829, 0
        %v1889 = vsel %vm564, %v1830, 0
        %1891 = vmatpush.bf16.msra.mxu0 0
        %1892 = vmatpush.bf16.msra.mxu0 0
        %1893 = vmatpush.bf16.msra.mxu0 0
        %1894 = vmatpush.bf16.msra.mxu0 0
        %1895 = vmatpush.bf16.msra.mxu0 0
        %1896 = vmatpush.bf16.msra.mxu0 0
        %1897 = vmatpush.bf16.msra.mxu0 %v1840
        %1898 = vmatpush.bf16.msra.mxu0 %v1839
        %1899 = vmatmul.bf16.gmra.mxu0 %v1844
        %v1900 = vpop.f32.mrf.mxu0
        %v1901 = vadd.f32 0.0, %v1900
        %v1902 = vpop.f32.mrf.mxu0
        %v1903 = vadd.f32 0.0, %v1902
        %1904 = vmatmul.bf16.gmra.mxu0 %v1847
        %v1905 = vpop.f32.mrf.mxu0
        %v1906 = vadd.f32 0.0, %v1905
        %v1907 = vpop.f32.mrf.mxu0
        %v1908 = vadd.f32 0.0, %v1907
        %1909 = vmatmul.bf16.gmra.mxu0 %v1850
        %v1910 = vpop.f32.mrf.mxu0
        %v1911 = vadd.f32 0.0, %v1910
        %v1912 = vpop.f32.mrf.mxu0
        %v1913 = vadd.f32 0.0, %v1912
        %1914 = vmatmul.bf16.gmra.mxu0 %v1853
        %v1915 = vpop.f32.mrf.mxu0
        %v1916 = vadd.f32 0.0, %v1915
        %v1917 = vpop.f32.mrf.mxu0
        %v1918 = vadd.f32 0.0, %v1917
        %1919 = vmatmul.bf16.gmra.mxu0 %v1856
        %v1920 = vpop.f32.mrf.mxu0
        %v1921 = vadd.f32 0.0, %v1920
        %v1922 = vpop.f32.mrf.mxu0
        %v1923 = vadd.f32 0.0, %v1922
        %1924 = vmatmul.bf16.gmra.mxu0 %v1859
        %v1925 = vpop.f32.mrf.mxu0
        %v1926 = vadd.f32 0.0, %v1925
        %v1927 = vpop.f32.mrf.mxu0
        %v1928 = vadd.f32 0.0, %v1927
        %1929 = vmatmul.bf16.gmra.mxu0 %v1862
        %v1930 = vpop.f32.mrf.mxu0
        %v1931 = vadd.f32 0.0, %v1930
        %v1932 = vpop.f32.mrf.mxu0
        %v1933 = vadd.f32 0.0, %v1932
        %1934 = vmatmul.bf16.gmra.mxu0 %v1865
        %v1935 = vpop.f32.mrf.mxu0
        %v1936 = vadd.f32 0.0, %v1935
        %v1937 = vpop.f32.mrf.mxu0
        %v1938 = vadd.f32 0.0, %v1937
        %1939 = vmatmul.bf16.gmra.mxu0 %v1868
        %v1940 = vpop.f32.mrf.mxu0
        %v1941 = vadd.f32 0.0, %v1940
        %v1942 = vpop.f32.mrf.mxu0
        %v1943 = vadd.f32 0.0, %v1942
        %1944 = vmatmul.bf16.gmra.mxu0 %v1871
        %v1945 = vpop.f32.mrf.mxu0
        %v1946 = vadd.f32 0.0, %v1945
        %v1947 = vpop.f32.mrf.mxu0
        %v1948 = vadd.f32 0.0, %v1947
        %1949 = vmatmul.bf16.gmra.mxu0 %v1874
        %v1950 = vpop.f32.mrf.mxu0
        %v1951 = vadd.f32 0.0, %v1950
        %v1952 = vpop.f32.mrf.mxu0
        %v1953 = vadd.f32 0.0, %v1952
        %1954 = vmatmul.bf16.gmra.mxu0 %v1877
        %v1955 = vpop.f32.mrf.mxu0
        %v1956 = vadd.f32 0.0, %v1955
        %v1957 = vpop.f32.mrf.mxu0
        %v1958 = vadd.f32 0.0, %v1957
        %1959 = vmatmul.bf16.gmra.mxu0 %v1880
        %v1960 = vpop.f32.mrf.mxu0
        %v1961 = vadd.f32 0.0, %v1960
        %v1962 = vpop.f32.mrf.mxu0
        %v1963 = vadd.f32 0.0, %v1962
        %1964 = vmatmul.bf16.gmra.mxu0 %v1883
        %v1965 = vpop.f32.mrf.mxu0
        %v1966 = vadd.f32 0.0, %v1965
        %v1967 = vpop.f32.mrf.mxu0
        %v1968 = vadd.f32 0.0, %v1967
        %1969 = vmatmul.bf16.gmra.mxu0 %v1886
        %v1970 = vpop.f32.mrf.mxu0
        %v1971 = vadd.f32 0.0, %v1970
        %v1972 = vpop.f32.mrf.mxu0
        %v1973 = vadd.f32 0.0, %v1972
        %1974 = vmatmul.bf16.gmra.mxu0 %v1889
        %v1975 = vpop.f32.mrf.mxu0
        %v1976 = vadd.f32 0.0, %v1975
        %v1977 = vpop.f32.mrf.mxu0
        %v1978 = vadd.f32 0.0, %v1977
        %1979 = vdwg.mxu0
        %v1980 = vadd.f32 %v1650, %v1901
        %v1981 = vadd.f32 %v1651, %v1903
        %v1982 = vadd.f32 %v1652, %v1906
        %v1983 = vadd.f32 %v1653, %v1908
        %v1984 = vadd.f32 %v1654, %v1911
        %v1985 = vadd.f32 %v1655, %v1913
        %v1986 = vadd.f32 %v1656, %v1916
        %v1987 = vadd.f32 %v1657, %v1918
        %v1988 = vadd.f32 %v1658, %v1921
        %v1989 = vadd.f32 %v1659, %v1923
        %v1990 = vadd.f32 %v1660, %v1926
        %v1991 = vadd.f32 %v1661, %v1928
        %v1992 = vadd.f32 %v1662, %v1931
        %v1993 = vadd.f32 %v1663, %v1933
        %v1994 = vadd.f32 %v1664, %v1936
        %v1995 = vadd.f32 %v1665, %v1938
        %v1996 = vadd.f32 %v1666, %v1941
        %v1997 = vadd.f32 %v1667, %v1943
        %v1998 = vadd.f32 %v1668, %v1946
        %v1999 = vadd.f32 %v1669, %v1948
        %v2000 = vadd.f32 %v1670, %v1951
        %v2001 = vadd.f32 %v1671, %v1953
        %v2002 = vadd.f32 %v1672, %v1956
        %v2003 = vadd.f32 %v1673, %v1958
        %v2004 = vadd.f32 %v1674, %v1961
        %v2005 = vadd.f32 %v1675, %v1963
        %v2006 = vadd.f32 %v1676, %v1966
        %v2007 = vadd.f32 %v1677, %v1968
        %v2008 = vadd.f32 %v1678, %v1971
        %v2009 = vadd.f32 %v1679, %v1973
        %v2010 = vadd.f32 %v1680, %v1976
        %v2011 = vadd.f32 %v1681, %v1978
        %v2012 = vld [vmem:[%s724 + $0x1] sm:$0xff]
        %v2013 = vld [vmem:[%s724 + $0x9] sm:$0xff]
        %v2014 = vld [vmem:[%s724 + $0x19] sm:$0xff]
        %v2015 = vld [vmem:[%s724 + $0x21] sm:$0xff]
        %v2016 = vld [vmem:[%s724 + $0x31] sm:$0xff]
        %v2017 = vld [vmem:[%s724 + $0x39] sm:$0xff]
        %v2018 = vld [vmem:[%s724 + $0x49] sm:$0xff]
        %v2019 = vld [vmem:[%s724 + $0x51] sm:$0xff]
        %v2020 = vld [vmem:[%s724 + $0x61] sm:$0xff]
        %v2021 = vld [vmem:[%s724 + $0x69] sm:$0xff]
        %v2022 = vld [vmem:[%s724 + $0x79] sm:$0xff]
        %v2023 = vld [vmem:[%s724 + $0x81] sm:$0xff]
        %v2024 = vld [vmem:[%s724 + $0x91] sm:$0xff]
        %v2025 = vld [vmem:[%s724 + $0x99] sm:$0xff]
        %v2026 = vld [vmem:[%s724 + $0xa9] sm:$0xff]
        %v2027 = vld [vmem:[%s724 + $0xb1] sm:$0xff]
        %v2028 = vld [vmem:[%s724 + $0xc1] sm:$0xff]
        %v2029 = vld [vmem:[%s724 + $0xc9] sm:$0xff]
        %v2030 = vld [vmem:[%s724 + $0xd9] sm:$0xff]
        %v2031 = vld [vmem:[%s724 + $0xe1] sm:$0xff]
        %v2032 = vld [vmem:[%s724 + $0xf1] sm:$0xff]
        %v2033 = vld [vmem:[%s724 + $0xf9] sm:$0xff]
        %v2034 = vld [vmem:[%s724 + $0x109] sm:$0xff]
        %v2035 = vld [vmem:[%s724 + $0x111] sm:$0xff]
        %v2036 = vld [vmem:[%s724 + $0x121] sm:$0xff]
        %v2037 = vld [vmem:[%s724 + $0x129] sm:$0xff]
        %v2038 = vld [vmem:[%s724 + $0x139] sm:$0xff]
        %v2039 = vld [vmem:[%s724 + $0x141] sm:$0xff]
        %v2040 = vld [vmem:[%s724 + $0x151] sm:$0xff]
        %v2041 = vld [vmem:[%s724 + $0x159] sm:$0xff]
        %v2042 = vld [vmem:[%s724 + $0x169] sm:$0xff]
        %v2043 = vld [vmem:[%s724 + $0x171] sm:$0xff]
        %v2044 = vpack.c.bf16 %v2012, %v2012
        %v2045 = vpack.c.bf16 %v2013, %v2013
        %v2046 = vpack.c.bf16 %v2014, %v2014
        %v2047 = vpack.c.bf16 %v2015, %v2015
        %v2048 = vpack.c.bf16 %v2016, %v2016
        %v2049 = vpack.c.bf16 %v2017, %v2017
        %v2050 = vpack.c.bf16 %v2018, %v2018
        %v2051 = vpack.c.bf16 %v2019, %v2019
        %v2052 = vpack.c.bf16 %v2020, %v2020
        %v2053 = vpack.c.bf16 %v2021, %v2021
        %v2054 = vpack.c.bf16 %v2022, %v2022
        %v2055 = vpack.c.bf16 %v2023, %v2023
        %v2056 = vpack.c.bf16 %v2024, %v2024
        %v2057 = vpack.c.bf16 %v2025, %v2025
        %v2058 = vpack.c.bf16 %v2026, %v2026
        %v2059 = vpack.c.bf16 %v2027, %v2027
        %v2060 = vpack.c.bf16 %v2028, %v2028
        %v2061 = vpack.c.bf16 %v2029, %v2029
        %v2062 = vpack.c.bf16 %v2030, %v2030
        %v2063 = vpack.c.bf16 %v2031, %v2031
        %v2064 = vpack.c.bf16 %v2032, %v2032
        %v2065 = vpack.c.bf16 %v2033, %v2033
        %v2066 = vpack.c.bf16 %v2034, %v2034
        %v2067 = vpack.c.bf16 %v2035, %v2035
        %v2068 = vpack.c.bf16 %v2036, %v2036
        %v2069 = vpack.c.bf16 %v2037, %v2037
        %v2070 = vpack.c.bf16 %v2038, %v2038
        %v2071 = vpack.c.bf16 %v2039, %v2039
        %v2072 = vpack.c.bf16 %v2040, %v2040
        %v2073 = vpack.c.bf16 %v2041, %v2041
        %v2074 = vpack.c.bf16 %v2042, %v2042
        %v2075 = vpack.c.bf16 %v2043, %v2043
        %s2076 = scalar_lea.vmem [#allocation9], 64
        %v2077 = vld [vmem:[%s2076] sm:$0xf]
        %v2078 = vld [vmem:[%s2076 + $0x4] sm:$0xf]
        %v2079 = vld [vmem:[%s2076 + $0x8] sm:$0xf]
        %v2080 = vld [vmem:[%s2076 + $0xc] sm:$0xf]
        %v2113 = vunpack.c.l.b16 %v2044
        %v2114 = vunpack.c.l.b16 %v2045
        %v2115 = vunpack.c.l.b16 %v2046
        %v2116 = vunpack.c.l.b16 %v2047
        %v2117 = vunpack.c.l.b16 %v2048
        %v2118 = vunpack.c.l.b16 %v2049
        %v2119 = vunpack.c.l.b16 %v2050
        %v2120 = vunpack.c.l.b16 %v2051
        %v2121 = vunpack.c.l.b16 %v2052
        %v2122 = vunpack.c.l.b16 %v2053
        %v2123 = vunpack.c.l.b16 %v2054
        %v2124 = vunpack.c.l.b16 %v2055
        %v2125 = vunpack.c.l.b16 %v2056
        %v2126 = vunpack.c.l.b16 %v2057
        %v2127 = vunpack.c.l.b16 %v2058
        %v2128 = vunpack.c.l.b16 %v2059
        %v2129 = vunpack.c.l.b16 %v2060
        %v2130 = vunpack.c.l.b16 %v2061
        %v2131 = vunpack.c.l.b16 %v2062
        %v2132 = vunpack.c.l.b16 %v2063
        %v2133 = vunpack.c.l.b16 %v2064
        %v2134 = vunpack.c.l.b16 %v2065
        %v2135 = vunpack.c.l.b16 %v2066
        %v2136 = vunpack.c.l.b16 %v2067
        %v2137 = vunpack.c.l.b16 %v2068
        %v2138 = vunpack.c.l.b16 %v2069
        %v2139 = vunpack.c.l.b16 %v2070
        %v2140 = vunpack.c.l.b16 %v2071
        %v2141 = vunpack.c.l.b16 %v2072
        %v2142 = vunpack.c.l.b16 %v2073
        %v2143 = vunpack.c.l.b16 %v2074
        %v2144 = vunpack.c.l.b16 %v2075
        %v2145 = vpack.c.b16 %v2114, %v2113
        %v2146 = vpack.c.b16 %v2116, %v2115
        %v2147 = vpack.c.b16 %v2118, %v2117
        %v2148 = vpack.c.b16 %v2120, %v2119
        %v2149 = vpack.c.b16 %v2122, %v2121
        %v2150 = vpack.c.b16 %v2124, %v2123
        %v2151 = vpack.c.b16 %v2126, %v2125
        %v2152 = vpack.c.b16 %v2128, %v2127
        %v2153 = vpack.c.b16 %v2130, %v2129
        %v2154 = vpack.c.b16 %v2132, %v2131
        %v2155 = vpack.c.b16 %v2134, %v2133
        %v2156 = vpack.c.b16 %v2136, %v2135
        %v2157 = vpack.c.b16 %v2138, %v2137
        %v2158 = vpack.c.b16 %v2140, %v2139
        %v2159 = vpack.c.b16 %v2142, %v2141
        %v2160 = vpack.c.b16 %v2144, %v2143
        %v2165 = vunpack.c.l.b16 %v2077
        %v2166 = vunpack.c.l.b16 %v2078
        %v2167 = vunpack.c.l.b16 %v2079
        %v2168 = vunpack.c.l.b16 %v2080
        %v2169 = vpack.c.b16 %v2166, %v2165
        %v2170 = vpack.c.b16 %v2168, %v2167
        %v2174 = vsel %vm564, %v2145, 0
        %v2177 = vsel %vm564, %v2146, 0
        %v2180 = vsel %vm564, %v2147, 0
        %v2183 = vsel %vm564, %v2148, 0
        %v2186 = vsel %vm564, %v2149, 0
        %v2189 = vsel %vm564, %v2150, 0
        %v2192 = vsel %vm564, %v2151, 0
        %v2195 = vsel %vm564, %v2152, 0
        %v2198 = vsel %vm564, %v2153, 0
        %v2201 = vsel %vm564, %v2154, 0
        %v2204 = vsel %vm564, %v2155, 0
        %v2207 = vsel %vm564, %v2156, 0
        %v2210 = vsel %vm564, %v2157, 0
        %v2213 = vsel %vm564, %v2158, 0
        %v2216 = vsel %vm564, %v2159, 0
        %v2219 = vsel %vm564, %v2160, 0
        %2221 = vmatpush.bf16.msra.mxu0 0
        %2222 = vmatpush.bf16.msra.mxu0 0
        %2223 = vmatpush.bf16.msra.mxu0 0
        %2224 = vmatpush.bf16.msra.mxu0 0
        %2225 = vmatpush.bf16.msra.mxu0 0
        %2226 = vmatpush.bf16.msra.mxu0 0
        %2227 = vmatpush.bf16.msra.mxu0 %v2170
        %2228 = vmatpush.bf16.msra.mxu0 %v2169
        %2229 = vmatmul.bf16.gmra.mxu0 %v2174
        %v2230 = vpop.f32.mrf.mxu0
        %v2231 = vadd.f32 0.0, %v2230
        %v2232 = vpop.f32.mrf.mxu0
        %v2233 = vadd.f32 0.0, %v2232
        %2234 = vmatmul.bf16.gmra.mxu0 %v2177
        %v2235 = vpop.f32.mrf.mxu0
        %v2236 = vadd.f32 0.0, %v2235
        %v2237 = vpop.f32.mrf.mxu0
        %v2238 = vadd.f32 0.0, %v2237
        %2239 = vmatmul.bf16.gmra.mxu0 %v2180
        %v2240 = vpop.f32.mrf.mxu0
        %v2241 = vadd.f32 0.0, %v2240
        %v2242 = vpop.f32.mrf.mxu0
        %v2243 = vadd.f32 0.0, %v2242
        %2244 = vmatmul.bf16.gmra.mxu0 %v2183
        %v2245 = vpop.f32.mrf.mxu0
        %v2246 = vadd.f32 0.0, %v2245
        %v2247 = vpop.f32.mrf.mxu0
        %v2248 = vadd.f32 0.0, %v2247
        %2249 = vmatmul.bf16.gmra.mxu0 %v2186
        %v2250 = vpop.f32.mrf.mxu0
        %v2251 = vadd.f32 0.0, %v2250
        %v2252 = vpop.f32.mrf.mxu0
        %v2253 = vadd.f32 0.0, %v2252
        %2254 = vmatmul.bf16.gmra.mxu0 %v2189
        %v2255 = vpop.f32.mrf.mxu0
        %v2256 = vadd.f32 0.0, %v2255
        %v2257 = vpop.f32.mrf.mxu0
        %v2258 = vadd.f32 0.0, %v2257
        %2259 = vmatmul.bf16.gmra.mxu0 %v2192
        %v2260 = vpop.f32.mrf.mxu0
        %v2261 = vadd.f32 0.0, %v2260
        %v2262 = vpop.f32.mrf.mxu0
        %v2263 = vadd.f32 0.0, %v2262
        %2264 = vmatmul.bf16.gmra.mxu0 %v2195
        %v2265 = vpop.f32.mrf.mxu0
        %v2266 = vadd.f32 0.0, %v2265
        %v2267 = vpop.f32.mrf.mxu0
        %v2268 = vadd.f32 0.0, %v2267
        %2269 = vmatmul.bf16.gmra.mxu0 %v2198
        %v2270 = vpop.f32.mrf.mxu0
        %v2271 = vadd.f32 0.0, %v2270
        %v2272 = vpop.f32.mrf.mxu0
        %v2273 = vadd.f32 0.0, %v2272
        %2274 = vmatmul.bf16.gmra.mxu0 %v2201
        %v2275 = vpop.f32.mrf.mxu0
        %v2276 = vadd.f32 0.0, %v2275
        %v2277 = vpop.f32.mrf.mxu0
        %v2278 = vadd.f32 0.0, %v2277
        %2279 = vmatmul.bf16.gmra.mxu0 %v2204
        %v2280 = vpop.f32.mrf.mxu0
        %v2281 = vadd.f32 0.0, %v2280
        %v2282 = vpop.f32.mrf.mxu0
        %v2283 = vadd.f32 0.0, %v2282
        %2284 = vmatmul.bf16.gmra.mxu0 %v2207
        %v2285 = vpop.f32.mrf.mxu0
        %v2286 = vadd.f32 0.0, %v2285
        %v2287 = vpop.f32.mrf.mxu0
        %v2288 = vadd.f32 0.0, %v2287
        %2289 = vmatmul.bf16.gmra.mxu0 %v2210
        %v2290 = vpop.f32.mrf.mxu0
        %v2291 = vadd.f32 0.0, %v2290
        %v2292 = vpop.f32.mrf.mxu0
        %v2293 = vadd.f32 0.0, %v2292
        %2294 = vmatmul.bf16.gmra.mxu0 %v2213
        %v2295 = vpop.f32.mrf.mxu0
        %v2296 = vadd.f32 0.0, %v2295
        %v2297 = vpop.f32.mrf.mxu0
        %v2298 = vadd.f32 0.0, %v2297
        %2299 = vmatmul.bf16.gmra.mxu0 %v2216
        %v2300 = vpop.f32.mrf.mxu0
        %v2301 = vadd.f32 0.0, %v2300
        %v2302 = vpop.f32.mrf.mxu0
        %v2303 = vadd.f32 0.0, %v2302
        %2304 = vmatmul.bf16.gmra.mxu0 %v2219
        %v2305 = vpop.f32.mrf.mxu0
        %v2306 = vadd.f32 0.0, %v2305
        %v2307 = vpop.f32.mrf.mxu0
        %v2308 = vadd.f32 0.0, %v2307
        %2309 = vdwg.mxu0
        %v2310 = vadd.f32 %v1980, %v2231
        %v2311 = vadd.f32 %v1981, %v2233
        %v2312 = vadd.f32 %v1982, %v2236
        %v2313 = vadd.f32 %v1983, %v2238
        %v2314 = vadd.f32 %v1984, %v2241
        %v2315 = vadd.f32 %v1985, %v2243
        %v2316 = vadd.f32 %v1986, %v2246
        %v2317 = vadd.f32 %v1987, %v2248
        %v2318 = vadd.f32 %v1988, %v2251
        %v2319 = vadd.f32 %v1989, %v2253
        %v2320 = vadd.f32 %v1990, %v2256
        %v2321 = vadd.f32 %v1991, %v2258
        %v2322 = vadd.f32 %v1992, %v2261
        %v2323 = vadd.f32 %v1993, %v2263
        %v2324 = vadd.f32 %v1994, %v2266
        %v2325 = vadd.f32 %v1995, %v2268
        %v2326 = vadd.f32 %v1996, %v2271
        %v2327 = vadd.f32 %v1997, %v2273
        %v2328 = vadd.f32 %v1998, %v2276
        %v2329 = vadd.f32 %v1999, %v2278
        %v2330 = vadd.f32 %v2000, %v2281
        %v2331 = vadd.f32 %v2001, %v2283
        %v2332 = vadd.f32 %v2002, %v2286
        %v2333 = vadd.f32 %v2003, %v2288
        %v2334 = vadd.f32 %v2004, %v2291
        %v2335 = vadd.f32 %v2005, %v2293
        %v2336 = vadd.f32 %v2006, %v2296
        %v2337 = vadd.f32 %v2007, %v2298
        %v2338 = vadd.f32 %v2008, %v2301
        %v2339 = vadd.f32 %v2009, %v2303
        %v2340 = vadd.f32 %v2010, %v2306
        %v2341 = vadd.f32 %v2011, %v2308
        %v2342 = vld [vmem:[%s724 + $0x2] sm:$0xff]
        %v2343 = vld [vmem:[%s724 + $0xa] sm:$0xff]
        %v2344 = vld [vmem:[%s724 + $0x1a] sm:$0xff]
        %v2345 = vld [vmem:[%s724 + $0x22] sm:$0xff]
        %v2346 = vld [vmem:[%s724 + $0x32] sm:$0xff]
        %v2347 = vld [vmem:[%s724 + $0x3a] sm:$0xff]
        %v2348 = vld [vmem:[%s724 + $0x4a] sm:$0xff]
        %v2349 = vld [vmem:[%s724 + $0x52] sm:$0xff]
        %v2350 = vld [vmem:[%s724 + $0x62] sm:$0xff]
        %v2351 = vld [vmem:[%s724 + $0x6a] sm:$0xff]
        %v2352 = vld [vmem:[%s724 + $0x7a] sm:$0xff]
        %v2353 = vld [vmem:[%s724 + $0x82] sm:$0xff]
        %v2354 = vld [vmem:[%s724 + $0x92] sm:$0xff]
        %v2355 = vld [vmem:[%s724 + $0x9a] sm:$0xff]
        %v2356 = vld [vmem:[%s724 + $0xaa] sm:$0xff]
        %v2357 = vld [vmem:[%s724 + $0xb2] sm:$0xff]
        %v2358 = vld [vmem:[%s724 + $0xc2] sm:$0xff]
        %v2359 = vld [vmem:[%s724 + $0xca] sm:$0xff]
        %v2360 = vld [vmem:[%s724 + $0xda] sm:$0xff]
        %v2361 = vld [vmem:[%s724 + $0xe2] sm:$0xff]
        %v2362 = vld [vmem:[%s724 + $0xf2] sm:$0xff]
        %v2363 = vld [vmem:[%s724 + $0xfa] sm:$0xff]
        %v2364 = vld [vmem:[%s724 + $0x10a] sm:$0xff]
        %v2365 = vld [vmem:[%s724 + $0x112] sm:$0xff]
        %v2366 = vld [vmem:[%s724 + $0x122] sm:$0xff]
        %v2367 = vld [vmem:[%s724 + $0x12a] sm:$0xff]
        %v2368 = vld [vmem:[%s724 + $0x13a] sm:$0xff]
        %v2369 = vld [vmem:[%s724 + $0x142] sm:$0xff]
        %v2370 = vld [vmem:[%s724 + $0x152] sm:$0xff]
        %v2371 = vld [vmem:[%s724 + $0x15a] sm:$0xff]
        %v2372 = vld [vmem:[%s724 + $0x16a] sm:$0xff]
        %v2373 = vld [vmem:[%s724 + $0x172] sm:$0xff]
        %v2374 = vpack.c.bf16 %v2342, %v2342
        %v2375 = vpack.c.bf16 %v2343, %v2343
        %v2376 = vpack.c.bf16 %v2344, %v2344
        %v2377 = vpack.c.bf16 %v2345, %v2345
        %v2378 = vpack.c.bf16 %v2346, %v2346
        %v2379 = vpack.c.bf16 %v2347, %v2347
        %v2380 = vpack.c.bf16 %v2348, %v2348
        %v2381 = vpack.c.bf16 %v2349, %v2349
        %v2382 = vpack.c.bf16 %v2350, %v2350
        %v2383 = vpack.c.bf16 %v2351, %v2351
        %v2384 = vpack.c.bf16 %v2352, %v2352
        %v2385 = vpack.c.bf16 %v2353, %v2353
        %v2386 = vpack.c.bf16 %v2354, %v2354
        %v2387 = vpack.c.bf16 %v2355, %v2355
        %v2388 = vpack.c.bf16 %v2356, %v2356
        %v2389 = vpack.c.bf16 %v2357, %v2357
        %v2390 = vpack.c.bf16 %v2358, %v2358
        %v2391 = vpack.c.bf16 %v2359, %v2359
        %v2392 = vpack.c.bf16 %v2360, %v2360
        %v2393 = vpack.c.bf16 %v2361, %v2361
        %v2394 = vpack.c.bf16 %v2362, %v2362
        %v2395 = vpack.c.bf16 %v2363, %v2363
        %v2396 = vpack.c.bf16 %v2364, %v2364
        %v2397 = vpack.c.bf16 %v2365, %v2365
        %v2398 = vpack.c.bf16 %v2366, %v2366
        %v2399 = vpack.c.bf16 %v2367, %v2367
        %v2400 = vpack.c.bf16 %v2368, %v2368
        %v2401 = vpack.c.bf16 %v2369, %v2369
        %v2402 = vpack.c.bf16 %v2370, %v2370
        %v2403 = vpack.c.bf16 %v2371, %v2371
        %v2404 = vpack.c.bf16 %v2372, %v2372
        %v2405 = vpack.c.bf16 %v2373, %v2373
        %s2406 = scalar_lea.vmem [#allocation9], 80
        %v2407 = vld [vmem:[%s2406] sm:$0xf]
        %v2408 = vld [vmem:[%s2406 + $0x4] sm:$0xf]
        %v2409 = vld [vmem:[%s2406 + $0x8] sm:$0xf]
        %v2410 = vld [vmem:[%s2406 + $0xc] sm:$0xf]
        %v2443 = vunpack.c.l.b16 %v2374
        %v2444 = vunpack.c.l.b16 %v2375
        %v2445 = vunpack.c.l.b16 %v2376
        %v2446 = vunpack.c.l.b16 %v2377
        %v2447 = vunpack.c.l.b16 %v2378
        %v2448 = vunpack.c.l.b16 %v2379
        %v2449 = vunpack.c.l.b16 %v2380
        %v2450 = vunpack.c.l.b16 %v2381
        %v2451 = vunpack.c.l.b16 %v2382
        %v2452 = vunpack.c.l.b16 %v2383
        %v2453 = vunpack.c.l.b16 %v2384
        %v2454 = vunpack.c.l.b16 %v2385
        %v2455 = vunpack.c.l.b16 %v2386
        %v2456 = vunpack.c.l.b16 %v2387
        %v2457 = vunpack.c.l.b16 %v2388
        %v2458 = vunpack.c.l.b16 %v2389
        %v2459 = vunpack.c.l.b16 %v2390
        %v2460 = vunpack.c.l.b16 %v2391
        %v2461 = vunpack.c.l.b16 %v2392
        %v2462 = vunpack.c.l.b16 %v2393
        %v2463 = vunpack.c.l.b16 %v2394
        %v2464 = vunpack.c.l.b16 %v2395
        %v2465 = vunpack.c.l.b16 %v2396
        %v2466 = vunpack.c.l.b16 %v2397
        %v2467 = vunpack.c.l.b16 %v2398
        %v2468 = vunpack.c.l.b16 %v2399
        %v2469 = vunpack.c.l.b16 %v2400
        %v2470 = vunpack.c.l.b16 %v2401
        %v2471 = vunpack.c.l.b16 %v2402
        %v2472 = vunpack.c.l.b16 %v2403
        %v2473 = vunpack.c.l.b16 %v2404
        %v2474 = vunpack.c.l.b16 %v2405
        %v2475 = vpack.c.b16 %v2444, %v2443
        %v2476 = vpack.c.b16 %v2446, %v2445
        %v2477 = vpack.c.b16 %v2448, %v2447
        %v2478 = vpack.c.b16 %v2450, %v2449
        %v2479 = vpack.c.b16 %v2452, %v2451
        %v2480 = vpack.c.b16 %v2454, %v2453
        %v2481 = vpack.c.b16 %v2456, %v2455
        %v2482 = vpack.c.b16 %v2458, %v2457
        %v2483 = vpack.c.b16 %v2460, %v2459
        %v2484 = vpack.c.b16 %v2462, %v2461
        %v2485 = vpack.c.b16 %v2464, %v2463
        %v2486 = vpack.c.b16 %v2466, %v2465
        %v2487 = vpack.c.b16 %v2468, %v2467
        %v2488 = vpack.c.b16 %v2470, %v2469
        %v2489 = vpack.c.b16 %v2472, %v2471
        %v2490 = vpack.c.b16 %v2474, %v2473
        %v2495 = vunpack.c.l.b16 %v2407
        %v2496 = vunpack.c.l.b16 %v2408
        %v2497 = vunpack.c.l.b16 %v2409
        %v2498 = vunpack.c.l.b16 %v2410
        %v2499 = vpack.c.b16 %v2496, %v2495
        %v2500 = vpack.c.b16 %v2498, %v2497
        %v2504 = vsel %vm564, %v2475, 0
        %v2507 = vsel %vm564, %v2476, 0
        %v2510 = vsel %vm564, %v2477, 0
        %v2513 = vsel %vm564, %v2478, 0
        %v2516 = vsel %vm564, %v2479, 0
        %v2519 = vsel %vm564, %v2480, 0
        %v2522 = vsel %vm564, %v2481, 0
        %v2525 = vsel %vm564, %v2482, 0
        %v2528 = vsel %vm564, %v2483, 0
        %v2531 = vsel %vm564, %v2484, 0
        %v2534 = vsel %vm564, %v2485, 0
        %v2537 = vsel %vm564, %v2486, 0
        %v2540 = vsel %vm564, %v2487, 0
        %v2543 = vsel %vm564, %v2488, 0
        %v2546 = vsel %vm564, %v2489, 0
        %v2549 = vsel %vm564, %v2490, 0
        %2551 = vmatpush.bf16.msra.mxu0 0
        %2552 = vmatpush.bf16.msra.mxu0 0
        %2553 = vmatpush.bf16.msra.mxu0 0
        %2554 = vmatpush.bf16.msra.mxu0 0
        %2555 = vmatpush.bf16.msra.mxu0 0
        %2556 = vmatpush.bf16.msra.mxu0 0
        %2557 = vmatpush.bf16.msra.mxu0 %v2500
        %2558 = vmatpush.bf16.msra.mxu0 %v2499
        %2559 = vmatmul.bf16.gmra.mxu0 %v2504
        %v2560 = vpop.f32.mrf.mxu0
        %v2561 = vadd.f32 0.0, %v2560
        %v2562 = vpop.f32.mrf.mxu0
        %v2563 = vadd.f32 0.0, %v2562
        %2564 = vmatmul.bf16.gmra.mxu0 %v2507
        %v2565 = vpop.f32.mrf.mxu0
        %v2566 = vadd.f32 0.0, %v2565
        %v2567 = vpop.f32.mrf.mxu0
        %v2568 = vadd.f32 0.0, %v2567
        %2569 = vmatmul.bf16.gmra.mxu0 %v2510
        %v2570 = vpop.f32.mrf.mxu0
        %v2571 = vadd.f32 0.0, %v2570
        %v2572 = vpop.f32.mrf.mxu0
        %v2573 = vadd.f32 0.0, %v2572
        %2574 = vmatmul.bf16.gmra.mxu0 %v2513
        %v2575 = vpop.f32.mrf.mxu0
        %v2576 = vadd.f32 0.0, %v2575
        %v2577 = vpop.f32.mrf.mxu0
        %v2578 = vadd.f32 0.0, %v2577
        %2579 = vmatmul.bf16.gmra.mxu0 %v2516
        %v2580 = vpop.f32.mrf.mxu0
        %v2581 = vadd.f32 0.0, %v2580
        %v2582 = vpop.f32.mrf.mxu0
        %v2583 = vadd.f32 0.0, %v2582
        %2584 = vmatmul.bf16.gmra.mxu0 %v2519
        %v2585 = vpop.f32.mrf.mxu0
        %v2586 = vadd.f32 0.0, %v2585
        %v2587 = vpop.f32.mrf.mxu0
        %v2588 = vadd.f32 0.0, %v2587
        %2589 = vmatmul.bf16.gmra.mxu0 %v2522
        %v2590 = vpop.f32.mrf.mxu0
        %v2591 = vadd.f32 0.0, %v2590
        %v2592 = vpop.f32.mrf.mxu0
        %v2593 = vadd.f32 0.0, %v2592
        %2594 = vmatmul.bf16.gmra.mxu0 %v2525
        %v2595 = vpop.f32.mrf.mxu0
        %v2596 = vadd.f32 0.0, %v2595
        %v2597 = vpop.f32.mrf.mxu0
        %v2598 = vadd.f32 0.0, %v2597
        %2599 = vmatmul.bf16.gmra.mxu0 %v2528
        %v2600 = vpop.f32.mrf.mxu0
        %v2601 = vadd.f32 0.0, %v2600
        %v2602 = vpop.f32.mrf.mxu0
        %v2603 = vadd.f32 0.0, %v2602
        %2604 = vmatmul.bf16.gmra.mxu0 %v2531
        %v2605 = vpop.f32.mrf.mxu0
        %v2606 = vadd.f32 0.0, %v2605
        %v2607 = vpop.f32.mrf.mxu0
        %v2608 = vadd.f32 0.0, %v2607
        %2609 = vmatmul.bf16.gmra.mxu0 %v2534
        %v2610 = vpop.f32.mrf.mxu0
        %v2611 = vadd.f32 0.0, %v2610
        %v2612 = vpop.f32.mrf.mxu0
        %v2613 = vadd.f32 0.0, %v2612
        %2614 = vmatmul.bf16.gmra.mxu0 %v2537
        %v2615 = vpop.f32.mrf.mxu0
        %v2616 = vadd.f32 0.0, %v2615
        %v2617 = vpop.f32.mrf.mxu0
        %v2618 = vadd.f32 0.0, %v2617
        %2619 = vmatmul.bf16.gmra.mxu0 %v2540
        %v2620 = vpop.f32.mrf.mxu0
        %v2621 = vadd.f32 0.0, %v2620
        %v2622 = vpop.f32.mrf.mxu0
        %v2623 = vadd.f32 0.0, %v2622
        %2624 = vmatmul.bf16.gmra.mxu0 %v2543
        %v2625 = vpop.f32.mrf.mxu0
        %v2626 = vadd.f32 0.0, %v2625
        %v2627 = vpop.f32.mrf.mxu0
        %v2628 = vadd.f32 0.0, %v2627
        %2629 = vmatmul.bf16.gmra.mxu0 %v2546
        %v2630 = vpop.f32.mrf.mxu0
        %v2631 = vadd.f32 0.0, %v2630
        %v2632 = vpop.f32.mrf.mxu0
        %v2633 = vadd.f32 0.0, %v2632
        %2634 = vmatmul.bf16.gmra.mxu0 %v2549
        %v2635 = vpop.f32.mrf.mxu0
        %v2636 = vadd.f32 0.0, %v2635
        %v2637 = vpop.f32.mrf.mxu0
        %v2638 = vadd.f32 0.0, %v2637
        %2639 = vdwg.mxu0
        %v2640 = vadd.f32 %v2310, %v2561
        %v2641 = vadd.f32 %v2311, %v2563
        %v2642 = vadd.f32 %v2312, %v2566
        %v2643 = vadd.f32 %v2313, %v2568
        %v2644 = vadd.f32 %v2314, %v2571
        %v2645 = vadd.f32 %v2315, %v2573
        %v2646 = vadd.f32 %v2316, %v2576
        %v2647 = vadd.f32 %v2317, %v2578
        %v2648 = vadd.f32 %v2318, %v2581
        %v2649 = vadd.f32 %v2319, %v2583
        %v2650 = vadd.f32 %v2320, %v2586
        %v2651 = vadd.f32 %v2321, %v2588
        %v2652 = vadd.f32 %v2322, %v2591
        %v2653 = vadd.f32 %v2323, %v2593
        %v2654 = vadd.f32 %v2324, %v2596
        %v2655 = vadd.f32 %v2325, %v2598
        %v2656 = vadd.f32 %v2326, %v2601
        %v2657 = vadd.f32 %v2327, %v2603
        %v2658 = vadd.f32 %v2328, %v2606
        %v2659 = vadd.f32 %v2329, %v2608
        %v2660 = vadd.f32 %v2330, %v2611
        %v2661 = vadd.f32 %v2331, %v2613
        %v2662 = vadd.f32 %v2332, %v2616
        %v2663 = vadd.f32 %v2333, %v2618
        %v2664 = vadd.f32 %v2334, %v2621
        %v2665 = vadd.f32 %v2335, %v2623
        %v2666 = vadd.f32 %v2336, %v2626
        %v2667 = vadd.f32 %v2337, %v2628
        %v2668 = vadd.f32 %v2338, %v2631
        %v2669 = vadd.f32 %v2339, %v2633
        %v2670 = vadd.f32 %v2340, %v2636
        %v2671 = vadd.f32 %v2341, %v2638
        %s2672 = scalar_lea.vmem [#allocation2], 48
        %v2673 = vld [vmem:[%s2672] sm:$0xff]
        %v2674 = vld [vmem:[%s2672 + $0x8] sm:$0xff]
        %v2675 = vld [vmem:[%s2672 + $0x18] sm:$0xff]
        %v2676 = vld [vmem:[%s2672 + $0x20] sm:$0xff]
        %v2677 = vld [vmem:[%s2672 + $0x30] sm:$0xff]
        %v2678 = vld [vmem:[%s2672 + $0x38] sm:$0xff]
        %v2679 = vld [vmem:[%s2672 + $0x48] sm:$0xff]
        %v2680 = vld [vmem:[%s2672 + $0x50] sm:$0xff]
        %v2681 = vld [vmem:[%s2672 + $0x60] sm:$0xff]
        %v2682 = vld [vmem:[%s2672 + $0x68] sm:$0xff]
        %v2683 = vld [vmem:[%s2672 + $0x78] sm:$0xff]
        %v2684 = vld [vmem:[%s2672 + $0x80] sm:$0xff]
        %v2685 = vld [vmem:[%s2672 + $0x90] sm:$0xff]
        %v2686 = vld [vmem:[%s2672 + $0x98] sm:$0xff]
        %v2687 = vld [vmem:[%s2672 + $0xa8] sm:$0xff]
        %v2688 = vld [vmem:[%s2672 + $0xb0] sm:$0xff]
        %v2689 = vld [vmem:[%s2672 + $0xc0] sm:$0xff]
        %v2690 = vld [vmem:[%s2672 + $0xc8] sm:$0xff]
        %v2691 = vld [vmem:[%s2672 + $0xd8] sm:$0xff]
        %v2692 = vld [vmem:[%s2672 + $0xe0] sm:$0xff]
        %v2693 = vld [vmem:[%s2672 + $0xf0] sm:$0xff]
        %v2694 = vld [vmem:[%s2672 + $0xf8] sm:$0xff]
        %v2695 = vld [vmem:[%s2672 + $0x108] sm:$0xff]
        %v2696 = vld [vmem:[%s2672 + $0x110] sm:$0xff]
        %v2697 = vld [vmem:[%s2672 + $0x120] sm:$0xff]
        %v2698 = vld [vmem:[%s2672 + $0x128] sm:$0xff]
        %v2699 = vld [vmem:[%s2672 + $0x138] sm:$0xff]
        %v2700 = vld [vmem:[%s2672 + $0x140] sm:$0xff]
        %v2701 = vld [vmem:[%s2672 + $0x150] sm:$0xff]
        %v2702 = vld [vmem:[%s2672 + $0x158] sm:$0xff]
        %v2703 = vld [vmem:[%s2672 + $0x168] sm:$0xff]
        %v2704 = vld [vmem:[%s2672 + $0x170] sm:$0xff]
        %v2705 = vpack.c.bf16 %v2673, %v2673
        %v2706 = vpack.c.bf16 %v2674, %v2674
        %v2707 = vpack.c.bf16 %v2675, %v2675
        %v2708 = vpack.c.bf16 %v2676, %v2676
        %v2709 = vpack.c.bf16 %v2677, %v2677
        %v2710 = vpack.c.bf16 %v2678, %v2678
        %v2711 = vpack.c.bf16 %v2679, %v2679
        %v2712 = vpack.c.bf16 %v2680, %v2680
        %v2713 = vpack.c.bf16 %v2681, %v2681
        %v2714 = vpack.c.bf16 %v2682, %v2682
        %v2715 = vpack.c.bf16 %v2683, %v2683
        %v2716 = vpack.c.bf16 %v2684, %v2684
        %v2717 = vpack.c.bf16 %v2685, %v2685
        %v2718 = vpack.c.bf16 %v2686, %v2686
        %v2719 = vpack.c.bf16 %v2687, %v2687
        %v2720 = vpack.c.bf16 %v2688, %v2688
        %v2721 = vpack.c.bf16 %v2689, %v2689
        %v2722 = vpack.c.bf16 %v2690, %v2690
        %v2723 = vpack.c.bf16 %v2691, %v2691
        %v2724 = vpack.c.bf16 %v2692, %v2692
        %v2725 = vpack.c.bf16 %v2693, %v2693
        %v2726 = vpack.c.bf16 %v2694, %v2694
        %v2727 = vpack.c.bf16 %v2695, %v2695
        %v2728 = vpack.c.bf16 %v2696, %v2696
        %v2729 = vpack.c.bf16 %v2697, %v2697
        %v2730 = vpack.c.bf16 %v2698, %v2698
        %v2731 = vpack.c.bf16 %v2699, %v2699
        %v2732 = vpack.c.bf16 %v2700, %v2700
        %v2733 = vpack.c.bf16 %v2701, %v2701
        %v2734 = vpack.c.bf16 %v2702, %v2702
        %v2735 = vpack.c.bf16 %v2703, %v2703
        %v2736 = vpack.c.bf16 %v2704, %v2704
        %s2737 = scalar_lea.vmem [#allocation9], 96
        %v2738 = vld [vmem:[%s2737] sm:$0xf]
        %v2739 = vld [vmem:[%s2737 + $0x4] sm:$0xf]
        %v2740 = vld [vmem:[%s2737 + $0x8] sm:$0xf]
        %v2741 = vld [vmem:[%s2737 + $0xc] sm:$0xf]
        %v2774 = vunpack.c.l.b16 %v2705
        %v2775 = vunpack.c.l.b16 %v2706
        %v2776 = vunpack.c.l.b16 %v2707
        %v2777 = vunpack.c.l.b16 %v2708
        %v2778 = vunpack.c.l.b16 %v2709
        %v2779 = vunpack.c.l.b16 %v2710
        %v2780 = vunpack.c.l.b16 %v2711
        %v2781 = vunpack.c.l.b16 %v2712
        %v2782 = vunpack.c.l.b16 %v2713
        %v2783 = vunpack.c.l.b16 %v2714
        %v2784 = vunpack.c.l.b16 %v2715
        %v2785 = vunpack.c.l.b16 %v2716
        %v2786 = vunpack.c.l.b16 %v2717
        %v2787 = vunpack.c.l.b16 %v2718
        %v2788 = vunpack.c.l.b16 %v2719
        %v2789 = vunpack.c.l.b16 %v2720
        %v2790 = vunpack.c.l.b16 %v2721
        %v2791 = vunpack.c.l.b16 %v2722
        %v2792 = vunpack.c.l.b16 %v2723
        %v2793 = vunpack.c.l.b16 %v2724
        %v2794 = vunpack.c.l.b16 %v2725
        %v2795 = vunpack.c.l.b16 %v2726
        %v2796 = vunpack.c.l.b16 %v2727
        %v2797 = vunpack.c.l.b16 %v2728
        %v2798 = vunpack.c.l.b16 %v2729
        %v2799 = vunpack.c.l.b16 %v2730
        %v2800 = vunpack.c.l.b16 %v2731
        %v2801 = vunpack.c.l.b16 %v2732
        %v2802 = vunpack.c.l.b16 %v2733
        %v2803 = vunpack.c.l.b16 %v2734
        %v2804 = vunpack.c.l.b16 %v2735
        %v2805 = vunpack.c.l.b16 %v2736
        %v2806 = vpack.c.b16 %v2775, %v2774
        %v2807 = vpack.c.b16 %v2777, %v2776
        %v2808 = vpack.c.b16 %v2779, %v2778
        %v2809 = vpack.c.b16 %v2781, %v2780
        %v2810 = vpack.c.b16 %v2783, %v2782
        %v2811 = vpack.c.b16 %v2785, %v2784
        %v2812 = vpack.c.b16 %v2787, %v2786
        %v2813 = vpack.c.b16 %v2789, %v2788
        %v2814 = vpack.c.b16 %v2791, %v2790
        %v2815 = vpack.c.b16 %v2793, %v2792
        %v2816 = vpack.c.b16 %v2795, %v2794
        %v2817 = vpack.c.b16 %v2797, %v2796
        %v2818 = vpack.c.b16 %v2799, %v2798
        %v2819 = vpack.c.b16 %v2801, %v2800
        %v2820 = vpack.c.b16 %v2803, %v2802
        %v2821 = vpack.c.b16 %v2805, %v2804
        %v2826 = vunpack.c.l.b16 %v2738
        %v2827 = vunpack.c.l.b16 %v2739
        %v2828 = vunpack.c.l.b16 %v2740
        %v2829 = vunpack.c.l.b16 %v2741
        %v2830 = vpack.c.b16 %v2827, %v2826
        %v2831 = vpack.c.b16 %v2829, %v2828
        %v2835 = vsel %vm564, %v2806, 0
        %v2838 = vsel %vm564, %v2807, 0
        %v2841 = vsel %vm564, %v2808, 0
        %v2844 = vsel %vm564, %v2809, 0
        %v2847 = vsel %vm564, %v2810, 0
        %v2850 = vsel %vm564, %v2811, 0
        %v2853 = vsel %vm564, %v2812, 0
        %v2856 = vsel %vm564, %v2813, 0
        %v2859 = vsel %vm564, %v2814, 0
        %v2862 = vsel %vm564, %v2815, 0
        %v2865 = vsel %vm564, %v2816, 0
        %v2868 = vsel %vm564, %v2817, 0
        %v2871 = vsel %vm564, %v2818, 0
        %v2874 = vsel %vm564, %v2819, 0
        %v2877 = vsel %vm564, %v2820, 0
        %v2880 = vsel %vm564, %v2821, 0
        %2882 = vmatpush.bf16.msra.mxu0 0
        %2883 = vmatpush.bf16.msra.mxu0 0
        %2884 = vmatpush.bf16.msra.mxu0 0
        %2885 = vmatpush.bf16.msra.mxu0 0
        %2886 = vmatpush.bf16.msra.mxu0 0
        %2887 = vmatpush.bf16.msra.mxu0 0
        %2888 = vmatpush.bf16.msra.mxu0 %v2831
        %2889 = vmatpush.bf16.msra.mxu0 %v2830
        %2890 = vmatmul.bf16.gmra.mxu0 %v2835
        %v2891 = vpop.f32.mrf.mxu0
        %v2892 = vadd.f32 0.0, %v2891
        %v2893 = vpop.f32.mrf.mxu0
        %v2894 = vadd.f32 0.0, %v2893
        %2895 = vmatmul.bf16.gmra.mxu0 %v2838
        %v2896 = vpop.f32.mrf.mxu0
        %v2897 = vadd.f32 0.0, %v2896
        %v2898 = vpop.f32.mrf.mxu0
        %v2899 = vadd.f32 0.0, %v2898
        %2900 = vmatmul.bf16.gmra.mxu0 %v2841
        %v2901 = vpop.f32.mrf.mxu0
        %v2902 = vadd.f32 0.0, %v2901
        %v2903 = vpop.f32.mrf.mxu0
        %v2904 = vadd.f32 0.0, %v2903
        %2905 = vmatmul.bf16.gmra.mxu0 %v2844
        %v2906 = vpop.f32.mrf.mxu0
        %v2907 = vadd.f32 0.0, %v2906
        %v2908 = vpop.f32.mrf.mxu0
        %v2909 = vadd.f32 0.0, %v2908
        %2910 = vmatmul.bf16.gmra.mxu0 %v2847
        %v2911 = vpop.f32.mrf.mxu0
        %v2912 = vadd.f32 0.0, %v2911
        %v2913 = vpop.f32.mrf.mxu0
        %v2914 = vadd.f32 0.0, %v2913
        %2915 = vmatmul.bf16.gmra.mxu0 %v2850
        %v2916 = vpop.f32.mrf.mxu0
        %v2917 = vadd.f32 0.0, %v2916
        %v2918 = vpop.f32.mrf.mxu0
        %v2919 = vadd.f32 0.0, %v2918
        %2920 = vmatmul.bf16.gmra.mxu0 %v2853
        %v2921 = vpop.f32.mrf.mxu0
        %v2922 = vadd.f32 0.0, %v2921
        %v2923 = vpop.f32.mrf.mxu0
        %v2924 = vadd.f32 0.0, %v2923
        %2925 = vmatmul.bf16.gmra.mxu0 %v2856
        %v2926 = vpop.f32.mrf.mxu0
        %v2927 = vadd.f32 0.0, %v2926
        %v2928 = vpop.f32.mrf.mxu0
        %v2929 = vadd.f32 0.0, %v2928
        %2930 = vmatmul.bf16.gmra.mxu0 %v2859
        %v2931 = vpop.f32.mrf.mxu0
        %v2932 = vadd.f32 0.0, %v2931
        %v2933 = vpop.f32.mrf.mxu0
        %v2934 = vadd.f32 0.0, %v2933
        %2935 = vmatmul.bf16.gmra.mxu0 %v2862
        %v2936 = vpop.f32.mrf.mxu0
        %v2937 = vadd.f32 0.0, %v2936
        %v2938 = vpop.f32.mrf.mxu0
        %v2939 = vadd.f32 0.0, %v2938
        %2940 = vmatmul.bf16.gmra.mxu0 %v2865
        %v2941 = vpop.f32.mrf.mxu0
        %v2942 = vadd.f32 0.0, %v2941
        %v2943 = vpop.f32.mrf.mxu0
        %v2944 = vadd.f32 0.0, %v2943
        %2945 = vmatmul.bf16.gmra.mxu0 %v2868
        %v2946 = vpop.f32.mrf.mxu0
        %v2947 = vadd.f32 0.0, %v2946
        %v2948 = vpop.f32.mrf.mxu0
        %v2949 = vadd.f32 0.0, %v2948
        %2950 = vmatmul.bf16.gmra.mxu0 %v2871
        %v2951 = vpop.f32.mrf.mxu0
        %v2952 = vadd.f32 0.0, %v2951
        %v2953 = vpop.f32.mrf.mxu0
        %v2954 = vadd.f32 0.0, %v2953
        %2955 = vmatmul.bf16.gmra.mxu0 %v2874
        %v2956 = vpop.f32.mrf.mxu0
        %v2957 = vadd.f32 0.0, %v2956
        %v2958 = vpop.f32.mrf.mxu0
        %v2959 = vadd.f32 0.0, %v2958
        %2960 = vmatmul.bf16.gmra.mxu0 %v2877
        %v2961 = vpop.f32.mrf.mxu0
        %v2962 = vadd.f32 0.0, %v2961
        %v2963 = vpop.f32.mrf.mxu0
        %v2964 = vadd.f32 0.0, %v2963
        %2965 = vmatmul.bf16.gmra.mxu0 %v2880
        %v2966 = vpop.f32.mrf.mxu0
        %v2967 = vadd.f32 0.0, %v2966
        %v2968 = vpop.f32.mrf.mxu0
        %v2969 = vadd.f32 0.0, %v2968
        %2970 = vdwg.mxu0
        %v2971 = vadd.f32 %v2640, %v2892
        %v2972 = vadd.f32 %v2641, %v2894
        %v2973 = vadd.f32 %v2642, %v2897
        %v2974 = vadd.f32 %v2643, %v2899
        %v2975 = vadd.f32 %v2644, %v2902
        %v2976 = vadd.f32 %v2645, %v2904
        %v2977 = vadd.f32 %v2646, %v2907
        %v2978 = vadd.f32 %v2647, %v2909
        %v2979 = vadd.f32 %v2648, %v2912
        %v2980 = vadd.f32 %v2649, %v2914
        %v2981 = vadd.f32 %v2650, %v2917
        %v2982 = vadd.f32 %v2651, %v2919
        %v2983 = vadd.f32 %v2652, %v2922
        %v2984 = vadd.f32 %v2653, %v2924
        %v2985 = vadd.f32 %v2654, %v2927
        %v2986 = vadd.f32 %v2655, %v2929
        %v2987 = vadd.f32 %v2656, %v2932
        %v2988 = vadd.f32 %v2657, %v2934
        %v2989 = vadd.f32 %v2658, %v2937
        %v2990 = vadd.f32 %v2659, %v2939
        %v2991 = vadd.f32 %v2660, %v2942
        %v2992 = vadd.f32 %v2661, %v2944
        %v2993 = vadd.f32 %v2662, %v2947
        %v2994 = vadd.f32 %v2663, %v2949
        %v2995 = vadd.f32 %v2664, %v2952
        %v2996 = vadd.f32 %v2665, %v2954
        %v2997 = vadd.f32 %v2666, %v2957
        %v2998 = vadd.f32 %v2667, %v2959
        %v2999 = vadd.f32 %v2668, %v2962
        %v3000 = vadd.f32 %v2669, %v2964
        %v3001 = vadd.f32 %v2670, %v2967
        %v3002 = vadd.f32 %v2671, %v2969
        %v3003 = vld [vmem:[%s2672 + $0x1] sm:$0xff]
        %v3004 = vld [vmem:[%s2672 + $0x9] sm:$0xff]
        %v3005 = vld [vmem:[%s2672 + $0x19] sm:$0xff]
        %v3006 = vld [vmem:[%s2672 + $0x21] sm:$0xff]
        %v3007 = vld [vmem:[%s2672 + $0x31] sm:$0xff]
        %v3008 = vld [vmem:[%s2672 + $0x39] sm:$0xff]
        %v3009 = vld [vmem:[%s2672 + $0x49] sm:$0xff]
        %v3010 = vld [vmem:[%s2672 + $0x51] sm:$0xff]
        %v3011 = vld [vmem:[%s2672 + $0x61] sm:$0xff]
        %v3012 = vld [vmem:[%s2672 + $0x69] sm:$0xff]
        %v3013 = vld [vmem:[%s2672 + $0x79] sm:$0xff]
        %v3014 = vld [vmem:[%s2672 + $0x81] sm:$0xff]
        %v3015 = vld [vmem:[%s2672 + $0x91] sm:$0xff]
        %v3016 = vld [vmem:[%s2672 + $0x99] sm:$0xff]
        %v3017 = vld [vmem:[%s2672 + $0xa9] sm:$0xff]
        %v3018 = vld [vmem:[%s2672 + $0xb1] sm:$0xff]
        %v3019 = vld [vmem:[%s2672 + $0xc1] sm:$0xff]
        %v3020 = vld [vmem:[%s2672 + $0xc9] sm:$0xff]
        %v3021 = vld [vmem:[%s2672 + $0xd9] sm:$0xff]
        %v3022 = vld [vmem:[%s2672 + $0xe1] sm:$0xff]
        %v3023 = vld [vmem:[%s2672 + $0xf1] sm:$0xff]
        %v3024 = vld [vmem:[%s2672 + $0xf9] sm:$0xff]
        %v3025 = vld [vmem:[%s2672 + $0x109] sm:$0xff]
        %v3026 = vld [vmem:[%s2672 + $0x111] sm:$0xff]
        %v3027 = vld [vmem:[%s2672 + $0x121] sm:$0xff]
        %v3028 = vld [vmem:[%s2672 + $0x129] sm:$0xff]
        %v3029 = vld [vmem:[%s2672 + $0x139] sm:$0xff]
        %v3030 = vld [vmem:[%s2672 + $0x141] sm:$0xff]
        %v3031 = vld [vmem:[%s2672 + $0x151] sm:$0xff]
        %v3032 = vld [vmem:[%s2672 + $0x159] sm:$0xff]
        %v3033 = vld [vmem:[%s2672 + $0x169] sm:$0xff]
        %v3034 = vld [vmem:[%s2672 + $0x171] sm:$0xff]
        %v3035 = vpack.c.bf16 %v3003, %v3003
        %v3036 = vpack.c.bf16 %v3004, %v3004
        %v3037 = vpack.c.bf16 %v3005, %v3005
        %v3038 = vpack.c.bf16 %v3006, %v3006
        %v3039 = vpack.c.bf16 %v3007, %v3007
        %v3040 = vpack.c.bf16 %v3008, %v3008
        %v3041 = vpack.c.bf16 %v3009, %v3009
        %v3042 = vpack.c.bf16 %v3010, %v3010
        %v3043 = vpack.c.bf16 %v3011, %v3011
        %v3044 = vpack.c.bf16 %v3012, %v3012
        %v3045 = vpack.c.bf16 %v3013, %v3013
        %v3046 = vpack.c.bf16 %v3014, %v3014
        %v3047 = vpack.c.bf16 %v3015, %v3015
        %v3048 = vpack.c.bf16 %v3016, %v3016
        %v3049 = vpack.c.bf16 %v3017, %v3017
        %v3050 = vpack.c.bf16 %v3018, %v3018
        %v3051 = vpack.c.bf16 %v3019, %v3019
        %v3052 = vpack.c.bf16 %v3020, %v3020
        %v3053 = vpack.c.bf16 %v3021, %v3021
        %v3054 = vpack.c.bf16 %v3022, %v3022
        %v3055 = vpack.c.bf16 %v3023, %v3023
        %v3056 = vpack.c.bf16 %v3024, %v3024
        %v3057 = vpack.c.bf16 %v3025, %v3025
        %v3058 = vpack.c.bf16 %v3026, %v3026
        %v3059 = vpack.c.bf16 %v3027, %v3027
        %v3060 = vpack.c.bf16 %v3028, %v3028
        %v3061 = vpack.c.bf16 %v3029, %v3029
        %v3062 = vpack.c.bf16 %v3030, %v3030
        %v3063 = vpack.c.bf16 %v3031, %v3031
        %v3064 = vpack.c.bf16 %v3032, %v3032
        %v3065 = vpack.c.bf16 %v3033, %v3033
        %v3066 = vpack.c.bf16 %v3034, %v3034
        %s3067 = scalar_lea.vmem [#allocation9], 112
        %v3068 = vld [vmem:[%s3067] sm:$0xf]
        %v3069 = vld [vmem:[%s3067 + $0x4] sm:$0xf]
        %v3070 = vld [vmem:[%s3067 + $0x8] sm:$0xf]
        %v3071 = vld [vmem:[%s3067 + $0xc] sm:$0xf]
        %v3104 = vunpack.c.l.b16 %v3035
        %v3105 = vunpack.c.l.b16 %v3036
        %v3106 = vunpack.c.l.b16 %v3037
        %v3107 = vunpack.c.l.b16 %v3038
        %v3108 = vunpack.c.l.b16 %v3039
        %v3109 = vunpack.c.l.b16 %v3040
        %v3110 = vunpack.c.l.b16 %v3041
        %v3111 = vunpack.c.l.b16 %v3042
        %v3112 = vunpack.c.l.b16 %v3043
        %v3113 = vunpack.c.l.b16 %v3044
        %v3114 = vunpack.c.l.b16 %v3045
        %v3115 = vunpack.c.l.b16 %v3046
        %v3116 = vunpack.c.l.b16 %v3047
        %v3117 = vunpack.c.l.b16 %v3048
        %v3118 = vunpack.c.l.b16 %v3049
        %v3119 = vunpack.c.l.b16 %v3050
        %v3120 = vunpack.c.l.b16 %v3051
        %v3121 = vunpack.c.l.b16 %v3052
        %v3122 = vunpack.c.l.b16 %v3053
        %v3123 = vunpack.c.l.b16 %v3054
        %v3124 = vunpack.c.l.b16 %v3055
        %v3125 = vunpack.c.l.b16 %v3056
        %v3126 = vunpack.c.l.b16 %v3057
        %v3127 = vunpack.c.l.b16 %v3058
        %v3128 = vunpack.c.l.b16 %v3059
        %v3129 = vunpack.c.l.b16 %v3060
        %v3130 = vunpack.c.l.b16 %v3061
        %v3131 = vunpack.c.l.b16 %v3062
        %v3132 = vunpack.c.l.b16 %v3063
        %v3133 = vunpack.c.l.b16 %v3064
        %v3134 = vunpack.c.l.b16 %v3065
        %v3135 = vunpack.c.l.b16 %v3066
        %v3136 = vpack.c.b16 %v3105, %v3104
        %v3137 = vpack.c.b16 %v3107, %v3106
        %v3138 = vpack.c.b16 %v3109, %v3108
        %v3139 = vpack.c.b16 %v3111, %v3110
        %v3140 = vpack.c.b16 %v3113, %v3112
        %v3141 = vpack.c.b16 %v3115, %v3114
        %v3142 = vpack.c.b16 %v3117, %v3116
        %v3143 = vpack.c.b16 %v3119, %v3118
        %v3144 = vpack.c.b16 %v3121, %v3120
        %v3145 = vpack.c.b16 %v3123, %v3122
        %v3146 = vpack.c.b16 %v3125, %v3124
        %v3147 = vpack.c.b16 %v3127, %v3126
        %v3148 = vpack.c.b16 %v3129, %v3128
        %v3149 = vpack.c.b16 %v3131, %v3130
        %v3150 = vpack.c.b16 %v3133, %v3132
        %v3151 = vpack.c.b16 %v3135, %v3134
        %v3156 = vunpack.c.l.b16 %v3068
        %v3157 = vunpack.c.l.b16 %v3069
        %v3158 = vunpack.c.l.b16 %v3070
        %v3159 = vunpack.c.l.b16 %v3071
        %v3160 = vpack.c.b16 %v3157, %v3156
        %v3161 = vpack.c.b16 %v3159, %v3158
        %v3165 = vsel %vm564, %v3136, 0
        %v3168 = vsel %vm564, %v3137, 0
        %v3171 = vsel %vm564, %v3138, 0
        %v3174 = vsel %vm564, %v3139, 0
        %v3177 = vsel %vm564, %v3140, 0
        %v3180 = vsel %vm564, %v3141, 0
        %v3183 = vsel %vm564, %v3142, 0
        %v3186 = vsel %vm564, %v3143, 0
        %v3189 = vsel %vm564, %v3144, 0
        %v3192 = vsel %vm564, %v3145, 0
        %v3195 = vsel %vm564, %v3146, 0
        %v3198 = vsel %vm564, %v3147, 0
        %v3201 = vsel %vm564, %v3148, 0
        %v3204 = vsel %vm564, %v3149, 0
        %v3207 = vsel %vm564, %v3150, 0
        %v3210 = vsel %vm564, %v3151, 0
        %3212 = vmatpush.bf16.msra.mxu0 0
        %3213 = vmatpush.bf16.msra.mxu0 0
        %3214 = vmatpush.bf16.msra.mxu0 0
        %3215 = vmatpush.bf16.msra.mxu0 0
        %3216 = vmatpush.bf16.msra.mxu0 0
        %3217 = vmatpush.bf16.msra.mxu0 0
        %3218 = vmatpush.bf16.msra.mxu0 %v3161
        %3219 = vmatpush.bf16.msra.mxu0 %v3160
        %3220 = vmatmul.bf16.gmra.mxu0 %v3165
        %v3221 = vpop.f32.mrf.mxu0
        %v3222 = vadd.f32 0.0, %v3221
        %v3223 = vpop.f32.mrf.mxu0
        %v3224 = vadd.f32 0.0, %v3223
        %3225 = vmatmul.bf16.gmra.mxu0 %v3168
        %v3226 = vpop.f32.mrf.mxu0
        %v3227 = vadd.f32 0.0, %v3226
        %v3228 = vpop.f32.mrf.mxu0
        %v3229 = vadd.f32 0.0, %v3228
        %3230 = vmatmul.bf16.gmra.mxu0 %v3171
        %v3231 = vpop.f32.mrf.mxu0
        %v3232 = vadd.f32 0.0, %v3231
        %v3233 = vpop.f32.mrf.mxu0
        %v3234 = vadd.f32 0.0, %v3233
        %3235 = vmatmul.bf16.gmra.mxu0 %v3174
        %v3236 = vpop.f32.mrf.mxu0
        %v3237 = vadd.f32 0.0, %v3236
        %v3238 = vpop.f32.mrf.mxu0
        %v3239 = vadd.f32 0.0, %v3238
        %3240 = vmatmul.bf16.gmra.mxu0 %v3177
        %v3241 = vpop.f32.mrf.mxu0
        %v3242 = vadd.f32 0.0, %v3241
        %v3243 = vpop.f32.mrf.mxu0
        %v3244 = vadd.f32 0.0, %v3243
        %3245 = vmatmul.bf16.gmra.mxu0 %v3180
        %v3246 = vpop.f32.mrf.mxu0
        %v3247 = vadd.f32 0.0, %v3246
        %v3248 = vpop.f32.mrf.mxu0
        %v3249 = vadd.f32 0.0, %v3248
        %3250 = vmatmul.bf16.gmra.mxu0 %v3183
        %v3251 = vpop.f32.mrf.mxu0
        %v3252 = vadd.f32 0.0, %v3251
        %v3253 = vpop.f32.mrf.mxu0
        %v3254 = vadd.f32 0.0, %v3253
        %3255 = vmatmul.bf16.gmra.mxu0 %v3186
        %v3256 = vpop.f32.mrf.mxu0
        %v3257 = vadd.f32 0.0, %v3256
        %v3258 = vpop.f32.mrf.mxu0
        %v3259 = vadd.f32 0.0, %v3258
        %3260 = vmatmul.bf16.gmra.mxu0 %v3189
        %v3261 = vpop.f32.mrf.mxu0
        %v3262 = vadd.f32 0.0, %v3261
        %v3263 = vpop.f32.mrf.mxu0
        %v3264 = vadd.f32 0.0, %v3263
        %3265 = vmatmul.bf16.gmra.mxu0 %v3192
        %v3266 = vpop.f32.mrf.mxu0
        %v3267 = vadd.f32 0.0, %v3266
        %v3268 = vpop.f32.mrf.mxu0
        %v3269 = vadd.f32 0.0, %v3268
        %3270 = vmatmul.bf16.gmra.mxu0 %v3195
        %v3271 = vpop.f32.mrf.mxu0
        %v3272 = vadd.f32 0.0, %v3271
        %v3273 = vpop.f32.mrf.mxu0
        %v3274 = vadd.f32 0.0, %v3273
        %3275 = vmatmul.bf16.gmra.mxu0 %v3198
        %v3276 = vpop.f32.mrf.mxu0
        %v3277 = vadd.f32 0.0, %v3276
        %v3278 = vpop.f32.mrf.mxu0
        %v3279 = vadd.f32 0.0, %v3278
        %3280 = vmatmul.bf16.gmra.mxu0 %v3201
        %v3281 = vpop.f32.mrf.mxu0
        %v3282 = vadd.f32 0.0, %v3281
        %v3283 = vpop.f32.mrf.mxu0
        %v3284 = vadd.f32 0.0, %v3283
        %3285 = vmatmul.bf16.gmra.mxu0 %v3204
        %v3286 = vpop.f32.mrf.mxu0
        %v3287 = vadd.f32 0.0, %v3286
        %v3288 = vpop.f32.mrf.mxu0
        %v3289 = vadd.f32 0.0, %v3288
        %3290 = vmatmul.bf16.gmra.mxu0 %v3207
        %v3291 = vpop.f32.mrf.mxu0
        %v3292 = vadd.f32 0.0, %v3291
        %v3293 = vpop.f32.mrf.mxu0
        %v3294 = vadd.f32 0.0, %v3293
        %3295 = vmatmul.bf16.gmra.mxu0 %v3210
        %v3296 = vpop.f32.mrf.mxu0
        %v3297 = vadd.f32 0.0, %v3296
        %v3298 = vpop.f32.mrf.mxu0
        %v3299 = vadd.f32 0.0, %v3298
        %3300 = vdwg.mxu0
        %v3301 = vadd.f32 %v2971, %v3222
        %v3302 = vadd.f32 %v2972, %v3224
        %v3303 = vadd.f32 %v2973, %v3227
        %v3304 = vadd.f32 %v2974, %v3229
        %v3305 = vadd.f32 %v2975, %v3232
        %v3306 = vadd.f32 %v2976, %v3234
        %v3307 = vadd.f32 %v2977, %v3237
        %v3308 = vadd.f32 %v2978, %v3239
        %v3309 = vadd.f32 %v2979, %v3242
        %v3310 = vadd.f32 %v2980, %v3244
        %v3311 = vadd.f32 %v2981, %v3247
        %v3312 = vadd.f32 %v2982, %v3249
        %v3313 = vadd.f32 %v2983, %v3252
        %v3314 = vadd.f32 %v2984, %v3254
        %v3315 = vadd.f32 %v2985, %v3257
        %v3316 = vadd.f32 %v2986, %v3259
        %v3317 = vadd.f32 %v2987, %v3262
        %v3318 = vadd.f32 %v2988, %v3264
        %v3319 = vadd.f32 %v2989, %v3267
        %v3320 = vadd.f32 %v2990, %v3269
        %v3321 = vadd.f32 %v2991, %v3272
        %v3322 = vadd.f32 %v2992, %v3274
        %v3323 = vadd.f32 %v2993, %v3277
        %v3324 = vadd.f32 %v2994, %v3279
        %v3325 = vadd.f32 %v2995, %v3282
        %v3326 = vadd.f32 %v2996, %v3284
        %v3327 = vadd.f32 %v2997, %v3287
        %v3328 = vadd.f32 %v2998, %v3289
        %v3329 = vadd.f32 %v2999, %v3292
        %v3330 = vadd.f32 %v3000, %v3294
        %v3331 = vadd.f32 %v3001, %v3297
        %v3332 = vadd.f32 %v3002, %v3299
        %v3333 = vld [vmem:[%s2672 + $0x2] sm:$0xff]
        %v3334 = vld [vmem:[%s2672 + $0xa] sm:$0xff]
        %v3335 = vld [vmem:[%s2672 + $0x1a] sm:$0xff]
        %v3336 = vld [vmem:[%s2672 + $0x22] sm:$0xff]
        %v3337 = vld [vmem:[%s2672 + $0x32] sm:$0xff]
        %v3338 = vld [vmem:[%s2672 + $0x3a] sm:$0xff]
        %v3339 = vld [vmem:[%s2672 + $0x4a] sm:$0xff]
        %v3340 = vld [vmem:[%s2672 + $0x52] sm:$0xff]
        %v3341 = vld [vmem:[%s2672 + $0x62] sm:$0xff]
        %v3342 = vld [vmem:[%s2672 + $0x6a] sm:$0xff]
        %v3343 = vld [vmem:[%s2672 + $0x7a] sm:$0xff]
        %v3344 = vld [vmem:[%s2672 + $0x82] sm:$0xff]
        %v3345 = vld [vmem:[%s2672 + $0x92] sm:$0xff]
        %v3346 = vld [vmem:[%s2672 + $0x9a] sm:$0xff]
        %v3347 = vld [vmem:[%s2672 + $0xaa] sm:$0xff]
        %v3348 = vld [vmem:[%s2672 + $0xb2] sm:$0xff]
        %v3349 = vld [vmem:[%s2672 + $0xc2] sm:$0xff]
        %v3350 = vld [vmem:[%s2672 + $0xca] sm:$0xff]
        %v3351 = vld [vmem:[%s2672 + $0xda] sm:$0xff]
        %v3352 = vld [vmem:[%s2672 + $0xe2] sm:$0xff]
        %v3353 = vld [vmem:[%s2672 + $0xf2] sm:$0xff]
        %v3354 = vld [vmem:[%s2672 + $0xfa] sm:$0xff]
        %v3355 = vld [vmem:[%s2672 + $0x10a] sm:$0xff]
        %v3356 = vld [vmem:[%s2672 + $0x112] sm:$0xff]
        %v3357 = vld [vmem:[%s2672 + $0x122] sm:$0xff]
        %v3358 = vld [vmem:[%s2672 + $0x12a] sm:$0xff]
        %v3359 = vld [vmem:[%s2672 + $0x13a] sm:$0xff]
        %v3360 = vld [vmem:[%s2672 + $0x142] sm:$0xff]
        %v3361 = vld [vmem:[%s2672 + $0x152] sm:$0xff]
        %v3362 = vld [vmem:[%s2672 + $0x15a] sm:$0xff]
        %v3363 = vld [vmem:[%s2672 + $0x16a] sm:$0xff]
        %v3364 = vld [vmem:[%s2672 + $0x172] sm:$0xff]
        %v3365 = vpack.c.bf16 %v3333, %v3333
        %v3366 = vpack.c.bf16 %v3334, %v3334
        %v3367 = vpack.c.bf16 %v3335, %v3335
        %v3368 = vpack.c.bf16 %v3336, %v3336
        %v3369 = vpack.c.bf16 %v3337, %v3337
        %v3370 = vpack.c.bf16 %v3338, %v3338
        %v3371 = vpack.c.bf16 %v3339, %v3339
        %v3372 = vpack.c.bf16 %v3340, %v3340
        %v3373 = vpack.c.bf16 %v3341, %v3341
        %v3374 = vpack.c.bf16 %v3342, %v3342
        %v3375 = vpack.c.bf16 %v3343, %v3343
        %v3376 = vpack.c.bf16 %v3344, %v3344
        %v3377 = vpack.c.bf16 %v3345, %v3345
        %v3378 = vpack.c.bf16 %v3346, %v3346
        %v3379 = vpack.c.bf16 %v3347, %v3347
        %v3380 = vpack.c.bf16 %v3348, %v3348
        %v3381 = vpack.c.bf16 %v3349, %v3349
        %v3382 = vpack.c.bf16 %v3350, %v3350
        %v3383 = vpack.c.bf16 %v3351, %v3351
        %v3384 = vpack.c.bf16 %v3352, %v3352
        %v3385 = vpack.c.bf16 %v3353, %v3353
        %v3386 = vpack.c.bf16 %v3354, %v3354
        %v3387 = vpack.c.bf16 %v3355, %v3355
        %v3388 = vpack.c.bf16 %v3356, %v3356
        %v3389 = vpack.c.bf16 %v3357, %v3357
        %v3390 = vpack.c.bf16 %v3358, %v3358
        %v3391 = vpack.c.bf16 %v3359, %v3359
        %v3392 = vpack.c.bf16 %v3360, %v3360
        %v3393 = vpack.c.bf16 %v3361, %v3361
        %v3394 = vpack.c.bf16 %v3362, %v3362
        %v3395 = vpack.c.bf16 %v3363, %v3363
        %v3396 = vpack.c.bf16 %v3364, %v3364
        %s3397 = scalar_lea.vmem [#allocation9], 128
        %v3398 = vld [vmem:[%s3397] sm:$0xf]
        %v3399 = vld [vmem:[%s3397 + $0x4] sm:$0xf]
        %v3400 = vld [vmem:[%s3397 + $0x8] sm:$0xf]
        %v3401 = vld [vmem:[%s3397 + $0xc] sm:$0xf]
        %v3434 = vunpack.c.l.b16 %v3365
        %v3435 = vunpack.c.l.b16 %v3366
        %v3436 = vunpack.c.l.b16 %v3367
        %v3437 = vunpack.c.l.b16 %v3368
        %v3438 = vunpack.c.l.b16 %v3369
        %v3439 = vunpack.c.l.b16 %v3370
        %v3440 = vunpack.c.l.b16 %v3371
        %v3441 = vunpack.c.l.b16 %v3372
        %v3442 = vunpack.c.l.b16 %v3373
        %v3443 = vunpack.c.l.b16 %v3374
        %v3444 = vunpack.c.l.b16 %v3375
        %v3445 = vunpack.c.l.b16 %v3376
        %v3446 = vunpack.c.l.b16 %v3377
        %v3447 = vunpack.c.l.b16 %v3378
        %v3448 = vunpack.c.l.b16 %v3379
        %v3449 = vunpack.c.l.b16 %v3380
        %v3450 = vunpack.c.l.b16 %v3381
        %v3451 = vunpack.c.l.b16 %v3382
        %v3452 = vunpack.c.l.b16 %v3383
        %v3453 = vunpack.c.l.b16 %v3384
        %v3454 = vunpack.c.l.b16 %v3385
        %v3455 = vunpack.c.l.b16 %v3386
        %v3456 = vunpack.c.l.b16 %v3387
        %v3457 = vunpack.c.l.b16 %v3388
        %v3458 = vunpack.c.l.b16 %v3389
        %v3459 = vunpack.c.l.b16 %v3390
        %v3460 = vunpack.c.l.b16 %v3391
        %v3461 = vunpack.c.l.b16 %v3392
        %v3462 = vunpack.c.l.b16 %v3393
        %v3463 = vunpack.c.l.b16 %v3394
        %v3464 = vunpack.c.l.b16 %v3395
        %v3465 = vunpack.c.l.b16 %v3396
        %v3466 = vpack.c.b16 %v3435, %v3434
        %v3467 = vpack.c.b16 %v3437, %v3436
        %v3468 = vpack.c.b16 %v3439, %v3438
        %v3469 = vpack.c.b16 %v3441, %v3440
        %v3470 = vpack.c.b16 %v3443, %v3442
        %v3471 = vpack.c.b16 %v3445, %v3444
        %v3472 = vpack.c.b16 %v3447, %v3446
        %v3473 = vpack.c.b16 %v3449, %v3448
        %v3474 = vpack.c.b16 %v3451, %v3450
        %v3475 = vpack.c.b16 %v3453, %v3452
        %v3476 = vpack.c.b16 %v3455, %v3454
        %v3477 = vpack.c.b16 %v3457, %v3456
        %v3478 = vpack.c.b16 %v3459, %v3458
        %v3479 = vpack.c.b16 %v3461, %v3460
        %v3480 = vpack.c.b16 %v3463, %v3462
        %v3481 = vpack.c.b16 %v3465, %v3464
        %v3486 = vunpack.c.l.b16 %v3398
        %v3487 = vunpack.c.l.b16 %v3399
        %v3488 = vunpack.c.l.b16 %v3400
        %v3489 = vunpack.c.l.b16 %v3401
        %v3490 = vpack.c.b16 %v3487, %v3486
        %v3491 = vpack.c.b16 %v3489, %v3488
        %v3495 = vsel %vm564, %v3466, 0
        %v3498 = vsel %vm564, %v3467, 0
        %v3501 = vsel %vm564, %v3468, 0
        %v3504 = vsel %vm564, %v3469, 0
        %v3507 = vsel %vm564, %v3470, 0
        %v3510 = vsel %vm564, %v3471, 0
        %v3513 = vsel %vm564, %v3472, 0
        %v3516 = vsel %vm564, %v3473, 0
        %v3519 = vsel %vm564, %v3474, 0
        %v3522 = vsel %vm564, %v3475, 0
        %v3525 = vsel %vm564, %v3476, 0
        %v3528 = vsel %vm564, %v3477, 0
        %v3531 = vsel %vm564, %v3478, 0
        %v3534 = vsel %vm564, %v3479, 0
        %v3537 = vsel %vm564, %v3480, 0
        %v3540 = vsel %vm564, %v3481, 0
        %3542 = vmatpush.bf16.msra.mxu0 0
        %3543 = vmatpush.bf16.msra.mxu0 0
        %3544 = vmatpush.bf16.msra.mxu0 0
        %3545 = vmatpush.bf16.msra.mxu0 0
        %3546 = vmatpush.bf16.msra.mxu0 0
        %3547 = vmatpush.bf16.msra.mxu0 0
        %3548 = vmatpush.bf16.msra.mxu0 %v3491
        %3549 = vmatpush.bf16.msra.mxu0 %v3490
        %3550 = vmatmul.bf16.gmra.mxu0 %v3495
        %v3551 = vpop.f32.mrf.mxu0
        %v3552 = vadd.f32 0.0, %v3551
        %v3553 = vpop.f32.mrf.mxu0
        %v3554 = vadd.f32 0.0, %v3553
        %3555 = vmatmul.bf16.gmra.mxu0 %v3498
        %v3556 = vpop.f32.mrf.mxu0
        %v3557 = vadd.f32 0.0, %v3556
        %v3558 = vpop.f32.mrf.mxu0
        %v3559 = vadd.f32 0.0, %v3558
        %3560 = vmatmul.bf16.gmra.mxu0 %v3501
        %v3561 = vpop.f32.mrf.mxu0
        %v3562 = vadd.f32 0.0, %v3561
        %v3563 = vpop.f32.mrf.mxu0
        %v3564 = vadd.f32 0.0, %v3563
        %3565 = vmatmul.bf16.gmra.mxu0 %v3504
        %v3566 = vpop.f32.mrf.mxu0
        %v3567 = vadd.f32 0.0, %v3566
        %v3568 = vpop.f32.mrf.mxu0
        %v3569 = vadd.f32 0.0, %v3568
        %3570 = vmatmul.bf16.gmra.mxu0 %v3507
        %v3571 = vpop.f32.mrf.mxu0
        %v3572 = vadd.f32 0.0, %v3571
        %v3573 = vpop.f32.mrf.mxu0
        %v3574 = vadd.f32 0.0, %v3573
        %3575 = vmatmul.bf16.gmra.mxu0 %v3510
        %v3576 = vpop.f32.mrf.mxu0
        %v3577 = vadd.f32 0.0, %v3576
        %v3578 = vpop.f32.mrf.mxu0
        %v3579 = vadd.f32 0.0, %v3578
        %3580 = vmatmul.bf16.gmra.mxu0 %v3513
        %v3581 = vpop.f32.mrf.mxu0
        %v3582 = vadd.f32 0.0, %v3581
        %v3583 = vpop.f32.mrf.mxu0
        %v3584 = vadd.f32 0.0, %v3583
        %3585 = vmatmul.bf16.gmra.mxu0 %v3516
        %v3586 = vpop.f32.mrf.mxu0
        %v3587 = vadd.f32 0.0, %v3586
        %v3588 = vpop.f32.mrf.mxu0
        %v3589 = vadd.f32 0.0, %v3588
        %3590 = vmatmul.bf16.gmra.mxu0 %v3519
        %v3591 = vpop.f32.mrf.mxu0
        %v3592 = vadd.f32 0.0, %v3591
        %v3593 = vpop.f32.mrf.mxu0
        %v3594 = vadd.f32 0.0, %v3593
        %3595 = vmatmul.bf16.gmra.mxu0 %v3522
        %v3596 = vpop.f32.mrf.mxu0
        %v3597 = vadd.f32 0.0, %v3596
        %v3598 = vpop.f32.mrf.mxu0
        %v3599 = vadd.f32 0.0, %v3598
        %3600 = vmatmul.bf16.gmra.mxu0 %v3525
        %v3601 = vpop.f32.mrf.mxu0
        %v3602 = vadd.f32 0.0, %v3601
        %v3603 = vpop.f32.mrf.mxu0
        %v3604 = vadd.f32 0.0, %v3603
        %3605 = vmatmul.bf16.gmra.mxu0 %v3528
        %v3606 = vpop.f32.mrf.mxu0
        %v3607 = vadd.f32 0.0, %v3606
        %v3608 = vpop.f32.mrf.mxu0
        %v3609 = vadd.f32 0.0, %v3608
        %3610 = vmatmul.bf16.gmra.mxu0 %v3531
        %v3611 = vpop.f32.mrf.mxu0
        %v3612 = vadd.f32 0.0, %v3611
        %v3613 = vpop.f32.mrf.mxu0
        %v3614 = vadd.f32 0.0, %v3613
        %3615 = vmatmul.bf16.gmra.mxu0 %v3534
        %v3616 = vpop.f32.mrf.mxu0
        %v3617 = vadd.f32 0.0, %v3616
        %v3618 = vpop.f32.mrf.mxu0
        %v3619 = vadd.f32 0.0, %v3618
        %3620 = vmatmul.bf16.gmra.mxu0 %v3537
        %v3621 = vpop.f32.mrf.mxu0
        %v3622 = vadd.f32 0.0, %v3621
        %v3623 = vpop.f32.mrf.mxu0
        %v3624 = vadd.f32 0.0, %v3623
        %3625 = vmatmul.bf16.gmra.mxu0 %v3540
        %v3626 = vpop.f32.mrf.mxu0
        %v3627 = vadd.f32 0.0, %v3626
        %v3628 = vpop.f32.mrf.mxu0
        %v3629 = vadd.f32 0.0, %v3628
        %3630 = vdwg.mxu0
        %v3631 = vadd.f32 %v3301, %v3552
        %v3632 = vadd.f32 %v3302, %v3554
        %v3633 = vadd.f32 %v3303, %v3557
        %v3634 = vadd.f32 %v3304, %v3559
        %v3635 = vadd.f32 %v3305, %v3562
        %v3636 = vadd.f32 %v3306, %v3564
        %v3637 = vadd.f32 %v3307, %v3567
        %v3638 = vadd.f32 %v3308, %v3569
        %v3639 = vadd.f32 %v3309, %v3572
        %v3640 = vadd.f32 %v3310, %v3574
        %v3641 = vadd.f32 %v3311, %v3577
        %v3642 = vadd.f32 %v3312, %v3579
        %v3643 = vadd.f32 %v3313, %v3582
        %v3644 = vadd.f32 %v3314, %v3584
        %v3645 = vadd.f32 %v3315, %v3587
        %v3646 = vadd.f32 %v3316, %v3589
        %v3647 = vadd.f32 %v3317, %v3592
        %v3648 = vadd.f32 %v3318, %v3594
        %v3649 = vadd.f32 %v3319, %v3597
        %v3650 = vadd.f32 %v3320, %v3599
        %v3651 = vadd.f32 %v3321, %v3602
        %v3652 = vadd.f32 %v3322, %v3604
        %v3653 = vadd.f32 %v3323, %v3607
        %v3654 = vadd.f32 %v3324, %v3609
        %v3655 = vadd.f32 %v3325, %v3612
        %v3656 = vadd.f32 %v3326, %v3614
        %v3657 = vadd.f32 %v3327, %v3617
        %v3658 = vadd.f32 %v3328, %v3619
        %v3659 = vadd.f32 %v3329, %v3622
        %v3660 = vadd.f32 %v3330, %v3624
        %v3661 = vadd.f32 %v3331, %v3627
        %v3662 = vadd.f32 %v3332, %v3629
        %v3663 = vld [vmem:[%s5] sm:$0x1]
        %vm3664 = vcmp.gt.f32.partialorder %v3631, 0.0
        %vm3665 = vcmp.gt.f32.partialorder %v3632, 0.0
        %vm3666 = vcmp.gt.f32.partialorder %v3633, 0.0
        %vm3667 = vcmp.gt.f32.partialorder %v3634, 0.0
        %vm3668 = vcmp.gt.f32.partialorder %v3635, 0.0
        %vm3669 = vcmp.gt.f32.partialorder %v3636, 0.0
        %vm3670 = vcmp.gt.f32.partialorder %v3637, 0.0
        %vm3671 = vcmp.gt.f32.partialorder %v3638, 0.0
        %vm3672 = vcmp.gt.f32.partialorder %v3639, 0.0
        %vm3673 = vcmp.gt.f32.partialorder %v3640, 0.0
        %vm3674 = vcmp.gt.f32.partialorder %v3641, 0.0
        %vm3675 = vcmp.gt.f32.partialorder %v3642, 0.0
        %vm3676 = vcmp.gt.f32.partialorder %v3643, 0.0
        %vm3677 = vcmp.gt.f32.partialorder %v3644, 0.0
        %vm3678 = vcmp.gt.f32.partialorder %v3645, 0.0
        %vm3679 = vcmp.gt.f32.partialorder %v3646, 0.0
        %vm3680 = vcmp.gt.f32.partialorder %v3647, 0.0
        %vm3681 = vcmp.gt.f32.partialorder %v3648, 0.0
        %vm3682 = vcmp.gt.f32.partialorder %v3649, 0.0
        %vm3683 = vcmp.gt.f32.partialorder %v3650, 0.0
        %vm3684 = vcmp.gt.f32.partialorder %v3651, 0.0
        %vm3685 = vcmp.gt.f32.partialorder %v3652, 0.0
        %vm3686 = vcmp.gt.f32.partialorder %v3653, 0.0
        %vm3687 = vcmp.gt.f32.partialorder %v3654, 0.0
        %vm3688 = vcmp.gt.f32.partialorder %v3655, 0.0
        %vm3689 = vcmp.gt.f32.partialorder %v3656, 0.0
        %vm3690 = vcmp.gt.f32.partialorder %v3657, 0.0
        %vm3691 = vcmp.gt.f32.partialorder %v3658, 0.0
        %vm3692 = vcmp.gt.f32.partialorder %v3659, 0.0
        %vm3693 = vcmp.gt.f32.partialorder %v3660, 0.0
        %vm3694 = vcmp.gt.f32.partialorder %v3661, 0.0
        %vm3695 = vcmp.gt.f32.partialorder %v3662, 0.0
        %v3697 = vperm.slane %v3663, 0
        %v3699 = vmul.f32 %v3631, %v3697
        %v3700 = vmul.f32 %v3632, %v3697
        %v3701 = vmul.f32 %v3633, %v3697
        %v3702 = vmul.f32 %v3634, %v3697
        %v3703 = vmul.f32 %v3635, %v3697
        %v3704 = vmul.f32 %v3636, %v3697
        %v3705 = vmul.f32 %v3637, %v3697
        %v3706 = vmul.f32 %v3638, %v3697
        %v3707 = vmul.f32 %v3639, %v3697
        %v3708 = vmul.f32 %v3640, %v3697
        %v3709 = vmul.f32 %v3641, %v3697
        %v3710 = vmul.f32 %v3642, %v3697
        %v3711 = vmul.f32 %v3643, %v3697
        %v3712 = vmul.f32 %v3644, %v3697
        %v3713 = vmul.f32 %v3645, %v3697
        %v3714 = vmul.f32 %v3646, %v3697
        %v3715 = vmul.f32 %v3647, %v3697
        %v3716 = vmul.f32 %v3648, %v3697
        %v3717 = vmul.f32 %v3649, %v3697
        %v3718 = vmul.f32 %v3650, %v3697
        %v3719 = vmul.f32 %v3651, %v3697
        %v3720 = vmul.f32 %v3652, %v3697
        %v3721 = vmul.f32 %v3653, %v3697
        %v3722 = vmul.f32 %v3654, %v3697
        %v3723 = vmul.f32 %v3655, %v3697
        %v3724 = vmul.f32 %v3656, %v3697
        %v3725 = vmul.f32 %v3657, %v3697
        %v3726 = vmul.f32 %v3658, %v3697
        %v3727 = vmul.f32 %v3659, %v3697
        %v3728 = vmul.f32 %v3660, %v3697
        %v3729 = vmul.f32 %v3661, %v3697
        %v3730 = vmul.f32 %v3662, %v3697
        %v3731 = vsel %vm3664, %v3631, %v3699
        %v3732 = vsel %vm3665, %v3632, %v3700
        %v3733 = vsel %vm3666, %v3633, %v3701
        %v3734 = vsel %vm3667, %v3634, %v3702
        %v3735 = vsel %vm3668, %v3635, %v3703
        %v3736 = vsel %vm3669, %v3636, %v3704
        %v3737 = vsel %vm3670, %v3637, %v3705
        %v3738 = vsel %vm3671, %v3638, %v3706
        %v3739 = vsel %vm3672, %v3639, %v3707
        %v3740 = vsel %vm3673, %v3640, %v3708
        %v3741 = vsel %vm3674, %v3641, %v3709
        %v3742 = vsel %vm3675, %v3642, %v3710
        %v3743 = vsel %vm3676, %v3643, %v3711
        %v3744 = vsel %vm3677, %v3644, %v3712
        %v3745 = vsel %vm3678, %v3645, %v3713
        %v3746 = vsel %vm3679, %v3646, %v3714
        %v3747 = vsel %vm3680, %v3647, %v3715
        %v3748 = vsel %vm3681, %v3648, %v3716
        %v3749 = vsel %vm3682, %v3649, %v3717
        %v3750 = vsel %vm3683, %v3650, %v3718
        %v3751 = vsel %vm3684, %v3651, %v3719
        %v3752 = vsel %vm3685, %v3652, %v3720
        %v3753 = vsel %vm3686, %v3653, %v3721
        %v3754 = vsel %vm3687, %v3654, %v3722
        %v3755 = vsel %vm3688, %v3655, %v3723
        %v3756 = vsel %vm3689, %v3656, %v3724
        %v3757 = vsel %vm3690, %v3657, %v3725
        %v3758 = vsel %vm3691, %v3658, %v3726
        %v3759 = vsel %vm3692, %v3659, %v3727
        %v3760 = vsel %vm3693, %v3660, %v3728
        %v3761 = vsel %vm3694, %v3661, %v3729
        %v3762 = vsel %vm3695, %v3662, %v3730
        %vm3763 = vcmask 523264
        %3764 = vst.msk [vmem:[#allocation3] sm:$0xff] %vm3763, 0.0
        %3765 = vst.msk [vmem:[#allocation3 + $0x8] sm:$0xff] %vm3763, 0.0
        %vm3766 = vcmask 517120
        %3767 = vst.msk [vmem:[#allocation3 + $0x10] sm:$0x3] %vm3766, 0.0
        %3768 = vst.msk [vmem:[#allocation3 + $0x18] sm:$0xff] %vm3763, 0.0
        %3769 = vst.msk [vmem:[#allocation3 + $0x20] sm:$0xff] %vm3763, 0.0
        %3770 = vst.msk [vmem:[#allocation3 + $0x28] sm:$0x3] %vm3766, 0.0
        %3771 = vst.msk [vmem:[#allocation3 + $0x30] sm:$0xff] %vm3763, 0.0
        %3772 = vst.msk [vmem:[#allocation3 + $0x38] sm:$0xff] %vm3763, 0.0
        %3773 = vst.msk [vmem:[#allocation3 + $0x40] sm:$0x3] %vm3766, 0.0
        %3774 = vst.msk [vmem:[#allocation3 + $0x48] sm:$0xff] %vm3763, 0.0
        %3775 = vst.msk [vmem:[#allocation3 + $0x50] sm:$0xff] %vm3763, 0.0
        %3776 = vst.msk [vmem:[#allocation3 + $0x58] sm:$0x3] %vm3766, 0.0
        %3777 = vst.msk [vmem:[#allocation3 + $0x60] sm:$0xff] %vm3763, 0.0
        %3778 = vst.msk [vmem:[#allocation3 + $0x68] sm:$0xff] %vm3763, 0.0
        %3779 = vst.msk [vmem:[#allocation3 + $0x70] sm:$0x3] %vm3766, 0.0
        %3780 = vst.msk [vmem:[#allocation3 + $0x78] sm:$0xff] %vm3763, 0.0
        %3781 = vst.msk [vmem:[#allocation3 + $0x80] sm:$0xff] %vm3763, 0.0
        %3782 = vst.msk [vmem:[#allocation3 + $0x88] sm:$0x3] %vm3766, 0.0
        %3783 = vst.msk [vmem:[#allocation3 + $0x90] sm:$0xff] %vm3763, 0.0
        %3784 = vst.msk [vmem:[#allocation3 + $0x98] sm:$0xff] %vm3763, 0.0
        %3785 = vst.msk [vmem:[#allocation3 + $0xa0] sm:$0x3] %vm3766, 0.0
        %3786 = vst.msk [vmem:[#allocation3 + $0xa8] sm:$0xff] %vm3763, 0.0
        %3787 = vst.msk [vmem:[#allocation3 + $0xb0] sm:$0xff] %vm3763, 0.0
        %3788 = vst.msk [vmem:[#allocation3 + $0xb8] sm:$0x3] %vm3766, 0.0
        %3789 = vst.msk [vmem:[#allocation3 + $0xc0] sm:$0xff] %vm3763, 0.0
        %3790 = vst.msk [vmem:[#allocation3 + $0xc8] sm:$0xff] %vm3763, 0.0
        %3791 = vst.msk [vmem:[#allocation3 + $0xd0] sm:$0x3] %vm3766, 0.0
        %3792 = vst.msk [vmem:[#allocation3 + $0xd8] sm:$0xff] %vm3763, 0.0
        %3793 = vst.msk [vmem:[#allocation3 + $0xe0] sm:$0xff] %vm3763, 0.0
        %3794 = vst.msk [vmem:[#allocation3 + $0xe8] sm:$0x3] %vm3766, 0.0
        %3795 = vst.msk [vmem:[#allocation3 + $0xf0] sm:$0xff] %vm3763, 0.0
        %3796 = vst.msk [vmem:[#allocation3 + $0xf8] sm:$0xff] %vm3763, 0.0
        %3797 = vst.msk [vmem:[#allocation3 + $0x100] sm:$0x3] %vm3766, 0.0
        %3798 = vst.msk [vmem:[#allocation3 + $0x108] sm:$0xff] %vm3763, 0.0
        %3799 = vst.msk [vmem:[#allocation3 + $0x110] sm:$0xff] %vm3763, 0.0
        %3800 = vst.msk [vmem:[#allocation3 + $0x118] sm:$0x3] %vm3766, 0.0
        %3801 = vst.msk [vmem:[#allocation3 + $0x120] sm:$0xff] %vm3763, 0.0
        %3802 = vst.msk [vmem:[#allocation3 + $0x128] sm:$0xff] %vm3763, 0.0
        %3803 = vst.msk [vmem:[#allocation3 + $0x130] sm:$0x3] %vm3766, 0.0
        %3804 = vst.msk [vmem:[#allocation3 + $0x138] sm:$0xff] %vm3763, 0.0
        %3805 = vst.msk [vmem:[#allocation3 + $0x140] sm:$0xff] %vm3763, 0.0
        %3806 = vst.msk [vmem:[#allocation3 + $0x148] sm:$0x3] %vm3766, 0.0
        %3807 = vst.msk [vmem:[#allocation3 + $0x150] sm:$0xff] %vm3763, 0.0
        %3808 = vst.msk [vmem:[#allocation3 + $0x158] sm:$0xff] %vm3763, 0.0
        %3809 = vst.msk [vmem:[#allocation3 + $0x160] sm:$0x3] %vm3766, 0.0
        %3810 = vst.msk [vmem:[#allocation3 + $0x168] sm:$0xff] %vm3763, 0.0
        %3811 = vst.msk [vmem:[#allocation3 + $0x170] sm:$0xff] %vm3763, 0.0
        %3812 = vst.msk [vmem:[#allocation3 + $0x178] sm:$0x3] %vm3766, 0.0
        %3813 = vst.msk [vmem:[#allocation3 + $0x180] sm:$0xff] %vm3763, 0.0
        %3814 = vst.msk [vmem:[#allocation3 + $0x188] sm:$0xff] %vm3763, 0.0
        %3815 = vst.msk [vmem:[#allocation3 + $0x190] sm:$0x3] %vm3766, 0.0
        %3816 = vst.msk [vmem:[#allocation3 + $0x198] sm:$0xff] %vm3763, 0.0
        %3817 = vst.msk [vmem:[#allocation3 + $0x1a0] sm:$0xff] %vm3763, 0.0
        %3818 = vst.msk [vmem:[#allocation3 + $0x1a8] sm:$0x3] %vm3766, 0.0
        %s3819 = scalar_lea.vmem [#allocation3], 24
        %3820 = vst.msk [vmem:[%s3819 + $0x1] sm:$0xff] %vm3763, %v3731
        %3821 = vst.msk [vmem:[%s3819 + $0x9] sm:$0xff] %vm3763, %v3732
        %3822 = vst.msk [vmem:[%s3819 + $0x19] sm:$0xff] %vm3763, %v3733
        %3823 = vst.msk [vmem:[%s3819 + $0x21] sm:$0xff] %vm3763, %v3734
        %3824 = vst.msk [vmem:[%s3819 + $0x31] sm:$0xff] %vm3763, %v3735
        %3825 = vst.msk [vmem:[%s3819 + $0x39] sm:$0xff] %vm3763, %v3736
        %3826 = vst.msk [vmem:[%s3819 + $0x49] sm:$0xff] %vm3763, %v3737
        %3827 = vst.msk [vmem:[%s3819 + $0x51] sm:$0xff] %vm3763, %v3738
        %3828 = vst.msk [vmem:[%s3819 + $0x61] sm:$0xff] %vm3763, %v3739
        %3829 = vst.msk [vmem:[%s3819 + $0x69] sm:$0xff] %vm3763, %v3740
        %3830 = vst.msk [vmem:[%s3819 + $0x79] sm:$0xff] %vm3763, %v3741
        %3831 = vst.msk [vmem:[%s3819 + $0x81] sm:$0xff] %vm3763, %v3742
        %3832 = vst.msk [vmem:[%s3819 + $0x91] sm:$0xff] %vm3763, %v3743
        %3833 = vst.msk [vmem:[%s3819 + $0x99] sm:$0xff] %vm3763, %v3744
        %3834 = vst.msk [vmem:[%s3819 + $0xa9] sm:$0xff] %vm3763, %v3745
        %3835 = vst.msk [vmem:[%s3819 + $0xb1] sm:$0xff] %vm3763, %v3746
        %3836 = vst.msk [vmem:[%s3819 + $0xc1] sm:$0xff] %vm3763, %v3747
        %3837 = vst.msk [vmem:[%s3819 + $0xc9] sm:$0xff] %vm3763, %v3748
        %3838 = vst.msk [vmem:[%s3819 + $0xd9] sm:$0xff] %vm3763, %v3749
        %3839 = vst.msk [vmem:[%s3819 + $0xe1] sm:$0xff] %vm3763, %v3750
        %3840 = vst.msk [vmem:[%s3819 + $0xf1] sm:$0xff] %vm3763, %v3751
        %3841 = vst.msk [vmem:[%s3819 + $0xf9] sm:$0xff] %vm3763, %v3752
        %3842 = vst.msk [vmem:[%s3819 + $0x109] sm:$0xff] %vm3763, %v3753
        %3843 = vst.msk [vmem:[%s3819 + $0x111] sm:$0xff] %vm3763, %v3754
        %3844 = vst.msk [vmem:[%s3819 + $0x121] sm:$0xff] %vm3763, %v3755
        %3845 = vst.msk [vmem:[%s3819 + $0x129] sm:$0xff] %vm3763, %v3756
        %3846 = vst.msk [vmem:[%s3819 + $0x139] sm:$0xff] %vm3763, %v3757
        %3847 = vst.msk [vmem:[%s3819 + $0x141] sm:$0xff] %vm3763, %v3758
        %3848 = vst.msk [vmem:[%s3819 + $0x151] sm:$0xff] %vm3763, %v3759
        %3849 = vst.msk [vmem:[%s3819 + $0x159] sm:$0xff] %vm3763, %v3760
        %3850 = vst.msk [vmem:[%s3819 + $0x169] sm:$0xff] %vm3763, %v3761
        %3851 = vst.msk [vmem:[%s3819 + $0x171] sm:$0xff] %vm3763, %v3762
        %v3852 = vld [vmem:[#allocation3] ss:$2 sm:$0xff]
        %s3853 = scalar_lea.vmem [#allocation3], 48
        %v3854 = vld [vmem:[%s3853] ss:$2 sm:$0xff]
        %s3855 = scalar_lea.vmem [#allocation3], 96
        %v3856 = vld [vmem:[%s3855] ss:$2 sm:$0xff]
        %s3857 = scalar_lea.vmem [#allocation3], 144
        %v3858 = vld [vmem:[%s3857] ss:$2 sm:$0xff]
        %s3859 = scalar_lea.vmem [#allocation3], 192
        %v3860 = vld [vmem:[%s3859] ss:$2 sm:$0xff]
        %s3861 = scalar_lea.vmem [#allocation3], 240
        %v3862 = vld [vmem:[%s3861] ss:$2 sm:$0xff]
        %s3863 = scalar_lea.vmem [#allocation3], 288
        %v3864 = vld [vmem:[%s3863] ss:$2 sm:$0xff]
        %s3865 = scalar_lea.vmem [#allocation3], 336
        %v3866 = vld [vmem:[%s3865] ss:$2 sm:$0xff]
        %v3867 = vpack.c.bf16 %v3852, %v3852
        %v3868 = vpack.c.bf16 %v3854, %v3854
        %v3869 = vpack.c.bf16 %v3856, %v3856
        %v3870 = vpack.c.bf16 %v3858, %v3858
        %v3871 = vpack.c.bf16 %v3860, %v3860
        %v3872 = vpack.c.bf16 %v3862, %v3862
        %v3873 = vpack.c.bf16 %v3864, %v3864
        %v3874 = vpack.c.bf16 %v3866, %v3866
        %v3875 = vld [vmem:[#allocation10] sm:$0xf]
        %v3876 = vld [vmem:[#allocation10 + $0x4] sm:$0xf]
        %v3877 = vld [vmem:[#allocation10 + $0x8] sm:$0xf]
        %v3878 = vld [vmem:[#allocation10 + $0xc] sm:$0xf]
        %v3879 = vld [vmem:[#allocation10 + $0x10] sm:$0xf]
        %v3880 = vld [vmem:[#allocation10 + $0x14] sm:$0xf]
        %v3881 = vld [vmem:[#allocation10 + $0x18] sm:$0xf]
        %v3882 = vld [vmem:[#allocation10 + $0x1c] sm:$0xf]
        %s3883 = scalar_lea.vmem [#allocation3], 1
        %v3884 = vld [vmem:[%s3883] ss:$2 sm:$0xff]
        %s3885 = scalar_lea.vmem [#allocation3], 49
        %v3886 = vld [vmem:[%s3885] ss:$2 sm:$0xff]
        %s3887 = scalar_lea.vmem [#allocation3], 97
        %v3888 = vld [vmem:[%s3887] ss:$2 sm:$0xff]
        %s3889 = scalar_lea.vmem [#allocation3], 145
        %v3890 = vld [vmem:[%s3889] ss:$2 sm:$0xff]
        %s3891 = scalar_lea.vmem [#allocation3], 193
        %v3892 = vld [vmem:[%s3891] ss:$2 sm:$0xff]
        %s3893 = scalar_lea.vmem [#allocation3], 241
        %v3894 = vld [vmem:[%s3893] ss:$2 sm:$0xff]
        %s3895 = scalar_lea.vmem [#allocation3], 289
        %v3896 = vld [vmem:[%s3895] ss:$2 sm:$0xff]
        %s3897 = scalar_lea.vmem [#allocation3], 337
        %v3898 = vld [vmem:[%s3897] ss:$2 sm:$0xff]
        %v3899 = vpack.c.bf16 %v3884, %v3884
        %v3900 = vpack.c.bf16 %v3886, %v3886
        %v3901 = vpack.c.bf16 %v3888, %v3888
        %v3902 = vpack.c.bf16 %v3890, %v3890
        %v3903 = vpack.c.bf16 %v3892, %v3892
        %v3904 = vpack.c.bf16 %v3894, %v3894
        %v3905 = vpack.c.bf16 %v3896, %v3896
        %v3906 = vpack.c.bf16 %v3898, %v3898
        %s3907 = scalar_lea.vmem [#allocation10], 32
        %v3908 = vld [vmem:[%s3907] sm:$0xf]
        %v3909 = vld [vmem:[%s3907 + $0x4] sm:$0xf]
        %v3910 = vld [vmem:[%s3907 + $0x8] sm:$0xf]
        %v3911 = vld [vmem:[%s3907 + $0xc] sm:$0xf]
        %v3912 = vld [vmem:[%s3907 + $0x10] sm:$0xf]
        %v3913 = vld [vmem:[%s3907 + $0x14] sm:$0xf]
        %v3914 = vld [vmem:[%s3907 + $0x18] sm:$0xf]
        %v3915 = vld [vmem:[%s3907 + $0x1c] sm:$0xf]
        %v3924 = vunpack.c.l.b16 %v3899
        %v3925 = vunpack.c.l.b16 %v3900
        %v3926 = vunpack.c.l.b16 %v3901
        %v3927 = vunpack.c.l.b16 %v3902
        %v3928 = vunpack.c.l.b16 %v3903
        %v3929 = vunpack.c.l.b16 %v3904
        %v3930 = vunpack.c.l.b16 %v3905
        %v3931 = vunpack.c.l.b16 %v3906
        %v3932 = vpack.c.b16 %v3925, %v3924
        %v3933 = vpack.c.b16 %v3927, %v3926
        %v3934 = vpack.c.b16 %v3929, %v3928
        %v3935 = vpack.c.b16 %v3931, %v3930
        %v3944 = vunpack.c.l.b16 %v3908
        %v3945 = vunpack.c.l.b16 %v3909
        %v3946 = vunpack.c.l.b16 %v3910
        %v3947 = vunpack.c.l.b16 %v3911
        %v3948 = vunpack.c.l.b16 %v3912
        %v3949 = vunpack.c.l.b16 %v3913
        %v3950 = vunpack.c.l.b16 %v3914
        %v3951 = vunpack.c.l.b16 %v3915
        %v3952 = vpack.c.b16 %v3945, %v3944
        %v3953 = vpack.c.b16 %v3947, %v3946
        %v3954 = vpack.c.b16 %v3949, %v3948
        %v3955 = vpack.c.b16 %v3951, %v3950
        %v3961 = vsel %vm3763, %v3932, 0
        %v3964 = vsel %vm3763, %v3933, 0
        %v3967 = vsel %vm3763, %v3934, 0
        %v3970 = vsel %vm3763, %v3935, 0
        %3972 = vmatpush.bf16.msra.mxu0 0
        %3973 = vmatpush.bf16.msra.mxu0 0
        %3974 = vmatpush.bf16.msra.mxu0 0
        %3975 = vmatpush.bf16.msra.mxu0 0
        %3976 = vmatpush.bf16.msra.mxu0 %v3955
        %3977 = vmatpush.bf16.msra.mxu0 %v3954
        %3978 = vmatpush.bf16.msra.mxu0 %v3953
        %3979 = vmatpush.bf16.msra.mxu0 %v3952
        %3980 = vmatmul.bf16.gmra.mxu0 %v3961
        %v3981 = vpop.f32.mrf.mxu0
        %v3982 = vadd.f32 0.0, %v3981
        %v3983 = vpop.f32.mrf.mxu0
        %v3984 = vadd.f32 0.0, %v3983
        %3985 = vmatmul.bf16.gmra.mxu0 %v3964
        %v3986 = vpop.f32.mrf.mxu0
        %v3987 = vadd.f32 0.0, %v3986
        %v3988 = vpop.f32.mrf.mxu0
        %v3989 = vadd.f32 0.0, %v3988
        %3990 = vmatmul.bf16.gmra.mxu0 %v3967
        %v3991 = vpop.f32.mrf.mxu0
        %v3992 = vadd.f32 0.0, %v3991
        %v3993 = vpop.f32.mrf.mxu0
        %v3994 = vadd.f32 0.0, %v3993
        %3995 = vmatmul.bf16.gmra.mxu0 %v3970
        %v3996 = vpop.f32.mrf.mxu0
        %v3997 = vadd.f32 0.0, %v3996
        %v3998 = vpop.f32.mrf.mxu0
        %v3999 = vadd.f32 0.0, %v3998
        %4000 = vdwg.mxu0
        %v4009 = vunpack.c.l.b16 %v3867
        %v4010 = vunpack.c.l.b16 %v3868
        %v4011 = vunpack.c.l.b16 %v3869
        %v4012 = vunpack.c.l.b16 %v3870
        %v4013 = vunpack.c.l.b16 %v3871
        %v4014 = vunpack.c.l.b16 %v3872
        %v4015 = vunpack.c.l.b16 %v3873
        %v4016 = vunpack.c.l.b16 %v3874
        %v4017 = vpack.c.b16 %v4010, %v4009
        %v4018 = vpack.c.b16 %v4012, %v4011
        %v4019 = vpack.c.b16 %v4014, %v4013
        %v4020 = vpack.c.b16 %v4016, %v4015
        %v4029 = vunpack.c.l.b16 %v3875
        %v4030 = vunpack.c.l.b16 %v3876
        %v4031 = vunpack.c.l.b16 %v3877
        %v4032 = vunpack.c.l.b16 %v3878
        %v4033 = vunpack.c.l.b16 %v3879
        %v4034 = vunpack.c.l.b16 %v3880
        %v4035 = vunpack.c.l.b16 %v3881
        %v4036 = vunpack.c.l.b16 %v3882
        %v4037 = vpack.c.b16 %v4030, %v4029
        %v4038 = vpack.c.b16 %v4032, %v4031
        %v4039 = vpack.c.b16 %v4034, %v4033
        %v4040 = vpack.c.b16 %v4036, %v4035
        %v4046 = vsel %vm3763, %v4017, 0
        %v4049 = vsel %vm3763, %v4018, 0
        %v4052 = vsel %vm3763, %v4019, 0
        %v4055 = vsel %vm3763, %v4020, 0
        %4057 = vmatpush.bf16.msra.mxu0 0
        %4058 = vmatpush.bf16.msra.mxu0 0
        %4059 = vmatpush.bf16.msra.mxu0 0
        %4060 = vmatpush.bf16.msra.mxu0 0
        %4061 = vmatpush.bf16.msra.mxu0 %v4040
        %4062 = vmatpush.bf16.msra.mxu0 %v4039
        %4063 = vmatpush.bf16.msra.mxu0 %v4038
        %4064 = vmatpush.bf16.msra.mxu0 %v4037
        %4065 = vmatmul.bf16.gmra.mxu0 %v4046
        %v4066 = vpop.f32.mrf.mxu0
        %v4067 = vadd.f32 %v3982, %v4066
        %v4068 = vpop.f32.mrf.mxu0
        %v4069 = vadd.f32 %v3984, %v4068
        %4070 = vmatmul.bf16.gmra.mxu0 %v4049
        %v4071 = vpop.f32.mrf.mxu0
        %v4072 = vadd.f32 %v3987, %v4071
        %v4073 = vpop.f32.mrf.mxu0
        %v4074 = vadd.f32 %v3989, %v4073
        %4075 = vmatmul.bf16.gmra.mxu0 %v4052
        %v4076 = vpop.f32.mrf.mxu0
        %v4077 = vadd.f32 %v3992, %v4076
        %v4078 = vpop.f32.mrf.mxu0
        %v4079 = vadd.f32 %v3994, %v4078
        %4080 = vmatmul.bf16.gmra.mxu0 %v4055
        %v4081 = vpop.f32.mrf.mxu0
        %v4082 = vadd.f32 %v3997, %v4081
        %v4083 = vpop.f32.mrf.mxu0
        %v4084 = vadd.f32 %v3999, %v4083
        %4085 = vdwg.mxu0
        %s4086 = scalar_lea.vmem [#allocation3], 2
        %v4087 = vld [vmem:[%s4086] ss:$2 sm:$0xff]
        %s4088 = scalar_lea.vmem [#allocation3], 50
        %v4089 = vld [vmem:[%s4088] ss:$2 sm:$0xff]
        %s4090 = scalar_lea.vmem [#allocation3], 98
        %v4091 = vld [vmem:[%s4090] ss:$2 sm:$0xff]
        %s4092 = scalar_lea.vmem [#allocation3], 146
        %v4093 = vld [vmem:[%s4092] ss:$2 sm:$0xff]
        %s4094 = scalar_lea.vmem [#allocation3], 194
        %v4095 = vld [vmem:[%s4094] ss:$2 sm:$0xff]
        %s4096 = scalar_lea.vmem [#allocation3], 242
        %v4097 = vld [vmem:[%s4096] ss:$2 sm:$0xff]
        %s4098 = scalar_lea.vmem [#allocation3], 290
        %v4099 = vld [vmem:[%s4098] ss:$2 sm:$0xff]
        %s4100 = scalar_lea.vmem [#allocation3], 338
        %v4101 = vld [vmem:[%s4100] ss:$2 sm:$0xff]
        %v4102 = vpack.c.bf16 %v4087, %v4087
        %v4103 = vpack.c.bf16 %v4089, %v4089
        %v4104 = vpack.c.bf16 %v4091, %v4091
        %v4105 = vpack.c.bf16 %v4093, %v4093
        %v4106 = vpack.c.bf16 %v4095, %v4095
        %v4107 = vpack.c.bf16 %v4097, %v4097
        %v4108 = vpack.c.bf16 %v4099, %v4099
        %v4109 = vpack.c.bf16 %v4101, %v4101
        %s4110 = scalar_lea.vmem [#allocation10], 64
        %v4111 = vld [vmem:[%s4110] sm:$0xf]
        %v4112 = vld [vmem:[%s4110 + $0x4] sm:$0xf]
        %v4113 = vld [vmem:[%s4110 + $0x8] sm:$0xf]
        %v4114 = vld [vmem:[%s4110 + $0xc] sm:$0xf]
        %v4115 = vld [vmem:[%s4110 + $0x10] sm:$0xf]
        %v4116 = vld [vmem:[%s4110 + $0x14] sm:$0xf]
        %v4117 = vld [vmem:[%s4110 + $0x18] sm:$0xf]
        %v4118 = vld [vmem:[%s4110 + $0x1c] sm:$0xf]
        %v4127 = vunpack.c.l.b16 %v4102
        %v4128 = vunpack.c.l.b16 %v4103
        %v4129 = vunpack.c.l.b16 %v4104
        %v4130 = vunpack.c.l.b16 %v4105
        %v4131 = vunpack.c.l.b16 %v4106
        %v4132 = vunpack.c.l.b16 %v4107
        %v4133 = vunpack.c.l.b16 %v4108
        %v4134 = vunpack.c.l.b16 %v4109
        %v4135 = vpack.c.b16 %v4128, %v4127
        %v4136 = vpack.c.b16 %v4130, %v4129
        %v4137 = vpack.c.b16 %v4132, %v4131
        %v4138 = vpack.c.b16 %v4134, %v4133
        %v4147 = vunpack.c.l.b16 %v4111
        %v4148 = vunpack.c.l.b16 %v4112
        %v4149 = vunpack.c.l.b16 %v4113
        %v4150 = vunpack.c.l.b16 %v4114
        %v4151 = vunpack.c.l.b16 %v4115
        %v4152 = vunpack.c.l.b16 %v4116
        %v4153 = vunpack.c.l.b16 %v4117
        %v4154 = vunpack.c.l.b16 %v4118
        %v4155 = vpack.c.b16 %v4148, %v4147
        %v4156 = vpack.c.b16 %v4150, %v4149
        %v4157 = vpack.c.b16 %v4152, %v4151
        %v4158 = vpack.c.b16 %v4154, %v4153
        %v4164 = vsel %vm3763, %v4135, 0
        %v4167 = vsel %vm3763, %v4136, 0
        %v4170 = vsel %vm3763, %v4137, 0
        %v4173 = vsel %vm3763, %v4138, 0
        %4175 = vmatpush.bf16.msra.mxu0 0
        %4176 = vmatpush.bf16.msra.mxu0 0
        %4177 = vmatpush.bf16.msra.mxu0 0
        %4178 = vmatpush.bf16.msra.mxu0 0
        %4179 = vmatpush.bf16.msra.mxu0 %v4158
        %4180 = vmatpush.bf16.msra.mxu0 %v4157
        %4181 = vmatpush.bf16.msra.mxu0 %v4156
        %4182 = vmatpush.bf16.msra.mxu0 %v4155
        %4183 = vmatmul.bf16.gmra.mxu0 %v4164
        %v4184 = vpop.f32.mrf.mxu0
        %v4185 = vadd.f32 0.0, %v4184
        %v4186 = vpop.f32.mrf.mxu0
        %v4187 = vadd.f32 0.0, %v4186
        %4188 = vmatmul.bf16.gmra.mxu0 %v4167
        %v4189 = vpop.f32.mrf.mxu0
        %v4190 = vadd.f32 0.0, %v4189
        %v4191 = vpop.f32.mrf.mxu0
        %v4192 = vadd.f32 0.0, %v4191
        %4193 = vmatmul.bf16.gmra.mxu0 %v4170
        %v4194 = vpop.f32.mrf.mxu0
        %v4195 = vadd.f32 0.0, %v4194
        %v4196 = vpop.f32.mrf.mxu0
        %v4197 = vadd.f32 0.0, %v4196
        %4198 = vmatmul.bf16.gmra.mxu0 %v4173
        %v4199 = vpop.f32.mrf.mxu0
        %v4200 = vadd.f32 0.0, %v4199
        %v4201 = vpop.f32.mrf.mxu0
        %v4202 = vadd.f32 0.0, %v4201
        %4203 = vdwg.mxu0
        %v4204 = vadd.f32 %v4067, %v4185
        %v4205 = vadd.f32 %v4069, %v4187
        %v4206 = vadd.f32 %v4072, %v4190
        %v4207 = vadd.f32 %v4074, %v4192
        %v4208 = vadd.f32 %v4077, %v4195
        %v4209 = vadd.f32 %v4079, %v4197
        %v4210 = vadd.f32 %v4082, %v4200
        %v4211 = vadd.f32 %v4084, %v4202
        %v4212 = vld [vmem:[%s3819] ss:$2 sm:$0xff]
        %s4213 = scalar_lea.vmem %s3819, 48 [#allocation3]
        %v4214 = vld [vmem:[%s4213] ss:$2 sm:$0xff]
        %s4215 = scalar_lea.vmem %s3819, 96 [#allocation3]
        %v4216 = vld [vmem:[%s4215] ss:$2 sm:$0xff]
        %s4217 = scalar_lea.vmem %s3819, 144 [#allocation3]
        %v4218 = vld [vmem:[%s4217] ss:$2 sm:$0xff]
        %s4219 = scalar_lea.vmem %s3819, 192 [#allocation3]
        %v4220 = vld [vmem:[%s4219] ss:$2 sm:$0xff]
        %s4221 = scalar_lea.vmem %s3819, 240 [#allocation3]
        %v4222 = vld [vmem:[%s4221] ss:$2 sm:$0xff]
        %s4223 = scalar_lea.vmem %s3819, 288 [#allocation3]
        %v4224 = vld [vmem:[%s4223] ss:$2 sm:$0xff]
        %s4225 = scalar_lea.vmem %s3819, 336 [#allocation3]
        %v4226 = vld [vmem:[%s4225] ss:$2 sm:$0xff]
        %v4227 = vpack.c.bf16 %v4212, %v4212
        %v4228 = vpack.c.bf16 %v4214, %v4214
        %v4229 = vpack.c.bf16 %v4216, %v4216
        %v4230 = vpack.c.bf16 %v4218, %v4218
        %v4231 = vpack.c.bf16 %v4220, %v4220
        %v4232 = vpack.c.bf16 %v4222, %v4222
        %v4233 = vpack.c.bf16 %v4224, %v4224
        %v4234 = vpack.c.bf16 %v4226, %v4226
        %s4235 = scalar_lea.vmem [#allocation10], 96
        %v4236 = vld [vmem:[%s4235] sm:$0xf]
        %v4237 = vld [vmem:[%s4235 + $0x4] sm:$0xf]
        %v4238 = vld [vmem:[%s4235 + $0x8] sm:$0xf]
        %v4239 = vld [vmem:[%s4235 + $0xc] sm:$0xf]
        %v4240 = vld [vmem:[%s4235 + $0x10] sm:$0xf]
        %v4241 = vld [vmem:[%s4235 + $0x14] sm:$0xf]
        %v4242 = vld [vmem:[%s4235 + $0x18] sm:$0xf]
        %v4243 = vld [vmem:[%s4235 + $0x1c] sm:$0xf]
        %v4252 = vunpack.c.l.b16 %v4227
        %v4253 = vunpack.c.l.b16 %v4228
        %v4254 = vunpack.c.l.b16 %v4229
        %v4255 = vunpack.c.l.b16 %v4230
        %v4256 = vunpack.c.l.b16 %v4231
        %v4257 = vunpack.c.l.b16 %v4232
        %v4258 = vunpack.c.l.b16 %v4233
        %v4259 = vunpack.c.l.b16 %v4234
        %v4260 = vpack.c.b16 %v4253, %v4252
        %v4261 = vpack.c.b16 %v4255, %v4254
        %v4262 = vpack.c.b16 %v4257, %v4256
        %v4263 = vpack.c.b16 %v4259, %v4258
        %v4272 = vunpack.c.l.b16 %v4236
        %v4273 = vunpack.c.l.b16 %v4237
        %v4274 = vunpack.c.l.b16 %v4238
        %v4275 = vunpack.c.l.b16 %v4239
        %v4276 = vunpack.c.l.b16 %v4240
        %v4277 = vunpack.c.l.b16 %v4241
        %v4278 = vunpack.c.l.b16 %v4242
        %v4279 = vunpack.c.l.b16 %v4243
        %v4280 = vpack.c.b16 %v4273, %v4272
        %v4281 = vpack.c.b16 %v4275, %v4274
        %v4282 = vpack.c.b16 %v4277, %v4276
        %v4283 = vpack.c.b16 %v4279, %v4278
        %v4289 = vsel %vm3763, %v4260, 0
        %v4292 = vsel %vm3763, %v4261, 0
        %v4295 = vsel %vm3763, %v4262, 0
        %v4298 = vsel %vm3763, %v4263, 0
        %4300 = vmatpush.bf16.msra.mxu0 0
        %4301 = vmatpush.bf16.msra.mxu0 0
        %4302 = vmatpush.bf16.msra.mxu0 0
        %4303 = vmatpush.bf16.msra.mxu0 0
        %4304 = vmatpush.bf16.msra.mxu0 %v4283
        %4305 = vmatpush.bf16.msra.mxu0 %v4282
        %4306 = vmatpush.bf16.msra.mxu0 %v4281
        %4307 = vmatpush.bf16.msra.mxu0 %v4280
        %4308 = vmatmul.bf16.gmra.mxu0 %v4289
        %v4309 = vpop.f32.mrf.mxu0
        %v4310 = vadd.f32 0.0, %v4309
        %v4311 = vpop.f32.mrf.mxu0
        %v4312 = vadd.f32 0.0, %v4311
        %4313 = vmatmul.bf16.gmra.mxu0 %v4292
        %v4314 = vpop.f32.mrf.mxu0
        %v4315 = vadd.f32 0.0, %v4314
        %v4316 = vpop.f32.mrf.mxu0
        %v4317 = vadd.f32 0.0, %v4316
        %4318 = vmatmul.bf16.gmra.mxu0 %v4295
        %v4319 = vpop.f32.mrf.mxu0
        %v4320 = vadd.f32 0.0, %v4319
        %v4321 = vpop.f32.mrf.mxu0
        %v4322 = vadd.f32 0.0, %v4321
        %4323 = vmatmul.bf16.gmra.mxu0 %v4298
        %v4324 = vpop.f32.mrf.mxu0
        %v4325 = vadd.f32 0.0, %v4324
        %v4326 = vpop.f32.mrf.mxu0
        %v4327 = vadd.f32 0.0, %v4326
        %4328 = vdwg.mxu0
        %v4329 = vadd.f32 %v4204, %v4310
        %v4330 = vadd.f32 %v4205, %v4312
        %v4331 = vadd.f32 %v4206, %v4315
        %v4332 = vadd.f32 %v4207, %v4317
        %v4333 = vadd.f32 %v4208, %v4320
        %v4334 = vadd.f32 %v4209, %v4322
        %v4335 = vadd.f32 %v4210, %v4325
        %v4336 = vadd.f32 %v4211, %v4327
        %s4337 = scalar_lea.vmem %s3819, 1 [#allocation3]
        %v4338 = vld [vmem:[%s4337] ss:$2 sm:$0xff]
        %s4339 = scalar_lea.vmem %s3819, 49 [#allocation3]
        %v4340 = vld [vmem:[%s4339] ss:$2 sm:$0xff]
        %s4341 = scalar_lea.vmem %s3819, 97 [#allocation3]
        %v4342 = vld [vmem:[%s4341] ss:$2 sm:$0xff]
        %s4343 = scalar_lea.vmem %s3819, 145 [#allocation3]
        %v4344 = vld [vmem:[%s4343] ss:$2 sm:$0xff]
        %s4345 = scalar_lea.vmem %s3819, 193 [#allocation3]
        %v4346 = vld [vmem:[%s4345] ss:$2 sm:$0xff]
        %s4347 = scalar_lea.vmem %s3819, 241 [#allocation3]
        %v4348 = vld [vmem:[%s4347] ss:$2 sm:$0xff]
        %s4349 = scalar_lea.vmem %s3819, 289 [#allocation3]
        %v4350 = vld [vmem:[%s4349] ss:$2 sm:$0xff]
        %s4351 = scalar_lea.vmem %s3819, 337 [#allocation3]
        %v4352 = vld [vmem:[%s4351] ss:$2 sm:$0xff]
        %v4353 = vpack.c.bf16 %v4338, %v4338
        %v4354 = vpack.c.bf16 %v4340, %v4340
        %v4355 = vpack.c.bf16 %v4342, %v4342
        %v4356 = vpack.c.bf16 %v4344, %v4344
        %v4357 = vpack.c.bf16 %v4346, %v4346
        %v4358 = vpack.c.bf16 %v4348, %v4348
        %v4359 = vpack.c.bf16 %v4350, %v4350
        %v4360 = vpack.c.bf16 %v4352, %v4352
        %s4361 = scalar_lea.vmem [#allocation10], 128
        %v4362 = vld [vmem:[%s4361] sm:$0xf]
        %v4363 = vld [vmem:[%s4361 + $0x4] sm:$0xf]
        %v4364 = vld [vmem:[%s4361 + $0x8] sm:$0xf]
        %v4365 = vld [vmem:[%s4361 + $0xc] sm:$0xf]
        %v4366 = vld [vmem:[%s4361 + $0x10] sm:$0xf]
        %v4367 = vld [vmem:[%s4361 + $0x14] sm:$0xf]
        %v4368 = vld [vmem:[%s4361 + $0x18] sm:$0xf]
        %v4369 = vld [vmem:[%s4361 + $0x1c] sm:$0xf]
        %v4378 = vunpack.c.l.b16 %v4353
        %v4379 = vunpack.c.l.b16 %v4354
        %v4380 = vunpack.c.l.b16 %v4355
        %v4381 = vunpack.c.l.b16 %v4356
        %v4382 = vunpack.c.l.b16 %v4357
        %v4383 = vunpack.c.l.b16 %v4358
        %v4384 = vunpack.c.l.b16 %v4359
        %v4385 = vunpack.c.l.b16 %v4360
        %v4386 = vpack.c.b16 %v4379, %v4378
        %v4387 = vpack.c.b16 %v4381, %v4380
        %v4388 = vpack.c.b16 %v4383, %v4382
        %v4389 = vpack.c.b16 %v4385, %v4384
        %v4398 = vunpack.c.l.b16 %v4362
        %v4399 = vunpack.c.l.b16 %v4363
        %v4400 = vunpack.c.l.b16 %v4364
        %v4401 = vunpack.c.l.b16 %v4365
        %v4402 = vunpack.c.l.b16 %v4366
        %v4403 = vunpack.c.l.b16 %v4367
        %v4404 = vunpack.c.l.b16 %v4368
        %v4405 = vunpack.c.l.b16 %v4369
        %v4406 = vpack.c.b16 %v4399, %v4398
        %v4407 = vpack.c.b16 %v4401, %v4400
        %v4408 = vpack.c.b16 %v4403, %v4402
        %v4409 = vpack.c.b16 %v4405, %v4404
        %v4415 = vsel %vm3763, %v4386, 0
        %v4418 = vsel %vm3763, %v4387, 0
        %v4421 = vsel %vm3763, %v4388, 0
        %v4424 = vsel %vm3763, %v4389, 0
        %4426 = vmatpush.bf16.msra.mxu0 0
        %4427 = vmatpush.bf16.msra.mxu0 0
        %4428 = vmatpush.bf16.msra.mxu0 0
        %4429 = vmatpush.bf16.msra.mxu0 0
        %4430 = vmatpush.bf16.msra.mxu0 %v4409
        %4431 = vmatpush.bf16.msra.mxu0 %v4408
        %4432 = vmatpush.bf16.msra.mxu0 %v4407
        %4433 = vmatpush.bf16.msra.mxu0 %v4406
        %4434 = vmatmul.bf16.gmra.mxu0 %v4415
        %v4435 = vpop.f32.mrf.mxu0
        %v4436 = vadd.f32 0.0, %v4435
        %v4437 = vpop.f32.mrf.mxu0
        %v4438 = vadd.f32 0.0, %v4437
        %4439 = vmatmul.bf16.gmra.mxu0 %v4418
        %v4440 = vpop.f32.mrf.mxu0
        %v4441 = vadd.f32 0.0, %v4440
        %v4442 = vpop.f32.mrf.mxu0
        %v4443 = vadd.f32 0.0, %v4442
        %4444 = vmatmul.bf16.gmra.mxu0 %v4421
        %v4445 = vpop.f32.mrf.mxu0
        %v4446 = vadd.f32 0.0, %v4445
        %v4447 = vpop.f32.mrf.mxu0
        %v4448 = vadd.f32 0.0, %v4447
        %4449 = vmatmul.bf16.gmra.mxu0 %v4424
        %v4450 = vpop.f32.mrf.mxu0
        %v4451 = vadd.f32 0.0, %v4450
        %v4452 = vpop.f32.mrf.mxu0
        %v4453 = vadd.f32 0.0, %v4452
        %4454 = vdwg.mxu0
        %v4455 = vadd.f32 %v4329, %v4436
        %v4456 = vadd.f32 %v4330, %v4438
        %v4457 = vadd.f32 %v4331, %v4441
        %v4458 = vadd.f32 %v4332, %v4443
        %v4459 = vadd.f32 %v4333, %v4446
        %v4460 = vadd.f32 %v4334, %v4448
        %v4461 = vadd.f32 %v4335, %v4451
        %v4462 = vadd.f32 %v4336, %v4453
        %s4463 = scalar_lea.vmem %s3819, 2 [#allocation3]
        %v4464 = vld [vmem:[%s4463] ss:$2 sm:$0xff]
        %s4465 = scalar_lea.vmem %s3819, 50 [#allocation3]
        %v4466 = vld [vmem:[%s4465] ss:$2 sm:$0xff]
        %s4467 = scalar_lea.vmem %s3819, 98 [#allocation3]
        %v4468 = vld [vmem:[%s4467] ss:$2 sm:$0xff]
        %s4469 = scalar_lea.vmem %s3819, 146 [#allocation3]
        %v4470 = vld [vmem:[%s4469] ss:$2 sm:$0xff]
        %s4471 = scalar_lea.vmem %s3819, 194 [#allocation3]
        %v4472 = vld [vmem:[%s4471] ss:$2 sm:$0xff]
        %s4473 = scalar_lea.vmem %s3819, 242 [#allocation3]
        %v4474 = vld [vmem:[%s4473] ss:$2 sm:$0xff]
        %s4475 = scalar_lea.vmem %s3819, 290 [#allocation3]
        %v4476 = vld [vmem:[%s4475] ss:$2 sm:$0xff]
        %s4477 = scalar_lea.vmem %s3819, 338 [#allocation3]
        %v4478 = vld [vmem:[%s4477] ss:$2 sm:$0xff]
        %v4479 = vpack.c.bf16 %v4464, %v4464
        %v4480 = vpack.c.bf16 %v4466, %v4466
        %v4481 = vpack.c.bf16 %v4468, %v4468
        %v4482 = vpack.c.bf16 %v4470, %v4470
        %v4483 = vpack.c.bf16 %v4472, %v4472
        %v4484 = vpack.c.bf16 %v4474, %v4474
        %v4485 = vpack.c.bf16 %v4476, %v4476
        %v4486 = vpack.c.bf16 %v4478, %v4478
        %s4487 = scalar_lea.vmem [#allocation10], 160
        %v4488 = vld [vmem:[%s4487] sm:$0xf]
        %v4489 = vld [vmem:[%s4487 + $0x4] sm:$0xf]
        %v4490 = vld [vmem:[%s4487 + $0x8] sm:$0xf]
        %v4491 = vld [vmem:[%s4487 + $0xc] sm:$0xf]
        %v4492 = vld [vmem:[%s4487 + $0x10] sm:$0xf]
        %v4493 = vld [vmem:[%s4487 + $0x14] sm:$0xf]
        %v4494 = vld [vmem:[%s4487 + $0x18] sm:$0xf]
        %v4495 = vld [vmem:[%s4487 + $0x1c] sm:$0xf]
        %v4504 = vunpack.c.l.b16 %v4479
        %v4505 = vunpack.c.l.b16 %v4480
        %v4506 = vunpack.c.l.b16 %v4481
        %v4507 = vunpack.c.l.b16 %v4482
        %v4508 = vunpack.c.l.b16 %v4483
        %v4509 = vunpack.c.l.b16 %v4484
        %v4510 = vunpack.c.l.b16 %v4485
        %v4511 = vunpack.c.l.b16 %v4486
        %v4512 = vpack.c.b16 %v4505, %v4504
        %v4513 = vpack.c.b16 %v4507, %v4506
        %v4514 = vpack.c.b16 %v4509, %v4508
        %v4515 = vpack.c.b16 %v4511, %v4510
        %v4524 = vunpack.c.l.b16 %v4488
        %v4525 = vunpack.c.l.b16 %v4489
        %v4526 = vunpack.c.l.b16 %v4490
        %v4527 = vunpack.c.l.b16 %v4491
        %v4528 = vunpack.c.l.b16 %v4492
        %v4529 = vunpack.c.l.b16 %v4493
        %v4530 = vunpack.c.l.b16 %v4494
        %v4531 = vunpack.c.l.b16 %v4495
        %v4532 = vpack.c.b16 %v4525, %v4524
        %v4533 = vpack.c.b16 %v4527, %v4526
        %v4534 = vpack.c.b16 %v4529, %v4528
        %v4535 = vpack.c.b16 %v4531, %v4530
        %v4541 = vsel %vm3763, %v4512, 0
        %v4544 = vsel %vm3763, %v4513, 0
        %v4547 = vsel %vm3763, %v4514, 0
        %v4550 = vsel %vm3763, %v4515, 0
        %4552 = vmatpush.bf16.msra.mxu0 0
        %4553 = vmatpush.bf16.msra.mxu0 0
        %4554 = vmatpush.bf16.msra.mxu0 0
        %4555 = vmatpush.bf16.msra.mxu0 0
        %4556 = vmatpush.bf16.msra.mxu0 %v4535
        %4557 = vmatpush.bf16.msra.mxu0 %v4534
        %4558 = vmatpush.bf16.msra.mxu0 %v4533
        %4559 = vmatpush.bf16.msra.mxu0 %v4532
        %4560 = vmatmul.bf16.gmra.mxu0 %v4541
        %v4561 = vpop.f32.mrf.mxu0
        %v4562 = vadd.f32 0.0, %v4561
        %v4563 = vpop.f32.mrf.mxu0
        %v4564 = vadd.f32 0.0, %v4563
        %4565 = vmatmul.bf16.gmra.mxu0 %v4544
        %v4566 = vpop.f32.mrf.mxu0
        %v4567 = vadd.f32 0.0, %v4566
        %v4568 = vpop.f32.mrf.mxu0
        %v4569 = vadd.f32 0.0, %v4568
        %4570 = vmatmul.bf16.gmra.mxu0 %v4547
        %v4571 = vpop.f32.mrf.mxu0
        %v4572 = vadd.f32 0.0, %v4571
        %v4573 = vpop.f32.mrf.mxu0
        %v4574 = vadd.f32 0.0, %v4573
        %4575 = vmatmul.bf16.gmra.mxu0 %v4550
        %v4576 = vpop.f32.mrf.mxu0
        %v4577 = vadd.f32 0.0, %v4576
        %v4578 = vpop.f32.mrf.mxu0
        %v4579 = vadd.f32 0.0, %v4578
        %4580 = vdwg.mxu0
        %v4581 = vadd.f32 %v4455, %v4562
        %v4582 = vadd.f32 %v4456, %v4564
        %v4583 = vadd.f32 %v4457, %v4567
        %v4584 = vadd.f32 %v4458, %v4569
        %v4585 = vadd.f32 %v4459, %v4572
        %v4586 = vadd.f32 %v4460, %v4574
        %v4587 = vadd.f32 %v4461, %v4577
        %v4588 = vadd.f32 %v4462, %v4579
        %s4589 = scalar_lea.vmem [#allocation3], 48
        %v4590 = vld [vmem:[%s4589] ss:$2 sm:$0xff]
        %s4591 = scalar_lea.vmem %s4589, 48 [#allocation3]
        %v4592 = vld [vmem:[%s4591] ss:$2 sm:$0xff]
        %s4593 = scalar_lea.vmem %s4589, 96 [#allocation3]
        %v4594 = vld [vmem:[%s4593] ss:$2 sm:$0xff]
        %s4595 = scalar_lea.vmem %s4589, 144 [#allocation3]
        %v4596 = vld [vmem:[%s4595] ss:$2 sm:$0xff]
        %s4597 = scalar_lea.vmem %s4589, 192 [#allocation3]
        %v4598 = vld [vmem:[%s4597] ss:$2 sm:$0xff]
        %s4599 = scalar_lea.vmem %s4589, 240 [#allocation3]
        %v4600 = vld [vmem:[%s4599] ss:$2 sm:$0xff]
        %s4601 = scalar_lea.vmem %s4589, 288 [#allocation3]
        %v4602 = vld [vmem:[%s4601] ss:$2 sm:$0xff]
        %s4603 = scalar_lea.vmem %s4589, 336 [#allocation3]
        %v4604 = vld [vmem:[%s4603] ss:$2 sm:$0xff]
        %v4605 = vpack.c.bf16 %v4590, %v4590
        %v4606 = vpack.c.bf16 %v4592, %v4592
        %v4607 = vpack.c.bf16 %v4594, %v4594
        %v4608 = vpack.c.bf16 %v4596, %v4596
        %v4609 = vpack.c.bf16 %v4598, %v4598
        %v4610 = vpack.c.bf16 %v4600, %v4600
        %v4611 = vpack.c.bf16 %v4602, %v4602
        %v4612 = vpack.c.bf16 %v4604, %v4604
        %s4613 = scalar_lea.vmem [#allocation10], 192
        %v4614 = vld [vmem:[%s4613] sm:$0xf]
        %v4615 = vld [vmem:[%s4613 + $0x4] sm:$0xf]
        %v4616 = vld [vmem:[%s4613 + $0x8] sm:$0xf]
        %v4617 = vld [vmem:[%s4613 + $0xc] sm:$0xf]
        %v4618 = vld [vmem:[%s4613 + $0x10] sm:$0xf]
        %v4619 = vld [vmem:[%s4613 + $0x14] sm:$0xf]
        %v4620 = vld [vmem:[%s4613 + $0x18] sm:$0xf]
        %v4621 = vld [vmem:[%s4613 + $0x1c] sm:$0xf]
        %v4630 = vunpack.c.l.b16 %v4605
        %v4631 = vunpack.c.l.b16 %v4606
        %v4632 = vunpack.c.l.b16 %v4607
        %v4633 = vunpack.c.l.b16 %v4608
        %v4634 = vunpack.c.l.b16 %v4609
        %v4635 = vunpack.c.l.b16 %v4610
        %v4636 = vunpack.c.l.b16 %v4611
        %v4637 = vunpack.c.l.b16 %v4612
        %v4638 = vpack.c.b16 %v4631, %v4630
        %v4639 = vpack.c.b16 %v4633, %v4632
        %v4640 = vpack.c.b16 %v4635, %v4634
        %v4641 = vpack.c.b16 %v4637, %v4636
        %v4650 = vunpack.c.l.b16 %v4614
        %v4651 = vunpack.c.l.b16 %v4615
        %v4652 = vunpack.c.l.b16 %v4616
        %v4653 = vunpack.c.l.b16 %v4617
        %v4654 = vunpack.c.l.b16 %v4618
        %v4655 = vunpack.c.l.b16 %v4619
        %v4656 = vunpack.c.l.b16 %v4620
        %v4657 = vunpack.c.l.b16 %v4621
        %v4658 = vpack.c.b16 %v4651, %v4650
        %v4659 = vpack.c.b16 %v4653, %v4652
        %v4660 = vpack.c.b16 %v4655, %v4654
        %v4661 = vpack.c.b16 %v4657, %v4656
        %v4667 = vsel %vm3763, %v4638, 0
        %v4670 = vsel %vm3763, %v4639, 0
        %v4673 = vsel %vm3763, %v4640, 0
        %v4676 = vsel %vm3763, %v4641, 0
        %4678 = vmatpush.bf16.msra.mxu0 0
        %4679 = vmatpush.bf16.msra.mxu0 0
        %4680 = vmatpush.bf16.msra.mxu0 0
        %4681 = vmatpush.bf16.msra.mxu0 0
        %4682 = vmatpush.bf16.msra.mxu0 %v4661
        %4683 = vmatpush.bf16.msra.mxu0 %v4660
        %4684 = vmatpush.bf16.msra.mxu0 %v4659
        %4685 = vmatpush.bf16.msra.mxu0 %v4658
        %4686 = vmatmul.bf16.gmra.mxu0 %v4667
        %v4687 = vpop.f32.mrf.mxu0
        %v4688 = vadd.f32 0.0, %v4687
        %v4689 = vpop.f32.mrf.mxu0
        %v4690 = vadd.f32 0.0, %v4689
        %4691 = vmatmul.bf16.gmra.mxu0 %v4670
        %v4692 = vpop.f32.mrf.mxu0
        %v4693 = vadd.f32 0.0, %v4692
        %v4694 = vpop.f32.mrf.mxu0
        %v4695 = vadd.f32 0.0, %v4694
        %4696 = vmatmul.bf16.gmra.mxu0 %v4673
        %v4697 = vpop.f32.mrf.mxu0
        %v4698 = vadd.f32 0.0, %v4697
        %v4699 = vpop.f32.mrf.mxu0
        %v4700 = vadd.f32 0.0, %v4699
        %4701 = vmatmul.bf16.gmra.mxu0 %v4676
        %v4702 = vpop.f32.mrf.mxu0
        %v4703 = vadd.f32 0.0, %v4702
        %v4704 = vpop.f32.mrf.mxu0
        %v4705 = vadd.f32 0.0, %v4704
        %4706 = vdwg.mxu0
        %v4707 = vadd.f32 %v4581, %v4688
        %v4708 = vadd.f32 %v4582, %v4690
        %v4709 = vadd.f32 %v4583, %v4693
        %v4710 = vadd.f32 %v4584, %v4695
        %v4711 = vadd.f32 %v4585, %v4698
        %v4712 = vadd.f32 %v4586, %v4700
        %v4713 = vadd.f32 %v4587, %v4703
        %v4714 = vadd.f32 %v4588, %v4705
        %s4715 = scalar_lea.vmem %s4589, 1 [#allocation3]
        %v4716 = vld [vmem:[%s4715] ss:$2 sm:$0xff]
        %s4717 = scalar_lea.vmem %s4589, 49 [#allocation3]
        %v4718 = vld [vmem:[%s4717] ss:$2 sm:$0xff]
        %s4719 = scalar_lea.vmem %s4589, 97 [#allocation3]
        %v4720 = vld [vmem:[%s4719] ss:$2 sm:$0xff]
        %s4721 = scalar_lea.vmem %s4589, 145 [#allocation3]
        %v4722 = vld [vmem:[%s4721] ss:$2 sm:$0xff]
        %s4723 = scalar_lea.vmem %s4589, 193 [#allocation3]
        %v4724 = vld [vmem:[%s4723] ss:$2 sm:$0xff]
        %s4725 = scalar_lea.vmem %s4589, 241 [#allocation3]
        %v4726 = vld [vmem:[%s4725] ss:$2 sm:$0xff]
        %s4727 = scalar_lea.vmem %s4589, 289 [#allocation3]
        %v4728 = vld [vmem:[%s4727] ss:$2 sm:$0xff]
        %s4729 = scalar_lea.vmem %s4589, 337 [#allocation3]
        %v4730 = vld [vmem:[%s4729] ss:$2 sm:$0xff]
        %v4731 = vpack.c.bf16 %v4716, %v4716
        %v4732 = vpack.c.bf16 %v4718, %v4718
        %v4733 = vpack.c.bf16 %v4720, %v4720
        %v4734 = vpack.c.bf16 %v4722, %v4722
        %v4735 = vpack.c.bf16 %v4724, %v4724
        %v4736 = vpack.c.bf16 %v4726, %v4726
        %v4737 = vpack.c.bf16 %v4728, %v4728
        %v4738 = vpack.c.bf16 %v4730, %v4730
        %s4739 = scalar_lea.vmem [#allocation10], 224
        %v4740 = vld [vmem:[%s4739] sm:$0xf]
        %v4741 = vld [vmem:[%s4739 + $0x4] sm:$0xf]
        %v4742 = vld [vmem:[%s4739 + $0x8] sm:$0xf]
        %v4743 = vld [vmem:[%s4739 + $0xc] sm:$0xf]
        %v4744 = vld [vmem:[%s4739 + $0x10] sm:$0xf]
        %v4745 = vld [vmem:[%s4739 + $0x14] sm:$0xf]
        %v4746 = vld [vmem:[%s4739 + $0x18] sm:$0xf]
        %v4747 = vld [vmem:[%s4739 + $0x1c] sm:$0xf]
        %v4756 = vunpack.c.l.b16 %v4731
        %v4757 = vunpack.c.l.b16 %v4732
        %v4758 = vunpack.c.l.b16 %v4733
        %v4759 = vunpack.c.l.b16 %v4734
        %v4760 = vunpack.c.l.b16 %v4735
        %v4761 = vunpack.c.l.b16 %v4736
        %v4762 = vunpack.c.l.b16 %v4737
        %v4763 = vunpack.c.l.b16 %v4738
        %v4764 = vpack.c.b16 %v4757, %v4756
        %v4765 = vpack.c.b16 %v4759, %v4758
        %v4766 = vpack.c.b16 %v4761, %v4760
        %v4767 = vpack.c.b16 %v4763, %v4762
        %v4776 = vunpack.c.l.b16 %v4740
        %v4777 = vunpack.c.l.b16 %v4741
        %v4778 = vunpack.c.l.b16 %v4742
        %v4779 = vunpack.c.l.b16 %v4743
        %v4780 = vunpack.c.l.b16 %v4744
        %v4781 = vunpack.c.l.b16 %v4745
        %v4782 = vunpack.c.l.b16 %v4746
        %v4783 = vunpack.c.l.b16 %v4747
        %v4784 = vpack.c.b16 %v4777, %v4776
        %v4785 = vpack.c.b16 %v4779, %v4778
        %v4786 = vpack.c.b16 %v4781, %v4780
        %v4787 = vpack.c.b16 %v4783, %v4782
        %v4793 = vsel %vm3763, %v4764, 0
        %v4796 = vsel %vm3763, %v4765, 0
        %v4799 = vsel %vm3763, %v4766, 0
        %v4802 = vsel %vm3763, %v4767, 0
        %4804 = vmatpush.bf16.msra.mxu0 0
        %4805 = vmatpush.bf16.msra.mxu0 0
        %4806 = vmatpush.bf16.msra.mxu0 0
        %4807 = vmatpush.bf16.msra.mxu0 0
        %4808 = vmatpush.bf16.msra.mxu0 %v4787
        %4809 = vmatpush.bf16.msra.mxu0 %v4786
        %4810 = vmatpush.bf16.msra.mxu0 %v4785
        %4811 = vmatpush.bf16.msra.mxu0 %v4784
        %4812 = vmatmul.bf16.gmra.mxu0 %v4793
        %v4813 = vpop.f32.mrf.mxu0
        %v4814 = vadd.f32 0.0, %v4813
        %v4815 = vpop.f32.mrf.mxu0
        %v4816 = vadd.f32 0.0, %v4815
        %4817 = vmatmul.bf16.gmra.mxu0 %v4796
        %v4818 = vpop.f32.mrf.mxu0
        %v4819 = vadd.f32 0.0, %v4818
        %v4820 = vpop.f32.mrf.mxu0
        %v4821 = vadd.f32 0.0, %v4820
        %4822 = vmatmul.bf16.gmra.mxu0 %v4799
        %v4823 = vpop.f32.mrf.mxu0
        %v4824 = vadd.f32 0.0, %v4823
        %v4825 = vpop.f32.mrf.mxu0
        %v4826 = vadd.f32 0.0, %v4825
        %4827 = vmatmul.bf16.gmra.mxu0 %v4802
        %v4828 = vpop.f32.mrf.mxu0
        %v4829 = vadd.f32 0.0, %v4828
        %v4830 = vpop.f32.mrf.mxu0
        %v4831 = vadd.f32 0.0, %v4830
        %4832 = vdwg.mxu0
        %v4833 = vadd.f32 %v4707, %v4814
        %v4834 = vadd.f32 %v4708, %v4816
        %v4835 = vadd.f32 %v4709, %v4819
        %v4836 = vadd.f32 %v4710, %v4821
        %v4837 = vadd.f32 %v4711, %v4824
        %v4838 = vadd.f32 %v4712, %v4826
        %v4839 = vadd.f32 %v4713, %v4829
        %v4840 = vadd.f32 %v4714, %v4831
        %s4841 = scalar_lea.vmem %s4589, 2 [#allocation3]
        %v4842 = vld [vmem:[%s4841] ss:$2 sm:$0xff]
        %s4843 = scalar_lea.vmem %s4589, 50 [#allocation3]
        %v4844 = vld [vmem:[%s4843] ss:$2 sm:$0xff]
        %s4845 = scalar_lea.vmem %s4589, 98 [#allocation3]
        %v4846 = vld [vmem:[%s4845] ss:$2 sm:$0xff]
        %s4847 = scalar_lea.vmem %s4589, 146 [#allocation3]
        %v4848 = vld [vmem:[%s4847] ss:$2 sm:$0xff]
        %s4849 = scalar_lea.vmem %s4589, 194 [#allocation3]
        %v4850 = vld [vmem:[%s4849] ss:$2 sm:$0xff]
        %s4851 = scalar_lea.vmem %s4589, 242 [#allocation3]
        %v4852 = vld [vmem:[%s4851] ss:$2 sm:$0xff]
        %s4853 = scalar_lea.vmem %s4589, 290 [#allocation3]
        %v4854 = vld [vmem:[%s4853] ss:$2 sm:$0xff]
        %s4855 = scalar_lea.vmem %s4589, 338 [#allocation3]
        %v4856 = vld [vmem:[%s4855] ss:$2 sm:$0xff]
        %v4857 = vpack.c.bf16 %v4842, %v4842
        %v4858 = vpack.c.bf16 %v4844, %v4844
        %v4859 = vpack.c.bf16 %v4846, %v4846
        %v4860 = vpack.c.bf16 %v4848, %v4848
        %v4861 = vpack.c.bf16 %v4850, %v4850
        %v4862 = vpack.c.bf16 %v4852, %v4852
        %v4863 = vpack.c.bf16 %v4854, %v4854
        %v4864 = vpack.c.bf16 %v4856, %v4856
        %s4865 = scalar_lea.vmem [#allocation10], 256
        %v4866 = vld [vmem:[%s4865] sm:$0xf]
        %v4867 = vld [vmem:[%s4865 + $0x4] sm:$0xf]
        %v4868 = vld [vmem:[%s4865 + $0x8] sm:$0xf]
        %v4869 = vld [vmem:[%s4865 + $0xc] sm:$0xf]
        %v4870 = vld [vmem:[%s4865 + $0x10] sm:$0xf]
        %v4871 = vld [vmem:[%s4865 + $0x14] sm:$0xf]
        %v4872 = vld [vmem:[%s4865 + $0x18] sm:$0xf]
        %v4873 = vld [vmem:[%s4865 + $0x1c] sm:$0xf]
        %v4882 = vunpack.c.l.b16 %v4857
        %v4883 = vunpack.c.l.b16 %v4858
        %v4884 = vunpack.c.l.b16 %v4859
        %v4885 = vunpack.c.l.b16 %v4860
        %v4886 = vunpack.c.l.b16 %v4861
        %v4887 = vunpack.c.l.b16 %v4862
        %v4888 = vunpack.c.l.b16 %v4863
        %v4889 = vunpack.c.l.b16 %v4864
        %v4890 = vpack.c.b16 %v4883, %v4882
        %v4891 = vpack.c.b16 %v4885, %v4884
        %v4892 = vpack.c.b16 %v4887, %v4886
        %v4893 = vpack.c.b16 %v4889, %v4888
        %v4902 = vunpack.c.l.b16 %v4866
        %v4903 = vunpack.c.l.b16 %v4867
        %v4904 = vunpack.c.l.b16 %v4868
        %v4905 = vunpack.c.l.b16 %v4869
        %v4906 = vunpack.c.l.b16 %v4870
        %v4907 = vunpack.c.l.b16 %v4871
        %v4908 = vunpack.c.l.b16 %v4872
        %v4909 = vunpack.c.l.b16 %v4873
        %v4910 = vpack.c.b16 %v4903, %v4902
        %v4911 = vpack.c.b16 %v4905, %v4904
        %v4912 = vpack.c.b16 %v4907, %v4906
        %v4913 = vpack.c.b16 %v4909, %v4908
        %v4919 = vsel %vm3763, %v4890, 0
        %v4922 = vsel %vm3763, %v4891, 0
        %v4925 = vsel %vm3763, %v4892, 0
        %v4928 = vsel %vm3763, %v4893, 0
        %4930 = vmatpush.bf16.msra.mxu0 0
        %4931 = vmatpush.bf16.msra.mxu0 0
        %4932 = vmatpush.bf16.msra.mxu0 0
        %4933 = vmatpush.bf16.msra.mxu0 0
        %4934 = vmatpush.bf16.msra.mxu0 %v4913
        %4935 = vmatpush.bf16.msra.mxu0 %v4912
        %4936 = vmatpush.bf16.msra.mxu0 %v4911
        %4937 = vmatpush.bf16.msra.mxu0 %v4910
        %4938 = vmatmul.bf16.gmra.mxu0 %v4919
        %v4939 = vpop.f32.mrf.mxu0
        %v4940 = vadd.f32 0.0, %v4939
        %v4941 = vpop.f32.mrf.mxu0
        %v4942 = vadd.f32 0.0, %v4941
        %4943 = vmatmul.bf16.gmra.mxu0 %v4922
        %v4944 = vpop.f32.mrf.mxu0
        %v4945 = vadd.f32 0.0, %v4944
        %v4946 = vpop.f32.mrf.mxu0
        %v4947 = vadd.f32 0.0, %v4946
        %4948 = vmatmul.bf16.gmra.mxu0 %v4925
        %v4949 = vpop.f32.mrf.mxu0
        %v4950 = vadd.f32 0.0, %v4949
        %v4951 = vpop.f32.mrf.mxu0
        %v4952 = vadd.f32 0.0, %v4951
        %4953 = vmatmul.bf16.gmra.mxu0 %v4928
        %v4954 = vpop.f32.mrf.mxu0
        %v4955 = vadd.f32 0.0, %v4954
        %v4956 = vpop.f32.mrf.mxu0
        %v4957 = vadd.f32 0.0, %v4956
        %4958 = vdwg.mxu0
        %v4959 = vadd.f32 %v4833, %v4940
        %v4960 = vadd.f32 %v4834, %v4942
        %v4961 = vadd.f32 %v4835, %v4945
        %v4962 = vadd.f32 %v4836, %v4947
        %v4963 = vadd.f32 %v4837, %v4950
        %v4964 = vadd.f32 %v4838, %v4952
        %v4965 = vadd.f32 %v4839, %v4955
        %v4966 = vadd.f32 %v4840, %v4957
        %v4967 = vld [vmem:[%s7] sm:$0x1]
        %v4969 = vperm.slane %v4967, 0
        %v4971 = vmul.f32 %v4959, %v4969
        %v4972 = vmul.f32 %v4960, %v4969
        %v4973 = vmul.f32 %v4961, %v4969
        %v4974 = vmul.f32 %v4962, %v4969
        %v4975 = vmul.f32 %v4963, %v4969
        %v4976 = vmul.f32 %v4964, %v4969
        %v4977 = vmul.f32 %v4965, %v4969
        %v4978 = vmul.f32 %v4966, %v4969
        %v4979 = vld [vmem:[%s8] sm:$0x1]
        %v4981 = vperm.slane %v4979, 0
        %v4983 = vadd.f32 %v4971, %v4981
        %v4984 = vadd.f32 %v4972, %v4981
        %v4985 = vadd.f32 %v4973, %v4981
        %v4986 = vadd.f32 %v4974, %v4981
        %v4987 = vadd.f32 %v4975, %v4981
        %v4988 = vadd.f32 %v4976, %v4981
        %v4989 = vadd.f32 %v4977, %v4981
        %v4990 = vadd.f32 %v4978, %v4981
        %v4991 = vsel %vm3763, %v4983, 0.0
        %v4992 = vsel %vm3763, %v4984, 0.0
        %v4993 = vadd.f32 %v4991, %v4992
        %v4994 = vsel %vm3763, %v4985, 0.0
        %v4995 = vadd.f32 %v4993, %v4994
        %v4996 = vsel %vm3763, %v4986, 0.0
        %v4997 = vadd.f32 %v4995, %v4996
        %v4998 = vsel %vm3763, %v4987, 0.0
        %v4999 = vadd.f32 %v4997, %v4998
        %v5000 = vsel %vm3763, %v4988, 0.0
        %v5001 = vadd.f32 %v4999, %v5000
        %v5002 = vsel %vm3763, %v4989, 0.0
        %v5003 = vadd.f32 %v5001, %v5002
        %v5004 = vsel %vm3763, %v4990, 0.0
        %v5005 = vadd.f32 %v5003, %v5004
        %v5006 = vrot.slane %v5005, 4
        %v5007 = vadd.f32 %v5005, %v5006
        %v5008 = vrot.slane %v5007, 2
        %v5009 = vadd.f32 %v5007, %v5008
        %v5010 = vrot.slane %v5009, 1
        %v5011 = vadd.f32 %v5009, %v5010
        %v5012 = vrcp.pop 64.0
        %v5013 = vmul.f32 64.0, %v5012
        %v5014 = vsub.f32 1.0, %v5013
        %v5015 = vmul.f32 %v5012, %v5014
        %v5016 = vadd.f32 %v5012, %v5015
        %vm5017 = vweird.f32 %v5012
        %v5018 = vsel %vm5017, %v5012, %v5016
        %v5019 = vmul.f32 %v5011, %v5018
        %v5020 = vld [vmem:[%s9] sm:$0xff]
        %v5021 = vld [vmem:[%s9 + $0x8] sm:$0xff]
        %v5022 = vld [vmem:[%s9 + $0x10] sm:$0xff]
        %v5023 = vld [vmem:[%s9 + $0x18] sm:$0xff]
        %v5024 = vld [vmem:[%s9 + $0x20] sm:$0xff]
        %v5025 = vld [vmem:[%s9 + $0x28] sm:$0xff]
        %v5026 = vld [vmem:[%s9 + $0x30] sm:$0xff]
        %v5027 = vld [vmem:[%s9 + $0x38] sm:$0xff]
        %v5029 = vsel %vm3763, %v5019, 0
        %5031 = vmatpush.msra.mxu0 0.0
        %5032 = vmatpush.msra.mxu0 0.0
        %5033 = vmatpush.msra.mxu0 0.0
        %5034 = vmatpush.msra.mxu0 0.0
        %5035 = vmatpush.msra.mxu0 0.0
        %5036 = vmatpush.msra.mxu0 0.0
        %5037 = vmatpush.msra.mxu0 0.0
        %5038 = vmatpush.msra.mxu0 0.0
        %5039 = vmatpush.msra.mxu0 %v5027
        %5040 = vmatpush.msra.mxu0 %v5026
        %5041 = vmatpush.msra.mxu0 %v5025
        %5042 = vmatpush.msra.mxu0 %v5024
        %5043 = vmatpush.msra.mxu0 %v5023
        %5044 = vmatpush.msra.mxu0 %v5022
        %5045 = vmatpush.msra.mxu0 %v5021
        %5046 = vmatpush.msra.mxu0 %v5020
        %5047 = vmatmul.f32.gmra.mxu0 %v5029
        %v5048 = vpop.f32.mrf.mxu0
        %v5049 = vadd.f32 0.0, %v5048
        %5050 = vdwg.mxu0
        %v5051 = vmax.f32 %v5049, 0.0
        %v5052 = vld [vmem:[%s10] sm:$0xf]
        %vm5053 = vcmask 31744
        %v5055 = vsel %vm5053, %v5051, 0
        %vm5057 = vcmask 1043456
        %v5059 = vsel %vm5057, %v5052, 0
        %5061 = vmatpush.msra.mxu0 0.0
        %5062 = vmatpush.msra.mxu0 0.0
        %5063 = vmatpush.msra.mxu0 0.0
        %5064 = vmatpush.msra.mxu0 0.0
        %5065 = vmatpush.msra.mxu0 0.0
        %5066 = vmatpush.msra.mxu0 0.0
        %5067 = vmatpush.msra.mxu0 0.0
        %5068 = vmatpush.msra.mxu0 0.0
        %5069 = vmatpush.msra.mxu0 0.0
        %5070 = vmatpush.msra.mxu0 0.0
        %5071 = vmatpush.msra.mxu0 0.0
        %5072 = vmatpush.msra.mxu0 0.0
        %5073 = vmatpush.msra.mxu0 0.0
        %5074 = vmatpush.msra.mxu0 0.0
        %5075 = vmatpush.msra.mxu0 0.0
        %5076 = vmatpush.msra.mxu0 %v5059
        %5077 = vmatmul.f32.gmra.mxu0 %v5055
        %v5078 = vpop.f32.mrf.mxu0
        %v5079 = vadd.f32 0.0, %v5078
        %5080 = vdwg.mxu0
        %v5081 = vsub.f32 0.0, %v5079
        %v5082 = vmul.f32 %v5081, 1.442695
        %v5083 = vpow.pop %v5082
        %v5084 = vadd.f32 %v5083, 1.0
        %v5085 = vrcp.pop %v5084
        %v5086 = vperm.slane %v5085, 0
        %v5087 = vmul.f32 %v4983, %v5086
        %v5088 = vmul.f32 %v4984, %v5086
        %v5089 = vmul.f32 %v4985, %v5086
        %v5090 = vmul.f32 %v4986, %v5086
        %v5091 = vmul.f32 %v4987, %v5086
        %v5092 = vmul.f32 %v4988, %v5086
        %v5093 = vmul.f32 %v4989, %v5086
        %v5094 = vmul.f32 %v4990, %v5086
        %v5095 = vld [vmem:[%s502] sm:$0xff]
        %v5096 = vld [vmem:[%s502 + $0x8] sm:$0xff]
        %v5097 = vld [vmem:[%s502 + $0x10] sm:$0xff]
        %v5098 = vld [vmem:[%s502 + $0x18] sm:$0xff]
        %v5099 = vld [vmem:[%s502 + $0x20] sm:$0xff]
        %v5100 = vld [vmem:[%s502 + $0x28] sm:$0xff]
        %v5101 = vld [vmem:[%s502 + $0x30] sm:$0xff]
        %v5102 = vld [vmem:[%s502 + $0x38] sm:$0xff]
        %v5103 = vpack.c.bf16 %v5096, %v5095
        %v5104 = vpack.c.bf16 %v5098, %v5097
        %v5105 = vpack.c.bf16 %v5100, %v5099
        %v5106 = vpack.c.bf16 %v5102, %v5101
        %v5107 = vld [vmem:[%s11] sm:$0xf]
        %v5108 = vld [vmem:[%s11 + $0x4] sm:$0xf]
        %v5109 = vld [vmem:[%s11 + $0x8] sm:$0xf]
        %v5110 = vld [vmem:[%s11 + $0xc] sm:$0xf]
        %v5115 = vunpack.c.l.b16 %v5107
        %v5116 = vunpack.c.l.b16 %v5108
        %v5117 = vunpack.c.l.b16 %v5109
        %v5118 = vunpack.c.l.b16 %v5110
        %v5119 = vpack.c.b16 %v5116, %v5115
        %v5120 = vpack.c.b16 %v5118, %v5117
        %v5124 = vsel %vm564, %v5103, 0
        %v5127 = vsel %vm564, %v5104, 0
        %v5130 = vsel %vm564, %v5105, 0
        %v5133 = vsel %vm564, %v5106, 0
        %5135 = vmatpush.bf16.msra.mxu0 0
        %5136 = vmatpush.bf16.msra.mxu0 0
        %5137 = vmatpush.bf16.msra.mxu0 0
        %5138 = vmatpush.bf16.msra.mxu0 0
        %5139 = vmatpush.bf16.msra.mxu0 0
        %5140 = vmatpush.bf16.msra.mxu0 0
        %5141 = vmatpush.bf16.msra.mxu0 %v5120
        %5142 = vmatpush.bf16.msra.mxu0 %v5119
        %5143 = vmatmul.bf16.gmra.mxu0 %v5124
        %v5144 = vpop.f32.mrf.mxu0
        %v5145 = vadd.f32 0.0, %v5144
        %v5146 = vpop.f32.mrf.mxu0
        %v5147 = vadd.f32 0.0, %v5146
        %5148 = vmatmul.bf16.gmra.mxu0 %v5127
        %v5149 = vpop.f32.mrf.mxu0
        %v5150 = vadd.f32 0.0, %v5149
        %v5151 = vpop.f32.mrf.mxu0
        %v5152 = vadd.f32 0.0, %v5151
        %5153 = vmatmul.bf16.gmra.mxu0 %v5130
        %v5154 = vpop.f32.mrf.mxu0
        %v5155 = vadd.f32 0.0, %v5154
        %v5156 = vpop.f32.mrf.mxu0
        %v5157 = vadd.f32 0.0, %v5156
        %5158 = vmatmul.bf16.gmra.mxu0 %v5133
        %v5159 = vpop.f32.mrf.mxu0
        %v5160 = vadd.f32 0.0, %v5159
        %v5161 = vpop.f32.mrf.mxu0
        %v5162 = vadd.f32 0.0, %v5161
        %5163 = vdwg.mxu0
        %v5164 = vld [vmem:[%s12] sm:$0x1]
        %v5166 = vperm.slane %v5164, 0
        %v5168 = vmul.f32 %v5145, %v5166
        %v5169 = vmul.f32 %v5147, %v5166
        %v5170 = vmul.f32 %v5150, %v5166
        %v5171 = vmul.f32 %v5152, %v5166
        %v5172 = vmul.f32 %v5155, %v5166
        %v5173 = vmul.f32 %v5157, %v5166
        %v5174 = vmul.f32 %v5160, %v5166
        %v5175 = vmul.f32 %v5162, %v5166
        %v5176 = vld [vmem:[%s13] sm:$0x1]
        %v5178 = vperm.slane %v5176, 0
        %v5180 = vadd.f32 %v5168, %v5178
        %v5181 = vadd.f32 %v5169, %v5178
        %v5182 = vadd.f32 %v5170, %v5178
        %v5183 = vadd.f32 %v5171, %v5178
        %v5184 = vadd.f32 %v5172, %v5178
        %v5185 = vadd.f32 %v5173, %v5178
        %v5186 = vadd.f32 %v5174, %v5178
        %v5187 = vadd.f32 %v5175, %v5178
        %v5188 = vadd.f32 %v5087, %v5180
        %v5189 = vadd.f32 %v5088, %v5181
        %v5190 = vadd.f32 %v5089, %v5182
        %v5191 = vadd.f32 %v5090, %v5183
        %v5192 = vadd.f32 %v5091, %v5184
        %v5193 = vadd.f32 %v5092, %v5185
        %v5194 = vadd.f32 %v5093, %v5186
        %v5195 = vadd.f32 %v5094, %v5187
        %5196 = vst.msk [vmem:[%s562] sm:$0xff] %vm3763, %v5188
        %5197 = vst.msk [vmem:[%s562 + $0x8] sm:$0xff] %vm3763, %v5189
        %5198 = vst.msk [vmem:[%s562 + $0x10] sm:$0xff] %vm3763, %v5190
        %5199 = vst.msk [vmem:[%s562 + $0x18] sm:$0xff] %vm3763, %v5191
        %5200 = vst.msk [vmem:[%s562 + $0x20] sm:$0xff] %vm3763, %v5192
        %5201 = vst.msk [vmem:[%s562 + $0x28] sm:$0xff] %vm3763, %v5193
        %5202 = vst.msk [vmem:[%s562 + $0x30] sm:$0xff] %vm3763, %v5194
        %5203 = vst.msk [vmem:[%s562 + $0x38] sm:$0xff] %vm3763, %v5195
        %s5204 = sand.u32 %s347, 1
        %s5205 = scalar_lea.sflag [#allocation6], %s5204
        %s5206 = sand.u32 %s347, 1
        %s5207 = smul.addr %s5206, 64
        %s5208 = scalar_lea.vmem [#allocation12], %s5207
        // Predicated region
        $region93: #{tpu_custom_call.1} parent=75 // pred_check
          %p5209 = pneg %p357
        $region94: #{tpu_custom_call.1} parent=75 // pred_check_branch
          %5211 = sbr.rel (%p5209) target = $region96
        $region95: #{tpu_custom_call.1} parent=75 // pred_region
          %5213 = vsyncadd %s5205, 0
          %s5214 = smul.addr %s35, 8
          %s5215 = smul.addr %s5214, 8
          %s5216 = scalar_lea.hbm %s14, %s5215
          %s5217 = sshll.u32 %s5208, 4
          %s5218 = int_to_ptr.vmem [resolvable:$true] %s5217
          %s5219 = sshll.u32 %s5216, 4
          %s5220 = int_to_ptr.hbm [resolvable:$true] %s5219
          %5225 = dma.vmem_to_hbm [thread:$0]  %s5218, 1024, %s5220, %s5205, 128, 128, 8
        $region96: #{tpu_custom_call.1} parent=75 // pred_fallthru
          _
      $region76: #{tpu_custom_call.1} parent=5 // pred_fallthru
        _
      %p5226 = scmp.le.s32.totalorder 2, %s30
      // Predicated region
      $region97: #{tpu_custom_call.1} parent=5 // pred_check
        %p5227 = pneg %p5226
      $region98: #{tpu_custom_call.1} parent=5 // pred_check_branch
        %5229 = sbr.rel (%p5227) target = $region100
      $region99: #{tpu_custom_call.1} parent=5 // pred_region
        %s5230 = ssub.s32 %s30, 2
        // Predicated region
        $region101: #{tpu_custom_call.1} parent=99 // pred_check
          %p5231 = pneg %p363
        $region102: #{tpu_custom_call.1} parent=99 // pred_check_branch
          %5233 = sbr.rel (%p5231) target = $region104
        $region103: #{tpu_custom_call.1} parent=99 // pred_region
          %s5234 = sand.u32 %s348, 1
          %s5235 = scalar_lea.sflag [#allocation6], %s5234
          %s5236 = sand.u32 %s348, 1
          %s5237 = smul.addr %s5236, 64
          %s5238 = scalar_lea.vmem [#allocation12], %s5237
          %5240 = dma.done %s5235, 1024
        $region104: #{tpu_custom_call.1} parent=99 // pred_fallthru
          _
      $region100: #{tpu_custom_call.1} parent=5 // pred_fallthru
        _
    $region6: #{tpu_custom_call.1} parent=1 // loop_footer
      %s34 = sadd.s32 1, %s30
    $region7: #{tpu_custom_call.1} parent=1 // loop_footer_branch
      %29 = sbr.rel target = $region3
    $region8: #{tpu_custom_call.1} parent=1 // loop_exit
      _
    %5241 = vsyncpa [#allocation5], 1
    %s5242 = scalar_lea.sflag [#allocation5], 1
    %5243 = vsyncpa %s5242, 1
    %5244 = vsyncpa [#allocation8], 1
    %s5245 = scalar_lea.sflag [#allocation8], 1
    %5246 = vsyncpa %s5245, 1
    %5247 = vsyncpa [#allocation11], 1
    %5248 = vsyncpa [#allocation6], 1
    %s5249 = scalar_lea.sflag [#allocation6], 1
    %5250 = vsyncpa %s5249, 1

</llo_original>
